<compile_context>
chip_gen: v6e
topology: v6e:2x2x1
jax: 0.10.0
libtpu: 0.0.40
codegen_flags: <defaults>
</compile_context>

<pallas_src>
import functools
import math

import jax
import jax.numpy as jnp
from jax.experimental import pallas as pl
from jax.experimental.pallas import tpu as pltpu


def _round_up(x, m):
    return (x + m - 1) // m * m


def _divisor_tile(n, preferred):
    for t in preferred:
        if t <= n and n % t == 0:
            return t
    return n


def _pick_tiles(M, K, N):
    """Pick (tm, Mp, tk, Kp, tn, Np) for the conv matmul."""
    # --- N (lanes) ---
    Np = _round_up(N, 128)
    if Np % 512 == 0:
        tn = 512
    elif Np % 256 == 0:
        tn = 256
    else:
        tn = 128
    n_tiles = Np // tn

    # --- K (reduction) --- minimize K padding; single step when it fits.
    if K <= 2048:
        tk = _round_up(K, 128)
        Kp = tk
    else:
        best = None
        for tk_c in (2048, 1024, 512, 256, 128):
            kp_c = _round_up(K, tk_c)
            key = (kp_c, -tk_c)
            if best is None or key < best[1]:
                best = ((tk_c, kp_c), key)
        tk, Kp = best[0]

    # --- M (rows) --- minimize row padding, prefer >=2 parallel grid points
    # (v7x has 2 TensorCores), then prefer larger tm.
    if M <= 128:
        tm = max(16, _round_up(M, 16))
        Mp = tm
    else:
        best = None
        for tm_c in (512, 256, 128):
            mp_c = _round_up(M, tm_c)
            few_parallel = 0 if (mp_c // tm_c) * n_tiles >= 2 else 1
            key = (mp_c, few_parallel, -tm_c)
            if best is None or key < best[1]:
                best = ((tm_c, mp_c), key)
        tm, Mp = best[0]
    return tm, Mp, tk, Kp, tn, Np


# ---------------------------------------------------------------------------
# Fused conv matmul kernel:
#   Y = X @ W + b, bf16 inputs, f32 MXU accumulation, bf16 output.
#   Optionally emits per-tile column sum / sum-of-squares (for BatchNorm)
#   computed from the f32 accumulator with padded rows masked out, or applies
#   ReLU directly (no-BN path).
# ---------------------------------------------------------------------------
def _make_conv_matmul_kernel(nk, compute_stats, apply_relu, m_true, tm,
                             need_row_mask):
    def kernel(*refs):
        if compute_stats:
            x_ref, w_ref, b_ref, o_ref, sum_ref, sq_ref = refs[:6]
        else:
            x_ref, w_ref, b_ref, o_ref = refs[:4]
            sum_ref = sq_ref = None
        acc_ref = refs[-1] if nk > 1 else None

        # bf16 x bf16 -> f32 on the MXU.
        part = jnp.dot(x_ref[...], w_ref[...],
                       preferred_element_type=jnp.float32)

        def epilogue(y):
            yb = y + b_ref[...]
            if compute_stats:
                if need_row_mask:
                    row = pl.program_id(0) * tm + jax.lax.broadcasted_iota(
                        jnp.int32, yb.shape, 0)
                    ym = jnp.where(row < m_true, yb, 0.0)
                else:
                    ym = yb
                sum_ref[...] = jnp.sum(ym, axis=0,
                                       keepdims=True).reshape(sum_ref.shape)
                sq_ref[...] = jnp.sum(ym * ym, axis=0,
                                      keepdims=True).reshape(sq_ref.shape)
            out = jnp.maximum(yb, 0.0) if apply_relu else yb
            o_ref[...] = out.astype(o_ref.dtype)

        if nk == 1:
            epilogue(part)
        else:
            k = pl.program_id(2)

            @pl.when(k == 0)
            def _init():
                acc_ref[...] = part

            @pl.when(jnp.logical_and(k > 0, k < nk - 1))
            def _accum():
                acc_ref[...] += part

            @pl.when(k == nk - 1)
            def _final():
                epilogue(acc_ref[...] + part)

    return kernel


def conv_matmul(x_bf16, w_bf16, b_f32, *, compute_stats, apply_relu):
    """x:(M,K) bf16, w:(K,N) bf16, b:(N,) f32.

    Returns (y_padded_bf16 (Mp,Np), partial_sums, partial_sqs) where the
    partials are (M_tiles, 1, Np) f32 (None when compute_stats=False).
    """
    M, K = x_bf16.shape
    Kw, N = w_bf16.shape
    assert K == Kw
    tm, Mp, tk, Kp, tn, Np = _pick_tiles(M, K, N)

    xp = x_bf16 if (Mp == M and Kp == K) else jnp.pad(
        x_bf16, ((0, Mp - M), (0, Kp - K)))
    wp = w_bf16 if (Kp == K and Np == N) else jnp.pad(
        w_bf16, ((0, Kp - K), (0, Np - N)))
    bp = (b_f32 if Np == N else jnp.pad(b_f32, (0, Np - N)))
    b2 = bp.reshape(1, Np).astype(jnp.float32)

    nk = Kp // tk
    m_tiles = Mp // tm
    n_tiles = Np // tn

    kernel = _make_conv_matmul_kernel(nk, compute_stats, apply_relu, M, tm,
                                      Mp != M)

    out_shapes = [jax.ShapeDtypeStruct((Mp, Np), jnp.bfloat16)]
    out_specs = [pl.BlockSpec((tm, tn), lambda i, j, k: (i, j))]
    if compute_stats:
        out_shapes.append(jax.ShapeDtypeStruct((m_tiles, 1, Np), jnp.float32))
        out_shapes.append(jax.ShapeDtypeStruct((m_tiles, 1, Np), jnp.float32))
        out_specs.append(pl.BlockSpec((1, 1, tn), lambda i, j, k: (i, 0, j)))
        out_specs.append(pl.BlockSpec((1, 1, tn), lambda i, j, k: (i, 0, j)))

    scratch = [pltpu.VMEM((tm, tn), jnp.float32)] if nk > 1 else []

    res = pl.pallas_call(
        kernel,
        out_shape=tuple(out_shapes),
        grid_spec=pltpu.PrefetchScalarGridSpec(
            num_scalar_prefetch=0,
            grid=(m_tiles, n_tiles, nk),
            in_specs=[
                pl.BlockSpec((tm, tk), lambda i, j, k: (i, k)),
                pl.BlockSpec((tk, tn), lambda i, j, k: (k, j)),
                pl.BlockSpec((1, tn), lambda i, j, k: (0, j)),
            ],
            out_specs=out_specs,
            scratch_shapes=scratch,
        ),
        compiler_params=pltpu.CompilerParams(
            dimension_semantics=("parallel", "parallel", "arbitrary"),
        ),
    )(xp, wp, b2)

    if compute_stats:
        return res[0], res[1], res[2]
    return res[0], None, None


# ---------------------------------------------------------------------------
# y = max(x * scale + shift, 0)  (BN normalize + ReLU), bf16 in / bf16 out.
# ---------------------------------------------------------------------------
def _scale_shift_relu_kernel(x_ref, sc_ref, sh_ref, o_ref):
    y = x_ref[...].astype(jnp.float32) * sc_ref[...] + sh_ref[...]
    o_ref[...] = jnp.maximum(y, 0.0).astype(o_ref.dtype)


def scale_shift_relu(yp, scale, shift):
    Mp, Np = yp.shape
    tm = _divisor_tile(Mp, (512, 256, 128, 64, 32, 16, 8))
    tn = _divisor_tile(Np, (512, 256, 128))
    return pl.pallas_call(
        _scale_shift_relu_kernel,
        out_shape=jax.ShapeDtypeStruct((Mp, Np), jnp.bfloat16),
        grid_spec=pltpu.PrefetchScalarGridSpec(
            num_scalar_prefetch=0,
            grid=(Mp // tm, Np // tn),
            in_specs=[
                pl.BlockSpec((tm, tn), lambda i, j: (i, j)),
                pl.BlockSpec((1, tn), lambda i, j: (0, j)),
                pl.BlockSpec((1, tn), lambda i, j: (0, j)),
            ],
            out_specs=pl.BlockSpec((tm, tn), lambda i, j: (i, j)),
        ),
        compiler_params=pltpu.CompilerParams(
            dimension_semantics=("parallel", "parallel"),
        ),
    )(yp, scale, shift)


# ---------------------------------------------------------------------------
# Conv2d(k,k,padding) -> [BatchNorm2d (train-mode batch stats)] -> ReLU
# via im2col (bf16, JAX glue) + the Pallas kernels above.  NHWC layout.
# ---------------------------------------------------------------------------
def conv_bn_relu(x_nhwc, w_oihw, b, gamma, beta, *, padding=1, is_bn=True,
                 eps=1e-5):
    N, H, W, Cin = x_nhwc.shape
    Cout, _, kH, kW = w_oihw.shape
    Ho = H + 2 * padding - kH + 1
    Wo = W + 2 * padding - kW + 1

    x = x_nhwc.astype(jnp.bfloat16)
    xp = jnp.pad(x, ((0, 0), (padding, padding), (padding, padding), (0, 0)))
    # patches[..., (dh*kW+dw)*Cin + cin] = xp[n, h+dh, w+dw, cin]
    # TODO(synk): fuse this im2col into the matmul kernel via a tap grid axis
    # with manual DMA to avoid the kH*kW HBM blow-up.
    patches = jnp.concatenate(
        [xp[:, dh:dh + Ho, dw:dw + Wo, :] for dh in range(kH) for dw in range(kW)],
        axis=-1,
    )
    M = N * Ho * Wo
    xm = patches.reshape(M, kH * kW * Cin)
    wm = jnp.transpose(w_oihw, (2, 3, 1, 0)).reshape(
        kH * kW * Cin, Cout).astype(jnp.bfloat16)

    yp, psum, psq = conv_matmul(xm, wm, b.astype(jnp.float32),
                                compute_stats=is_bn, apply_relu=not is_bn)
    Mp, Np = yp.shape

    if is_bn:
        sums = jnp.sum(psum, axis=0)          # (1, Np), f32, exact rows only
        sqs = jnp.sum(psq, axis=0)
        mean = sums / M
        # One-pass biased variance (clamped); sums accumulated in f32 so the
        # cancellation risk is limited to extreme channel means.
        var = jnp.maximum(sqs / M - mean * mean, 0.0)
        g = gamma if Np == Cout else jnp.pad(gamma, (0, Np - Cout))
        be = beta if Np == Cout else jnp.pad(beta, (0, Np - Cout))
        scale = g.reshape(1, Np) * jax.lax.rsqrt(var + eps)
        shift = be.reshape(1, Np) - mean * scale
        yp = scale_shift_relu(yp, scale.astype(jnp.float32),
                              shift.astype(jnp.float32))

    y = yp[:M, :Cout]
    return y.reshape(N, Ho, Wo, Cout)


# ---------------------------------------------------------------------------
# Con2D forward (PyTorch-style NCHW in/out).
# ---------------------------------------------------------------------------
def con2d_forward(params, x_nchw, *, padding=1, is_bn=True):
    x = jnp.transpose(x_nchw, (0, 2, 3, 1))  # NCHW -> NHWC
    x = conv_bn_relu(x, params["w1"], params["b1"], params["g1"], params["be1"],
                     padding=padding, is_bn=is_bn)
    x = conv_bn_relu(x, params["w2"], params["b2"], params["g2"], params["be2"],
                     padding=padding, is_bn=is_bn)
    return jnp.transpose(x, (0, 3, 1, 2)).astype(jnp.float32)  # NHWC -> NCHW


# ---------------------------------------------------------------------------
# Parameter init (PyTorch Conv2d default scheme; fresh BN: gamma=1, beta=0).
# ---------------------------------------------------------------------------
def init_params(key, in_c, out_c, k):
    k1, k2 = jax.random.split(key, 2)

    def conv_init(kk, cin, cout):
        wk, bk = jax.random.split(kk)
        fan_in = cin * k * k
        bound = 1.0 / math.sqrt(fan_in)
        w = jax.random.uniform(wk, (cout, cin, k, k), jnp.float32, -bound, bound)
        b = jax.random.uniform(bk, (cout,), jnp.float32, -bound, bound)
        return w, b

    w1, b1 = conv_init(k1, in_c, out_c)
    w2, b2 = conv_init(k2, out_c, out_c)
    return {
        "w1": w1, "b1": b1,
        "g1": jnp.ones((out_c,), jnp.float32), "be1": jnp.zeros((out_c,), jnp.float32),
        "w2": w2, "b2": b2,
        "g2": jnp.ones((out_c,), jnp.float32), "be2": jnp.zeros((out_c,), jnp.float32),
    }


# ---------------------------------------------------------------------------
# Pure-JAX reference (for correctness check).
# ---------------------------------------------------------------------------
def _conv_ref(x, w, b, padding):
    y = jax.lax.conv_general_dilated(
        x, w, (1, 1), [(padding, padding), (padding, padding)],
        dimension_numbers=("NCHW", "OIHW", "NCHW"))
    return y + b.reshape(1, -1, 1, 1)


def _bn_ref(y, gamma, beta, eps=1e-5):
    mean = jnp.mean(y, axis=(0, 2, 3), keepdims=True)
    var = jnp.var(y, axis=(0, 2, 3), keepdims=True)
    return ((y - mean) * jax.lax.rsqrt(var + eps) * gamma.reshape(1, -1, 1, 1)
            + beta.reshape(1, -1, 1, 1))


def con2d_ref(params, x, *, padding=1, is_bn=True):
    y = _conv_ref(x, params["w1"], params["b1"], padding)
    if is_bn:
        y = _bn_ref(y, params["g1"], params["be1"])
    y = jnp.maximum(y, 0.0)
    y = _conv_ref(y, params["w2"], params["b2"], padding)
    if is_bn:
        y = _bn_ref(y, params["g2"], params["be2"])
    return jnp.maximum(y, 0.0)


if __name__ == "__main__":
    in_c, out_c, k_size, padding = 4, 64, 3, 1
    key = jax.random.PRNGKey(0)
    pkey, xkey = jax.random.split(key)

    params = init_params(pkey, in_c, out_c, k_size)
    x = jax.random.normal(xkey, (2, in_c, 16, 16), jnp.float32)

    # is_bn=True path (default Con2D)
    fwd_bn = jax.jit(functools.partial(con2d_forward, padding=padding, is_bn=True))
    y = fwd_bn(params, x)
    jax.block_until_ready(y)
    assert y.shape == (2, out_c, 16, 16), y.shape
    assert bool(jnp.all(jnp.isfinite(y)))
    y_ref = con2d_ref(params, x, padding=padding, is_bn=True)
    tol = 5e-2 * (1.0 + float(jnp.max(jnp.abs(y_ref))))
    err = float(jnp.max(jnp.abs(y - y_ref)))
    assert err < tol, (err, tol)

    # is_bn=False path
    fwd_nobn = jax.jit(functools.partial(con2d_forward, padding=padding, is_bn=False))
    y2 = fwd_nobn(params, x)
    jax.block_until_ready(y2)
    y2_ref = con2d_ref(params, x, padding=padding, is_bn=False)
    tol2 = 5e-2 * (1.0 + float(jnp.max(jnp.abs(y2_ref))))
    err2 = float(jnp.max(jnp.abs(y2 - y2_ref)))
    assert err2 < tol2, (err2, tol2)

    print("KERNEL_OK")
</pallas_src>

<mosaic_0001>
module attributes {stable_mosaic.version = 11 : i64} {
  func.func @kernel(%arg0: i32, %arg1: i32, %arg2: i32, %arg3: memref<256x128xbf16, #tpu.memory_space<vmem>>, %arg4: memref<128x128xbf16, #tpu.memory_space<vmem>>, %arg5: memref<1x128xf32, #tpu.memory_space<vmem>>, %arg6: memref<256x128xbf16, #tpu.memory_space<vmem>>, %arg7: memref<1x1x128xf32, #tpu.memory_space<vmem>>, %arg8: memref<1x1x128xf32, #tpu.memory_space<vmem>>) attributes {dimension_semantics = [#tpu.dimension_semantics<parallel>, #tpu.dimension_semantics<parallel>, #tpu.dimension_semantics<arbitrary>], iteration_bounds = array<i64: 2, 1, 1>, scalar_prefetch = 0 : i64, scratch_operands = 0 : i64, tpu.core_type = #tpu.core_type<tc>, window_params = [{transform_indices = @transform_0, window_bounds = array<i64: 256, 128>}, {transform_indices = @transform_1, window_bounds = array<i64: 128, 128>}, {transform_indices = @transform_2, window_bounds = array<i64: 1, 128>}, {transform_indices = @transform_3, window_bounds = array<i64: 256, 128>}, {transform_indices = @transform_4, window_bounds = array<i64: 1, 1, 128>}, {transform_indices = @transform_5, window_bounds = array<i64: 1, 1, 128>}]} {
    %c0 = arith.constant 0 : index
    %c0_0 = arith.constant 0 : index
    %0 = vector.load %arg3[%c0, %c0_0] : memref<256x128xbf16, #tpu.memory_space<vmem>>, vector<256x128xbf16>
    %c0_1 = arith.constant 0 : index
    %c0_2 = arith.constant 0 : index
    %1 = vector.load %arg4[%c0_1, %c0_2] : memref<128x128xbf16, #tpu.memory_space<vmem>>, vector<128x128xbf16>
    %cst = arith.constant dense<0.000000e+00> : vector<256x128xf32>
    %2 = tpu.matmul %0, %1, %cst {dimension_numbers = #tpu.dot_dimension_numbers<[1], [0], [0], [1], [0, 0, 1, 1], [], []>} : vector<256x128xbf16>, vector<128x128xbf16>, vector<256x128xf32> -> vector<256x128xf32>
    %c0_3 = arith.constant 0 : index
    %c0_4 = arith.constant 0 : index
    %3 = vector.load %arg5[%c0_3, %c0_4] : memref<1x128xf32, #tpu.memory_space<vmem>>, vector<1x128xf32>
    %4 = vector.broadcast %3 : vector<1x128xf32> to vector<256x128xf32>
    %5 = arith.addf %2, %4 : vector<256x128xf32>
    %cst_5 = arith.constant dense<0.000000e+00> : vector<128xf32>
    %6 = vector.multi_reduction <add>, %5, %cst_5 [0] : vector<256x128xf32> to vector<128xf32>
    %7 = vector.shape_cast %6 : vector<128xf32> to vector<1x128xf32>
    %8 = vector.shape_cast %7 : vector<1x128xf32> to vector<1x1x128xf32>
    %c0_6 = arith.constant 0 : index
    %c0_7 = arith.constant 0 : index
    %c0_8 = arith.constant 0 : index
    %9 = vector.load %arg7[%c0_6, %c0_7, %c0_8] : memref<1x1x128xf32, #tpu.memory_space<vmem>>, vector<1x1x128xf32>
    tpu.vector_store %arg7[%c0_6, %c0_7, %c0_8], %8 {strides = array<i32>} : memref<1x1x128xf32, #tpu.memory_space<vmem>>, vector<1x1x128xf32>,
    %10 = arith.mulf %5, %5 : vector<256x128xf32>
    %cst_9 = arith.constant dense<0.000000e+00> : vector<128xf32>
    %11 = vector.multi_reduction <add>, %10, %cst_9 [0] : vector<256x128xf32> to vector<128xf32>
    %12 = vector.shape_cast %11 : vector<128xf32> to vector<1x128xf32>
    %13 = vector.shape_cast %12 : vector<1x128xf32> to vector<1x1x128xf32>
    %c0_10 = arith.constant 0 : index
    %c0_11 = arith.constant 0 : index
    %c0_12 = arith.constant 0 : index
    %14 = vector.load %arg8[%c0_10, %c0_11, %c0_12] : memref<1x1x128xf32, #tpu.memory_space<vmem>>, vector<1x1x128xf32>
    tpu.vector_store %arg8[%c0_10, %c0_11, %c0_12], %13 {strides = array<i32>} : memref<1x1x128xf32, #tpu.memory_space<vmem>>, vector<1x1x128xf32>,
    %15 = arith.truncf %5 : vector<256x128xf32> to vector<256x128xbf16>
    %c0_13 = arith.constant 0 : index
    %c0_14 = arith.constant 0 : index
    %16 = vector.load %arg6[%c0_13, %c0_14] : memref<256x128xbf16, #tpu.memory_space<vmem>>, vector<256x128xbf16>
    tpu.vector_store %arg6[%c0_13, %c0_14], %15 {strides = array<i32>} : memref<256x128xbf16, #tpu.memory_space<vmem>>, vector<256x128xbf16>,
    return
  }
  func.func @transform_0(%arg0: i32, %arg1: i32, %arg2: i32) -> (i32, i32) {
    %c0_i32 = arith.constant 0 : i32
    return %arg0, %arg2 : i32, i32
  }
  func.func @transform_1(%arg0: i32, %arg1: i32, %arg2: i32) -> (i32, i32) {
    %c0_i32 = arith.constant 0 : i32
    return %arg2, %arg1 : i32, i32
  }
  func.func @transform_2(%arg0: i32, %arg1: i32, %arg2: i32) -> (i32, i32) {
    %c0_i32 = arith.constant 0 : i32
    %c0_i32_0 = arith.constant 0 : i32
    return %c0_i32, %arg1 : i32, i32
  }
  func.func @transform_3(%arg0: i32, %arg1: i32, %arg2: i32) -> (i32, i32) {
    %c0_i32 = arith.constant 0 : i32
    return %arg0, %arg1 : i32, i32
  }
  func.func @transform_4(%arg0: i32, %arg1: i32, %arg2: i32) -> (i32, i32, i32) {
    %c0_i32 = arith.constant 0 : i32
    %c0_i32_0 = arith.constant 0 : i32
    return %arg0, %c0_i32, %arg1 : i32, i32, i32
  }
  func.func @transform_5(%arg0: i32, %arg1: i32, %arg2: i32) -> (i32, i32, i32) {
    %c0_i32 = arith.constant 0 : i32
    %c0_i32_0 = arith.constant 0 : i32
    return %arg0, %c0_i32, %arg1 : i32, i32, i32
  }
}

module attributes {stable_mosaic.version = 11 : i64} {
  func.func @_scale_shift_relu_kernel(%arg0: i32, %arg1: i32, %arg2: memref<512x128xbf16, #tpu.memory_space<vmem>>, %arg3: memref<1x128xf32, #tpu.memory_space<vmem>>, %arg4: memref<1x128xf32, #tpu.memory_space<vmem>>, %arg5: memref<512x128xbf16, #tpu.memory_space<vmem>>) attributes {dimension_semantics = [#tpu.dimension_semantics<parallel>, #tpu.dimension_semantics<parallel>], iteration_bounds = array<i64: 1, 1>, scalar_prefetch = 0 : i64, scratch_operands = 0 : i64, tpu.core_type = #tpu.core_type<tc>, window_params = [{transform_indices = @transform_0, window_bounds = array<i64: 512, 128>}, {transform_indices = @transform_1, window_bounds = array<i64: 1, 128>}, {transform_indices = @transform_2, window_bounds = array<i64: 1, 128>}, {transform_indices = @transform_3, window_bounds = array<i64: 512, 128>}]} {
    %c0 = arith.constant 0 : index
    %c0_0 = arith.constant 0 : index
    %0 = vector.load %arg2[%c0, %c0_0] : memref<512x128xbf16, #tpu.memory_space<vmem>>, vector<512x128xbf16>
    %1 = arith.extf %0 : vector<512x128xbf16> to vector<512x128xf32>
    %c0_1 = arith.constant 0 : index
    %c0_2 = arith.constant 0 : index
    %2 = vector.load %arg3[%c0_1, %c0_2] : memref<1x128xf32, #tpu.memory_space<vmem>>, vector<1x128xf32>
    %3 = vector.broadcast %2 : vector<1x128xf32> to vector<512x128xf32>
    %4 = arith.mulf %1, %3 : vector<512x128xf32>
    %c0_3 = arith.constant 0 : index
    %c0_4 = arith.constant 0 : index
    %5 = vector.load %arg4[%c0_3, %c0_4] : memref<1x128xf32, #tpu.memory_space<vmem>>, vector<1x128xf32>
    %6 = vector.broadcast %5 : vector<1x128xf32> to vector<512x128xf32>
    %7 = arith.addf %4, %6 : vector<512x128xf32>
    %cst = arith.constant 0.000000e+00 : f32
    %8 = vector.broadcast %cst : f32 to vector<512x128xf32>
    %9 = arith.maximumf %7, %8 : vector<512x128xf32>
    %10 = arith.truncf %9 : vector<512x128xf32> to vector<512x128xbf16>
    %c0_5 = arith.constant 0 : index
    %c0_6 = arith.constant 0 : index
    %11 = vector.load %arg5[%c0_5, %c0_6] : memref<512x128xbf16, #tpu.memory_space<vmem>>, vector<512x128xbf16>
    tpu.vector_store %arg5[%c0_5, %c0_6], %10 {strides = array<i32>} : memref<512x128xbf16, #tpu.memory_space<vmem>>, vector<512x128xbf16>,
    return
  }
  func.func @transform_0(%arg0: i32, %arg1: i32) -> (i32, i32) {
    %c0_i32 = arith.constant 0 : i32
    return %arg0, %arg1 : i32, i32
  }
  func.func @transform_1(%arg0: i32, %arg1: i32) -> (i32, i32) {
    %c0_i32 = arith.constant 0 : i32
    %c0_i32_0 = arith.constant 0 : i32
    return %c0_i32, %arg1 : i32, i32
  }
  func.func @transform_2(%arg0: i32, %arg1: i32) -> (i32, i32) {
    %c0_i32 = arith.constant 0 : i32
    %c0_i32_0 = arith.constant 0 : i32
    return %c0_i32, %arg1 : i32, i32
  }
  func.func @transform_3(%arg0: i32, %arg1: i32) -> (i32, i32) {
    %c0_i32 = arith.constant 0 : i32
    return %arg0, %arg1 : i32, i32
  }
}

module attributes {stable_mosaic.version = 11 : i64} {
  func.func @kernel(%arg0: i32, %arg1: i32, %arg2: i32, %arg3: memref<256x640xbf16, #tpu.memory_space<vmem>>, %arg4: memref<640x128xbf16, #tpu.memory_space<vmem>>, %arg5: memref<1x128xf32, #tpu.memory_space<vmem>>, %arg6: memref<256x128xbf16, #tpu.memory_space<vmem>>, %arg7: memref<1x1x128xf32, #tpu.memory_space<vmem>>, %arg8: memref<1x1x128xf32, #tpu.memory_space<vmem>>) attributes {dimension_semantics = [#tpu.dimension_semantics<parallel>, #tpu.dimension_semantics<parallel>, #tpu.dimension_semantics<arbitrary>], iteration_bounds = array<i64: 2, 1, 1>, scalar_prefetch = 0 : i64, scratch_operands = 0 : i64, tpu.core_type = #tpu.core_type<tc>, window_params = [{transform_indices = @transform_0, window_bounds = array<i64: 256, 640>}, {transform_indices = @transform_1, window_bounds = array<i64: 640, 128>}, {transform_indices = @transform_2, window_bounds = array<i64: 1, 128>}, {transform_indices = @transform_3, window_bounds = array<i64: 256, 128>}, {transform_indices = @transform_4, window_bounds = array<i64: 1, 1, 128>}, {transform_indices = @transform_5, window_bounds = array<i64: 1, 1, 128>}]} {
    %c0 = arith.constant 0 : index
    %c0_0 = arith.constant 0 : index
    %0 = vector.load %arg3[%c0, %c0_0] : memref<256x640xbf16, #tpu.memory_space<vmem>>, vector<256x640xbf16>
    %c0_1 = arith.constant 0 : index
    %c0_2 = arith.constant 0 : index
    %1 = vector.load %arg4[%c0_1, %c0_2] : memref<640x128xbf16, #tpu.memory_space<vmem>>, vector<640x128xbf16>
    %cst = arith.constant dense<0.000000e+00> : vector<256x128xf32>
    %2 = tpu.matmul %0, %1, %cst {dimension_numbers = #tpu.dot_dimension_numbers<[1], [0], [0], [1], [0, 0, 1, 1], [], []>} : vector<256x640xbf16>, vector<640x128xbf16>, vector<256x128xf32> -> vector<256x128xf32>
    %c0_3 = arith.constant 0 : index
    %c0_4 = arith.constant 0 : index
    %3 = vector.load %arg5[%c0_3, %c0_4] : memref<1x128xf32, #tpu.memory_space<vmem>>, vector<1x128xf32>
    %4 = vector.broadcast %3 : vector<1x128xf32> to vector<256x128xf32>
    %5 = arith.addf %2, %4 : vector<256x128xf32>
    %cst_5 = arith.constant dense<0.000000e+00> : vector<128xf32>
    %6 = vector.multi_reduction <add>, %5, %cst_5 [0] : vector<256x128xf32> to vector<128xf32>
    %7 = vector.shape_cast %6 : vector<128xf32> to vector<1x128xf32>
    %8 = vector.shape_cast %7 : vector<1x128xf32> to vector<1x1x128xf32>
    %c0_6 = arith.constant 0 : index
    %c0_7 = arith.constant 0 : index
    %c0_8 = arith.constant 0 : index
    %9 = vector.load %arg7[%c0_6, %c0_7, %c0_8] : memref<1x1x128xf32, #tpu.memory_space<vmem>>, vector<1x1x128xf32>
    tpu.vector_store %arg7[%c0_6, %c0_7, %c0_8], %8 {strides = array<i32>} : memref<1x1x128xf32, #tpu.memory_space<vmem>>, vector<1x1x128xf32>,
    %10 = arith.mulf %5, %5 : vector<256x128xf32>
    %cst_9 = arith.constant dense<0.000000e+00> : vector<128xf32>
    %11 = vector.multi_reduction <add>, %10, %cst_9 [0] : vector<256x128xf32> to vector<128xf32>
    %12 = vector.shape_cast %11 : vector<128xf32> to vector<1x128xf32>
    %13 = vector.shape_cast %12 : vector<1x128xf32> to vector<1x1x128xf32>
    %c0_10 = arith.constant 0 : index
    %c0_11 = arith.constant 0 : index
    %c0_12 = arith.constant 0 : index
    %14 = vector.load %arg8[%c0_10, %c0_11, %c0_12] : memref<1x1x128xf32, #tpu.memory_space<vmem>>, vector<1x1x128xf32>
    tpu.vector_store %arg8[%c0_10, %c0_11, %c0_12], %13 {strides = array<i32>} : memref<1x1x128xf32, #tpu.memory_space<vmem>>, vector<1x1x128xf32>,
    %15 = arith.truncf %5 : vector<256x128xf32> to vector<256x128xbf16>
    %c0_13 = arith.constant 0 : index
    %c0_14 = arith.constant 0 : index
    %16 = vector.load %arg6[%c0_13, %c0_14] : memref<256x128xbf16, #tpu.memory_space<vmem>>, vector<256x128xbf16>
    tpu.vector_store %arg6[%c0_13, %c0_14], %15 {strides = array<i32>} : memref<256x128xbf16, #tpu.memory_space<vmem>>, vector<256x128xbf16>,
    return
  }
  func.func @transform_0(%arg0: i32, %arg1: i32, %arg2: i32) -> (i32, i32) {
    %c0_i32 = arith.constant 0 : i32
    return %arg0, %arg2 : i32, i32
  }
  func.func @transform_1(%arg0: i32, %arg1: i32, %arg2: i32) -> (i32, i32) {
    %c0_i32 = arith.constant 0 : i32
    return %arg2, %arg1 : i32, i32
  }
  func.func @transform_2(%arg0: i32, %arg1: i32, %arg2: i32) -> (i32, i32) {
    %c0_i32 = arith.constant 0 : i32
    %c0_i32_0 = arith.constant 0 : i32
    return %c0_i32, %arg1 : i32, i32
  }
  func.func @transform_3(%arg0: i32, %arg1: i32, %arg2: i32) -> (i32, i32) {
    %c0_i32 = arith.constant 0 : i32
    return %arg0, %arg1 : i32, i32
  }
  func.func @transform_4(%arg0: i32, %arg1: i32, %arg2: i32) -> (i32, i32, i32) {
    %c0_i32 = arith.constant 0 : i32
    %c0_i32_0 = arith.constant 0 : i32
    return %arg0, %c0_i32, %arg1 : i32, i32, i32
  }
  func.func @transform_5(%arg0: i32, %arg1: i32, %arg2: i32) -> (i32, i32, i32) {
    %c0_i32 = arith.constant 0 : i32
    %c0_i32_0 = arith.constant 0 : i32
    return %arg0, %c0_i32, %arg1 : i32, i32, i32
  }
}

</mosaic_0001>

<llo_original>
// kernel: con2d_forward.5
$region0: #{con2d_forward.5}
  #allocation0 [shape = 'u32[]', space=smem, size = 0x4, offset = 0x4, fixed_abs, tag = 'smem constant byte address 0x4 - core index']
  #allocation1 [shape = 'u32[144,128]{1,0:T(1,128)}', space=vmem, size = 0x12000, scoped, tag = 'internal scratch']
  %s0 = inlined_call_operand.vmem [shape: bf16[512,128], index: 0, kind: input, shape index: {}]
  %s1 = inlined_call_operand.vmem [shape: f32[1,128], index: 1, kind: input, shape index: {}]
  %s2 = inlined_call_operand.vmem [shape: f32[1,128], index: 2, kind: input, shape index: {}]
  %s3 = inlined_call_operand.vmem [shape: bf16[512,128], index: 3, kind: output, shape index: {}]
  %s4 = sld [smem:[#allocation0]]
  $region22: #{con2d_forward.5} parent=0
    _
  %s6 = ssub.s32 1, %s4
  %s7 = scalar_select 0, %s6, %s4
  // Predicated region
  $region2: #{con2d_forward.5} parent=0 // pred_check
    _
  $region3: #{con2d_forward.5} parent=0 // pred_check_branch
    %9 = sbr.rel (0) target = $region5
  $region4: #{con2d_forward.5} parent=0 // pred_region
    _
  $region5: #{con2d_forward.5} parent=0 // pred_fallthru
    _
  // Predicated region
  $region6: #{con2d_forward.5} parent=0 // pred_check
    _
  $region7: #{con2d_forward.5} parent=0 // pred_check_branch
    %11 = sbr.rel (0) target = $region9
  $region8: #{con2d_forward.5} parent=0 // pred_region
    _
  $region9: #{con2d_forward.5} parent=0 // pred_fallthru
    _
  // Predicated region
  $region10: #{con2d_forward.5} parent=0 // pred_check
    _
  $region11: #{con2d_forward.5} parent=0 // pred_check_branch
    %13 = sbr.rel (0) target = $region13
  $region12: #{con2d_forward.5} parent=0 // pred_region
    _
  $region13: #{con2d_forward.5} parent=0 // pred_fallthru
    _
  %v14 = vld [vmem:[%s0] sm:$0xf]
  %v15 = vld [vmem:[%s0 + $0x4] sm:$0xf]
  %v16 = vld [vmem:[%s0 + $0x8] sm:$0xf]
  %v17 = vld [vmem:[%s0 + $0xc] sm:$0xf]
  %v18 = vld [vmem:[%s0 + $0x10] sm:$0xf]
  %v19 = vld [vmem:[%s0 + $0x14] sm:$0xf]
  %v20 = vld [vmem:[%s0 + $0x18] sm:$0xf]
  %v21 = vld [vmem:[%s0 + $0x1c] sm:$0xf]
  %v22 = vld [vmem:[%s0 + $0x20] sm:$0xf]
  %v23 = vld [vmem:[%s0 + $0x24] sm:$0xf]
  %v24 = vld [vmem:[%s0 + $0x28] sm:$0xf]
  %v25 = vld [vmem:[%s0 + $0x2c] sm:$0xf]
  %v26 = vld [vmem:[%s0 + $0x30] sm:$0xf]
  %v27 = vld [vmem:[%s0 + $0x34] sm:$0xf]
  %v28 = vld [vmem:[%s0 + $0x38] sm:$0xf]
  %v29 = vld [vmem:[%s0 + $0x3c] sm:$0xf]
  %v30 = vld [vmem:[%s0 + $0x40] sm:$0xf]
  %v31 = vld [vmem:[%s0 + $0x44] sm:$0xf]
  %v32 = vld [vmem:[%s0 + $0x48] sm:$0xf]
  %v33 = vld [vmem:[%s0 + $0x4c] sm:$0xf]
  %v34 = vld [vmem:[%s0 + $0x50] sm:$0xf]
  %v35 = vld [vmem:[%s0 + $0x54] sm:$0xf]
  %v36 = vld [vmem:[%s0 + $0x58] sm:$0xf]
  %v37 = vld [vmem:[%s0 + $0x5c] sm:$0xf]
  %v38 = vld [vmem:[%s0 + $0x60] sm:$0xf]
  %v39 = vld [vmem:[%s0 + $0x64] sm:$0xf]
  %v40 = vld [vmem:[%s0 + $0x68] sm:$0xf]
  %v41 = vld [vmem:[%s0 + $0x6c] sm:$0xf]
  %v42 = vld [vmem:[%s0 + $0x70] sm:$0xf]
  %v43 = vld [vmem:[%s0 + $0x74] sm:$0xf]
  %v44 = vld [vmem:[%s0 + $0x78] sm:$0xf]
  %v45 = vld [vmem:[%s0 + $0x7c] sm:$0xf]
  %v46 = vld [vmem:[%s0 + $0x80] sm:$0xf]
  %v47 = vld [vmem:[%s0 + $0x84] sm:$0xf]
  %v48 = vld [vmem:[%s0 + $0x88] sm:$0xf]
  %v49 = vld [vmem:[%s0 + $0x8c] sm:$0xf]
  %v50 = vld [vmem:[%s0 + $0x90] sm:$0xf]
  %v51 = vld [vmem:[%s0 + $0x94] sm:$0xf]
  %v52 = vld [vmem:[%s0 + $0x98] sm:$0xf]
  %v53 = vld [vmem:[%s0 + $0x9c] sm:$0xf]
  %v54 = vld [vmem:[%s0 + $0xa0] sm:$0xf]
  %v55 = vld [vmem:[%s0 + $0xa4] sm:$0xf]
  %v56 = vld [vmem:[%s0 + $0xa8] sm:$0xf]
  %v57 = vld [vmem:[%s0 + $0xac] sm:$0xf]
  %v58 = vld [vmem:[%s0 + $0xb0] sm:$0xf]
  %v59 = vld [vmem:[%s0 + $0xb4] sm:$0xf]
  %v60 = vld [vmem:[%s0 + $0xb8] sm:$0xf]
  %v61 = vld [vmem:[%s0 + $0xbc] sm:$0xf]
  %v62 = vld [vmem:[%s0 + $0xc0] sm:$0xf]
  %v63 = vld [vmem:[%s0 + $0xc4] sm:$0xf]
  %v64 = vld [vmem:[%s0 + $0xc8] sm:$0xf]
  %v65 = vld [vmem:[%s0 + $0xcc] sm:$0xf]
  %v66 = vld [vmem:[%s0 + $0xd0] sm:$0xf]
  %v67 = vld [vmem:[%s0 + $0xd4] sm:$0xf]
  %v68 = vld [vmem:[%s0 + $0xd8] sm:$0xf]
  %v69 = vld [vmem:[%s0 + $0xdc] sm:$0xf]
  %v70 = vld [vmem:[%s0 + $0xe0] sm:$0xf]
  %v71 = vld [vmem:[%s0 + $0xe4] sm:$0xf]
  %v72 = vld [vmem:[%s0 + $0xe8] sm:$0xf]
  %v73 = vld [vmem:[%s0 + $0xec] sm:$0xf]
  %v74 = vld [vmem:[%s0 + $0xf0] sm:$0xf]
  %v75 = vld [vmem:[%s0 + $0xf4] sm:$0xf]
  %v76 = vld [vmem:[%s0 + $0xf8] sm:$0xf]
  %v77 = vld [vmem:[%s0 + $0xfc] sm:$0xf]
  %v78 = vunpack.c.l.bf16 %v14
  %v79 = vunpack.c.l.bf16 %v15
  %v80 = vunpack.c.l.bf16 %v16
  %v81 = vunpack.c.l.bf16 %v17
  %v82 = vunpack.c.l.bf16 %v18
  %v83 = vunpack.c.l.bf16 %v19
  %v84 = vunpack.c.l.bf16 %v20
  %v85 = vunpack.c.l.bf16 %v21
  %v86 = vunpack.c.l.bf16 %v22
  %v87 = vunpack.c.l.bf16 %v23
  %v88 = vunpack.c.l.bf16 %v24
  %v89 = vunpack.c.l.bf16 %v25
  %v90 = vunpack.c.l.bf16 %v26
  %v91 = vunpack.c.l.bf16 %v27
  %v92 = vunpack.c.l.bf16 %v28
  %v93 = vunpack.c.l.bf16 %v29
  %v94 = vunpack.c.l.bf16 %v30
  %v95 = vunpack.c.l.bf16 %v31
  %v96 = vunpack.c.l.bf16 %v32
  %v97 = vunpack.c.l.bf16 %v33
  %v98 = vunpack.c.l.bf16 %v34
  %v99 = vunpack.c.l.bf16 %v35
  %v100 = vunpack.c.l.bf16 %v36
  %v101 = vunpack.c.l.bf16 %v37
  %v102 = vunpack.c.l.bf16 %v38
  %v103 = vunpack.c.l.bf16 %v39
  %v104 = vunpack.c.l.bf16 %v40
  %v105 = vunpack.c.l.bf16 %v41
  %v106 = vunpack.c.l.bf16 %v42
  %v107 = vunpack.c.l.bf16 %v43
  %v108 = vunpack.c.l.bf16 %v44
  %v109 = vunpack.c.l.bf16 %v45
  %v110 = vunpack.c.l.bf16 %v46
  %v111 = vunpack.c.l.bf16 %v47
  %v112 = vunpack.c.l.bf16 %v48
  %v113 = vunpack.c.l.bf16 %v49
  %v114 = vunpack.c.l.bf16 %v50
  %v115 = vunpack.c.l.bf16 %v51
  %v116 = vunpack.c.l.bf16 %v52
  %v117 = vunpack.c.l.bf16 %v53
  %v118 = vunpack.c.l.bf16 %v54
  %v119 = vunpack.c.l.bf16 %v55
  %v120 = vunpack.c.l.bf16 %v56
  %v121 = vunpack.c.l.bf16 %v57
  %v122 = vunpack.c.l.bf16 %v58
  %v123 = vunpack.c.l.bf16 %v59
  %v124 = vunpack.c.l.bf16 %v60
  %v125 = vunpack.c.l.bf16 %v61
  %v126 = vunpack.c.l.bf16 %v62
  %v127 = vunpack.c.l.bf16 %v63
  %v128 = vunpack.c.l.bf16 %v64
  %v129 = vunpack.c.l.bf16 %v65
  %v130 = vunpack.c.l.bf16 %v66
  %v131 = vunpack.c.l.bf16 %v67
  %v132 = vunpack.c.l.bf16 %v68
  %v133 = vunpack.c.l.bf16 %v69
  %v134 = vunpack.c.l.bf16 %v70
  %v135 = vunpack.c.l.bf16 %v71
  %v136 = vunpack.c.l.bf16 %v72
  %v137 = vunpack.c.l.bf16 %v73
  %v138 = vunpack.c.l.bf16 %v74
  %v139 = vunpack.c.l.bf16 %v75
  %v140 = vunpack.c.l.bf16 %v76
  %v141 = vunpack.c.l.bf16 %v77
  %v142 = vld [vmem:[%s1] sm:$0x1]
  %v144 = vlaneseq
  %v145 = vshrl.u32 %v144, 7
  %v146 = vsub.s32 0, %v145
  %v147 = vrot.slane %v142, %v146
  %v149 = vmul.f32 %v78, %v147
  %v150 = vmul.f32 %v79, %v147
  %v151 = vmul.f32 %v80, %v147
  %v152 = vmul.f32 %v81, %v147
  %v153 = vmul.f32 %v82, %v147
  %v154 = vmul.f32 %v83, %v147
  %v155 = vmul.f32 %v84, %v147
  %v156 = vmul.f32 %v85, %v147
  %v157 = vmul.f32 %v86, %v147
  %v158 = vmul.f32 %v87, %v147
  %v159 = vmul.f32 %v88, %v147
  %v160 = vmul.f32 %v89, %v147
  %v161 = vmul.f32 %v90, %v147
  %v162 = vmul.f32 %v91, %v147
  %v163 = vmul.f32 %v92, %v147
  %v164 = vmul.f32 %v93, %v147
  %v165 = vmul.f32 %v94, %v147
  %v166 = vmul.f32 %v95, %v147
  %v167 = vmul.f32 %v96, %v147
  %v168 = vmul.f32 %v97, %v147
  %v169 = vmul.f32 %v98, %v147
  %v170 = vmul.f32 %v99, %v147
  %v171 = vmul.f32 %v100, %v147
  %v172 = vmul.f32 %v101, %v147
  %v173 = vmul.f32 %v102, %v147
  %v174 = vmul.f32 %v103, %v147
  %v175 = vmul.f32 %v104, %v147
  %v176 = vmul.f32 %v105, %v147
  %v177 = vmul.f32 %v106, %v147
  %v178 = vmul.f32 %v107, %v147
  %v179 = vmul.f32 %v108, %v147
  %v180 = vmul.f32 %v109, %v147
  %v181 = vmul.f32 %v110, %v147
  %v182 = vmul.f32 %v111, %v147
  %v183 = vmul.f32 %v112, %v147
  %v184 = vmul.f32 %v113, %v147
  %v185 = vmul.f32 %v114, %v147
  %v186 = vmul.f32 %v115, %v147
  %v187 = vmul.f32 %v116, %v147
  %v188 = vmul.f32 %v117, %v147
  %v189 = vmul.f32 %v118, %v147
  %v190 = vmul.f32 %v119, %v147
  %v191 = vmul.f32 %v120, %v147
  %v192 = vmul.f32 %v121, %v147
  %v193 = vmul.f32 %v122, %v147
  %v194 = vmul.f32 %v123, %v147
  %v195 = vmul.f32 %v124, %v147
  %v196 = vmul.f32 %v125, %v147
  %v197 = vmul.f32 %v126, %v147
  %v198 = vmul.f32 %v127, %v147
  %v199 = vmul.f32 %v128, %v147
  %v200 = vmul.f32 %v129, %v147
  %v201 = vmul.f32 %v130, %v147
  %v202 = vmul.f32 %v131, %v147
  %v203 = vmul.f32 %v132, %v147
  %v204 = vmul.f32 %v133, %v147
  %v205 = vmul.f32 %v134, %v147
  %v206 = vmul.f32 %v135, %v147
  %v207 = vmul.f32 %v136, %v147
  %v208 = vmul.f32 %v137, %v147
  %v209 = vmul.f32 %v138, %v147
  %v210 = vmul.f32 %v139, %v147
  %v211 = vmul.f32 %v140, %v147
  %v212 = vmul.f32 %v141, %v147
  %v213 = vld [vmem:[%s2] sm:$0x1]
  %v215 = vlaneseq
  %v216 = vshrl.u32 %v215, 7
  %v217 = vsub.s32 0, %v216
  %v218 = vrot.slane %v213, %v217
  %v220 = vadd.f32 %v149, %v218
  %v221 = vadd.f32 %v150, %v218
  %v222 = vadd.f32 %v151, %v218
  %v223 = vadd.f32 %v152, %v218
  %v224 = vadd.f32 %v153, %v218
  %v225 = vadd.f32 %v154, %v218
  %v226 = vadd.f32 %v155, %v218
  %v227 = vadd.f32 %v156, %v218
  %v228 = vadd.f32 %v157, %v218
  %v229 = vadd.f32 %v158, %v218
  %v230 = vadd.f32 %v159, %v218
  %v231 = vadd.f32 %v160, %v218
  %v232 = vadd.f32 %v161, %v218
  %v233 = vadd.f32 %v162, %v218
  %v234 = vadd.f32 %v163, %v218
  %v235 = vadd.f32 %v164, %v218
  %v236 = vadd.f32 %v165, %v218
  %v237 = vadd.f32 %v166, %v218
  %v238 = vadd.f32 %v167, %v218
  %v239 = vadd.f32 %v168, %v218
  %v240 = vadd.f32 %v169, %v218
  %v241 = vadd.f32 %v170, %v218
  %v242 = vadd.f32 %v171, %v218
  %v243 = vadd.f32 %v172, %v218
  %v244 = vadd.f32 %v173, %v218
  %v245 = vadd.f32 %v174, %v218
  %v246 = vadd.f32 %v175, %v218
  %v247 = vadd.f32 %v176, %v218
  %v248 = vadd.f32 %v177, %v218
  %v249 = vadd.f32 %v178, %v218
  %v250 = vadd.f32 %v179, %v218
  %v251 = vadd.f32 %v180, %v218
  %v252 = vadd.f32 %v181, %v218
  %v253 = vadd.f32 %v182, %v218
  %v254 = vadd.f32 %v183, %v218
  %v255 = vadd.f32 %v184, %v218
  %v256 = vadd.f32 %v185, %v218
  %v257 = vadd.f32 %v186, %v218
  %v258 = vadd.f32 %v187, %v218
  %v259 = vadd.f32 %v188, %v218
  %v260 = vadd.f32 %v189, %v218
  %v261 = vadd.f32 %v190, %v218
  %v262 = vadd.f32 %v191, %v218
  %v263 = vadd.f32 %v192, %v218
  %v264 = vadd.f32 %v193, %v218
  %v265 = vadd.f32 %v194, %v218
  %v266 = vadd.f32 %v195, %v218
  %v267 = vadd.f32 %v196, %v218
  %v268 = vadd.f32 %v197, %v218
  %v269 = vadd.f32 %v198, %v218
  %v270 = vadd.f32 %v199, %v218
  %v271 = vadd.f32 %v200, %v218
  %v272 = vadd.f32 %v201, %v218
  %v273 = vadd.f32 %v202, %v218
  %v274 = vadd.f32 %v203, %v218
  %v275 = vadd.f32 %v204, %v218
  %v276 = vadd.f32 %v205, %v218
  %v277 = vadd.f32 %v206, %v218
  %v278 = vadd.f32 %v207, %v218
  %v279 = vadd.f32 %v208, %v218
  %v280 = vadd.f32 %v209, %v218
  %v281 = vadd.f32 %v210, %v218
  %v282 = vadd.f32 %v211, %v218
  %v283 = vadd.f32 %v212, %v218
  %v284 = vmax.f32 %v220, 0.0
  %v285 = vmax.f32 %v221, 0.0
  %v286 = vmax.f32 %v222, 0.0
  %v287 = vmax.f32 %v223, 0.0
  %v288 = vmax.f32 %v224, 0.0
  %v289 = vmax.f32 %v225, 0.0
  %v290 = vmax.f32 %v226, 0.0
  %v291 = vmax.f32 %v227, 0.0
  %v292 = vmax.f32 %v228, 0.0
  %v293 = vmax.f32 %v229, 0.0
  %v294 = vmax.f32 %v230, 0.0
  %v295 = vmax.f32 %v231, 0.0
  %v296 = vmax.f32 %v232, 0.0
  %v297 = vmax.f32 %v233, 0.0
  %v298 = vmax.f32 %v234, 0.0
  %v299 = vmax.f32 %v235, 0.0
  %v300 = vmax.f32 %v236, 0.0
  %v301 = vmax.f32 %v237, 0.0
  %v302 = vmax.f32 %v238, 0.0
  %v303 = vmax.f32 %v239, 0.0
  %v304 = vmax.f32 %v240, 0.0
  %v305 = vmax.f32 %v241, 0.0
  %v306 = vmax.f32 %v242, 0.0
  %v307 = vmax.f32 %v243, 0.0
  %v308 = vmax.f32 %v244, 0.0
  %v309 = vmax.f32 %v245, 0.0
  %v310 = vmax.f32 %v246, 0.0
  %v311 = vmax.f32 %v247, 0.0
  %v312 = vmax.f32 %v248, 0.0
  %v313 = vmax.f32 %v249, 0.0
  %v314 = vmax.f32 %v250, 0.0
  %v315 = vmax.f32 %v251, 0.0
  %v316 = vmax.f32 %v252, 0.0
  %v317 = vmax.f32 %v253, 0.0
  %v318 = vmax.f32 %v254, 0.0
  %v319 = vmax.f32 %v255, 0.0
  %v320 = vmax.f32 %v256, 0.0
  %v321 = vmax.f32 %v257, 0.0
  %v322 = vmax.f32 %v258, 0.0
  %v323 = vmax.f32 %v259, 0.0
  %v324 = vmax.f32 %v260, 0.0
  %v325 = vmax.f32 %v261, 0.0
  %v326 = vmax.f32 %v262, 0.0
  %v327 = vmax.f32 %v263, 0.0
  %v328 = vmax.f32 %v264, 0.0
  %v329 = vmax.f32 %v265, 0.0
  %v330 = vmax.f32 %v266, 0.0
  %v331 = vmax.f32 %v267, 0.0
  %v332 = vmax.f32 %v268, 0.0
  %v333 = vmax.f32 %v269, 0.0
  %v334 = vmax.f32 %v270, 0.0
  %v335 = vmax.f32 %v271, 0.0
  %v336 = vmax.f32 %v272, 0.0
  %v337 = vmax.f32 %v273, 0.0
  %v338 = vmax.f32 %v274, 0.0
  %v339 = vmax.f32 %v275, 0.0
  %v340 = vmax.f32 %v276, 0.0
  %v341 = vmax.f32 %v277, 0.0
  %v342 = vmax.f32 %v278, 0.0
  %v343 = vmax.f32 %v279, 0.0
  %v344 = vmax.f32 %v280, 0.0
  %v345 = vmax.f32 %v281, 0.0
  %v346 = vmax.f32 %v282, 0.0
  %v347 = vmax.f32 %v283, 0.0
  %v348 = vpack.c.bf16 %v285, %v284
  %v349 = vpack.c.bf16 %v287, %v286
  %v350 = vpack.c.bf16 %v289, %v288
  %v351 = vpack.c.bf16 %v291, %v290
  %v352 = vpack.c.bf16 %v293, %v292
  %v353 = vpack.c.bf16 %v295, %v294
  %v354 = vpack.c.bf16 %v297, %v296
  %v355 = vpack.c.bf16 %v299, %v298
  %v356 = vpack.c.bf16 %v301, %v300
  %v357 = vpack.c.bf16 %v303, %v302
  %v358 = vpack.c.bf16 %v305, %v304
  %v359 = vpack.c.bf16 %v307, %v306
  %v360 = vpack.c.bf16 %v309, %v308
  %v361 = vpack.c.bf16 %v311, %v310
  %v362 = vpack.c.bf16 %v313, %v312
  %v363 = vpack.c.bf16 %v315, %v314
  %v364 = vpack.c.bf16 %v317, %v316
  %v365 = vpack.c.bf16 %v319, %v318
  %v366 = vpack.c.bf16 %v321, %v320
  %v367 = vpack.c.bf16 %v323, %v322
  %v368 = vpack.c.bf16 %v325, %v324
  %v369 = vpack.c.bf16 %v327, %v326
  %v370 = vpack.c.bf16 %v329, %v328
  %v371 = vpack.c.bf16 %v331, %v330
  %v372 = vpack.c.bf16 %v333, %v332
  %v373 = vpack.c.bf16 %v335, %v334
  %v374 = vpack.c.bf16 %v337, %v336
  %v375 = vpack.c.bf16 %v339, %v338
  %v376 = vpack.c.bf16 %v341, %v340
  %v377 = vpack.c.bf16 %v343, %v342
  %v378 = vpack.c.bf16 %v345, %v344
  %v379 = vpack.c.bf16 %v347, %v346
  %v412 = vunpack.c.l.b16 %v348
  %v413 = vunpack.c.h.b16 %v348
  %v414 = vunpack.c.l.b16 %v349
  %v415 = vunpack.c.h.b16 %v349
  %v416 = vunpack.c.l.b16 %v350
  %v417 = vunpack.c.h.b16 %v350
  %v418 = vunpack.c.l.b16 %v351
  %v419 = vunpack.c.h.b16 %v351
  %v420 = vunpack.c.l.b16 %v352
  %v421 = vunpack.c.h.b16 %v352
  %v422 = vunpack.c.l.b16 %v353
  %v423 = vunpack.c.h.b16 %v353
  %v424 = vunpack.c.l.b16 %v354
  %v425 = vunpack.c.h.b16 %v354
  %v426 = vunpack.c.l.b16 %v355
  %v427 = vunpack.c.h.b16 %v355
  %v428 = vunpack.c.l.b16 %v356
  %v429 = vunpack.c.h.b16 %v356
  %v430 = vunpack.c.l.b16 %v357
  %v431 = vunpack.c.h.b16 %v357
  %v432 = vunpack.c.l.b16 %v358
  %v433 = vunpack.c.h.b16 %v358
  %v434 = vunpack.c.l.b16 %v359
  %v435 = vunpack.c.h.b16 %v359
  %v436 = vunpack.c.l.b16 %v360
  %v437 = vunpack.c.h.b16 %v360
  %v438 = vunpack.c.l.b16 %v361
  %v439 = vunpack.c.h.b16 %v361
  %v440 = vunpack.c.l.b16 %v362
  %v441 = vunpack.c.h.b16 %v362
  %v442 = vunpack.c.l.b16 %v363
  %v443 = vunpack.c.h.b16 %v363
  %v444 = vunpack.c.l.b16 %v364
  %v445 = vunpack.c.h.b16 %v364
  %v446 = vunpack.c.l.b16 %v365
  %v447 = vunpack.c.h.b16 %v365
  %v448 = vunpack.c.l.b16 %v366
  %v449 = vunpack.c.h.b16 %v366
  %v450 = vunpack.c.l.b16 %v367
  %v451 = vunpack.c.h.b16 %v367
  %v452 = vunpack.c.l.b16 %v368
  %v453 = vunpack.c.h.b16 %v368
  %v454 = vunpack.c.l.b16 %v369
  %v455 = vunpack.c.h.b16 %v369
  %v456 = vunpack.c.l.b16 %v370
  %v457 = vunpack.c.h.b16 %v370
  %v458 = vunpack.c.l.b16 %v371
  %v459 = vunpack.c.h.b16 %v371
  %v460 = vunpack.c.l.b16 %v372
  %v461 = vunpack.c.h.b16 %v372
  %v462 = vunpack.c.l.b16 %v373
  %v463 = vunpack.c.h.b16 %v373
  %v464 = vunpack.c.l.b16 %v374
  %v465 = vunpack.c.h.b16 %v374
  %v466 = vunpack.c.l.b16 %v375
  %v467 = vunpack.c.h.b16 %v375
  %v468 = vunpack.c.l.b16 %v376
  %v469 = vunpack.c.h.b16 %v376
  %v470 = vunpack.c.l.b16 %v377
  %v471 = vunpack.c.h.b16 %v377
  %v472 = vunpack.c.l.b16 %v378
  %v473 = vunpack.c.h.b16 %v378
  %v474 = vunpack.c.l.b16 %v379
  %v475 = vunpack.c.h.b16 %v379
  %v476 = vpack.c.b16 %v412, %v412
  %v477 = vpack.c.b16 %v413, %v413
  %v478 = vpack.c.b16 %v414, %v414
  %v479 = vpack.c.b16 %v415, %v415
  %v480 = vpack.c.b16 %v416, %v416
  %v481 = vpack.c.b16 %v417, %v417
  %v482 = vpack.c.b16 %v418, %v418
  %v483 = vpack.c.b16 %v419, %v419
  %v484 = vpack.c.b16 %v420, %v420
  %v485 = vpack.c.b16 %v421, %v421
  %v486 = vpack.c.b16 %v422, %v422
  %v487 = vpack.c.b16 %v423, %v423
  %v488 = vpack.c.b16 %v424, %v424
  %v489 = vpack.c.b16 %v425, %v425
  %v490 = vpack.c.b16 %v426, %v426
  %v491 = vpack.c.b16 %v427, %v427
  %v492 = vpack.c.b16 %v428, %v428
  %v493 = vpack.c.b16 %v429, %v429
  %v494 = vpack.c.b16 %v430, %v430
  %v495 = vpack.c.b16 %v431, %v431
  %v496 = vpack.c.b16 %v432, %v432
  %v497 = vpack.c.b16 %v433, %v433
  %v498 = vpack.c.b16 %v434, %v434
  %v499 = vpack.c.b16 %v435, %v435
  %v500 = vpack.c.b16 %v436, %v436
  %v501 = vpack.c.b16 %v437, %v437
  %v502 = vpack.c.b16 %v438, %v438
  %v503 = vpack.c.b16 %v439, %v439
  %v504 = vpack.c.b16 %v440, %v440
  %v505 = vpack.c.b16 %v441, %v441
  %v506 = vpack.c.b16 %v442, %v442
  %v507 = vpack.c.b16 %v443, %v443
  %v508 = vpack.c.b16 %v444, %v444
  %v509 = vpack.c.b16 %v445, %v445
  %v510 = vpack.c.b16 %v446, %v446
  %v511 = vpack.c.b16 %v447, %v447
  %v512 = vpack.c.b16 %v448, %v448
  %v513 = vpack.c.b16 %v449, %v449
  %v514 = vpack.c.b16 %v450, %v450
  %v515 = vpack.c.b16 %v451, %v451
  %v516 = vpack.c.b16 %v452, %v452
  %v517 = vpack.c.b16 %v453, %v453
  %v518 = vpack.c.b16 %v454, %v454
  %v519 = vpack.c.b16 %v455, %v455
  %v520 = vpack.c.b16 %v456, %v456
  %v521 = vpack.c.b16 %v457, %v457
  %v522 = vpack.c.b16 %v458, %v458
  %v523 = vpack.c.b16 %v459, %v459
  %v524 = vpack.c.b16 %v460, %v460
  %v525 = vpack.c.b16 %v461, %v461
  %v526 = vpack.c.b16 %v462, %v462
  %v527 = vpack.c.b16 %v463, %v463
  %v528 = vpack.c.b16 %v464, %v464
  %v529 = vpack.c.b16 %v465, %v465
  %v530 = vpack.c.b16 %v466, %v466
  %v531 = vpack.c.b16 %v467, %v467
  %v532 = vpack.c.b16 %v468, %v468
  %v533 = vpack.c.b16 %v469, %v469
  %v534 = vpack.c.b16 %v470, %v470
  %v535 = vpack.c.b16 %v471, %v471
  %v536 = vpack.c.b16 %v472, %v472
  %v537 = vpack.c.b16 %v473, %v473
  %v538 = vpack.c.b16 %v474, %v474
  %v539 = vpack.c.b16 %v475, %v475
  %604 = vst [vmem:[%s3] sm:$0xf] %v476
  %605 = vst [vmem:[%s3 + $0x4] sm:$0xf] %v477
  %606 = vst [vmem:[%s3 + $0x8] sm:$0xf] %v478
  %607 = vst [vmem:[%s3 + $0xc] sm:$0xf] %v479
  %608 = vst [vmem:[%s3 + $0x10] sm:$0xf] %v480
  %609 = vst [vmem:[%s3 + $0x14] sm:$0xf] %v481
  %610 = vst [vmem:[%s3 + $0x18] sm:$0xf] %v482
  %611 = vst [vmem:[%s3 + $0x1c] sm:$0xf] %v483
  %612 = vst [vmem:[%s3 + $0x20] sm:$0xf] %v484
  %613 = vst [vmem:[%s3 + $0x24] sm:$0xf] %v485
  %614 = vst [vmem:[%s3 + $0x28] sm:$0xf] %v486
  %615 = vst [vmem:[%s3 + $0x2c] sm:$0xf] %v487
  %616 = vst [vmem:[%s3 + $0x30] sm:$0xf] %v488
  %617 = vst [vmem:[%s3 + $0x34] sm:$0xf] %v489
  %618 = vst [vmem:[%s3 + $0x38] sm:$0xf] %v490
  %619 = vst [vmem:[%s3 + $0x3c] sm:$0xf] %v491
  %620 = vst [vmem:[%s3 + $0x40] sm:$0xf] %v492
  %621 = vst [vmem:[%s3 + $0x44] sm:$0xf] %v493
  %622 = vst [vmem:[%s3 + $0x48] sm:$0xf] %v494
  %623 = vst [vmem:[%s3 + $0x4c] sm:$0xf] %v495
  %624 = vst [vmem:[%s3 + $0x50] sm:$0xf] %v496
  %625 = vst [vmem:[%s3 + $0x54] sm:$0xf] %v497
  %626 = vst [vmem:[%s3 + $0x58] sm:$0xf] %v498
  %627 = vst [vmem:[%s3 + $0x5c] sm:$0xf] %v499
  %628 = vst [vmem:[%s3 + $0x60] sm:$0xf] %v500
  %629 = vst [vmem:[%s3 + $0x64] sm:$0xf] %v501
  %630 = vst [vmem:[%s3 + $0x68] sm:$0xf] %v502
  %631 = vst [vmem:[%s3 + $0x6c] sm:$0xf] %v503
  %632 = vst [vmem:[%s3 + $0x70] sm:$0xf] %v504
  %633 = vst [vmem:[%s3 + $0x74] sm:$0xf] %v505
  %634 = vst [vmem:[%s3 + $0x78] sm:$0xf] %v506
  %635 = vst [vmem:[%s3 + $0x7c] sm:$0xf] %v507
  %636 = vst [vmem:[%s3 + $0x80] sm:$0xf] %v508
  %637 = vst [vmem:[%s3 + $0x84] sm:$0xf] %v509
  %638 = vst [vmem:[%s3 + $0x88] sm:$0xf] %v510
  %639 = vst [vmem:[%s3 + $0x8c] sm:$0xf] %v511
  %640 = vst [vmem:[%s3 + $0x90] sm:$0xf] %v512
  %641 = vst [vmem:[%s3 + $0x94] sm:$0xf] %v513
  %642 = vst [vmem:[%s3 + $0x98] sm:$0xf] %v514
  %643 = vst [vmem:[%s3 + $0x9c] sm:$0xf] %v515
  %644 = vst [vmem:[%s3 + $0xa0] sm:$0xf] %v516
  %645 = vst [vmem:[%s3 + $0xa4] sm:$0xf] %v517
  %646 = vst [vmem:[%s3 + $0xa8] sm:$0xf] %v518
  %647 = vst [vmem:[%s3 + $0xac] sm:$0xf] %v519
  %648 = vst [vmem:[%s3 + $0xb0] sm:$0xf] %v520
  %649 = vst [vmem:[%s3 + $0xb4] sm:$0xf] %v521
  %650 = vst [vmem:[%s3 + $0xb8] sm:$0xf] %v522
  %651 = vst [vmem:[%s3 + $0xbc] sm:$0xf] %v523
  %652 = vst [vmem:[%s3 + $0xc0] sm:$0xf] %v524
  %653 = vst [vmem:[%s3 + $0xc4] sm:$0xf] %v525
  %654 = vst [vmem:[%s3 + $0xc8] sm:$0xf] %v526
  %655 = vst [vmem:[%s3 + $0xcc] sm:$0xf] %v527
  %656 = vst [vmem:[%s3 + $0xd0] sm:$0xf] %v528
  %657 = vst [vmem:[%s3 + $0xd4] sm:$0xf] %v529
  %658 = vst [vmem:[%s3 + $0xd8] sm:$0xf] %v530
  %659 = vst [vmem:[%s3 + $0xdc] sm:$0xf] %v531
  %660 = vst [vmem:[%s3 + $0xe0] sm:$0xf] %v532
  %661 = vst [vmem:[%s3 + $0xe4] sm:$0xf] %v533
  %662 = vst [vmem:[%s3 + $0xe8] sm:$0xf] %v534
  %663 = vst [vmem:[%s3 + $0xec] sm:$0xf] %v535
  %664 = vst [vmem:[%s3 + $0xf0] sm:$0xf] %v536
  %665 = vst [vmem:[%s3 + $0xf4] sm:$0xf] %v537
  %666 = vst [vmem:[%s3 + $0xf8] sm:$0xf] %v538
  %667 = vst [vmem:[%s3 + $0xfc] sm:$0xf] %v539
  // Predicated region
  $region14: #{con2d_forward.5} parent=0 // pred_check
    _
  $region15: #{con2d_forward.5} parent=0 // pred_check_branch
    %669 = sbr.rel (0) target = $region17
  $region16: #{con2d_forward.5} parent=0 // pred_region
    _
  $region17: #{con2d_forward.5} parent=0 // pred_fallthru
    _
  // Predicated region
  $region18: #{con2d_forward.5} parent=0 // pred_check
    _
  $region19: #{con2d_forward.5} parent=0 // pred_check_branch
    %671 = sbr.rel (0) target = $region21
  $region20: #{con2d_forward.5} parent=0 // pred_region
    _
  $region21: #{con2d_forward.5} parent=0 // pred_fallthru
    _

// kernel: con2d_forward.4
$region0: #{con2d_forward.4}
  #allocation0 [shape = 'u32[]', space=smem, size = 0x4, offset = 0x4, fixed_abs, tag = 'smem constant byte address 0x4 - core index']
  #allocation1 [shape = 'u32[144,128]{1,0:T(1,128)}', space=vmem, size = 0x12000, scoped, tag = 'internal scratch']
  %s0 = inlined_call_operand.vmem [shape: bf16[512,128], index: 0, kind: input, shape index: {}]
  %s1 = inlined_call_operand.vmem [shape: bf16[128,128], index: 1, kind: input, shape index: {}]
  %s2 = inlined_call_operand.vmem [shape: f32[1,128], index: 2, kind: input, shape index: {}]
  %s3 = inlined_call_operand.vmem [shape: bf16[512,128], index: 3, kind: output, shape index: {0}]
  %s4 = inlined_call_operand.vmem [shape: f32[2,1,128], index: 4, kind: output, shape index: {1}]
  %s5 = inlined_call_operand.vmem [shape: f32[2,1,128], index: 5, kind: output, shape index: {2}]
  %6 = xla_tuple %s3, %s4, %s5
  %s7 = sld [smem:[#allocation0]]
  $region61: #{con2d_forward.4} parent=0
    _
  %s9 = ssub.s32 1, %s7
  %s10 = scalar_select 0, %s9, %s7
  loop: start=0, step=1, limit=4
  $region2: #{con2d_forward.4} parent=0 // loop_pre_header
    _
  $region3: #{con2d_forward.4} parent=0 // loop_header
    %s12 = sphi 0, %s16
    %p13 = scmp.ge.s32.totalorder %s12, 4
    %s19 = sphi 0, %s38
    %s20 = sphi 0, %s34
    %s21 = sphi 0, %s30
    %s22 = sphi 0, %s19
    %s23 = sphi 0, %s20
    %s24 = sphi 0, %s21
    %s25 = sphi 0, %s22
    %s26 = sphi 0, %s23
    %s27 = sphi 0, %s24
    %s43 = sphi 0, %s45
    %s46 = sphi 0, %s43
    %s47 = sphi 0, %s46
    %s63 = sphi 0, %s47
    %s71 = sphi 0, %s73
    %s74 = sphi 0, %s71
    %s75 = sphi 0, %s74
    %s91 = sphi 0, %s75
    %s97 = sphi 0, %s99
    %s100 = sphi 0, %s97
    %s101 = sphi 0, %s100
    %s117 = sphi 0, %s101
    %s125 = sphi 0, %s127
    %s128 = sphi 0, %s125
    %s129 = sphi 0, %s128
    %s145 = sphi 0, %s129
    %s153 = sphi 0, %s155
    %s156 = sphi 0, %s153
    %s157 = sphi 0, %s156
    %s173 = sphi 0, %s157
    %s181 = sphi 0, %s183
    %s184 = sphi 0, %s181
    %s185 = sphi 0, %s184
    %s201 = sphi 0, %s185
  $region4: #{con2d_forward.4} parent=0 // loop_header_branch
    %15 = sbr.rel (%p13) target = $region8
  $region5: #{con2d_forward.4} parent=0 // loop_body
    %s17 = ssub.s32 %s12, 1
    %s18 = ssub.s32 %s12, 2
    %s28 = sadd.s32 1, %s21
    %p29 = scmp.ge.s32.totalorder %s28, 1
    %s30 = scalar_select %p29, 0, %s28
    %s31 = sadd.s32 1, %s20
    %s32 = scalar_select %p29, %s31, %s20
    %p33 = scmp.ge.s32.totalorder %s32, 1
    %s34 = scalar_select %p33, 0, %s32
    %s35 = sadd.s32 1, %s19
    %s36 = scalar_select %p33, %s35, %s19
    %p37 = scmp.ge.s32.totalorder %s36, 2
    %s38 = scalar_select %p37, 0, %s36
    %s39 = ssub.s32 %s19, %s38
    %s40 = ssub.s32 %s21, %s30
    %s41 = sor.u32 %s39, %s40
    %p42 = scmp.eq.s32.totalorder %s41, 0
    %s44 = sadd.s32 %s43, 1
    %s45 = scalar_select %p42, %s43, %s44
    %p48 = pneg %p42
    %p49 = scmp.eq.s32.totalorder %s12, 1
    %p50 = por %p48, %p49
    %p51 = scmp.ne.s32.totalorder %s43, %s46
    %p52 = scmp.eq.s32.totalorder %s12, 0
    %p53 = por %p51, %p52
    %p54 = scmp.ne.s32.totalorder %s43, %s46
    %p55 = scmp.eq.s32.totalorder %s17, 1
    %p56 = por %p54, %p55
    %p57 = scmp.ne.s32.totalorder %s46, %s47
    %p58 = scmp.eq.s32.totalorder %s17, 0
    %p59 = por %p57, %p58
    %p60 = scmp.ne.s32.totalorder %s46, %s47
    %p61 = scmp.eq.s32.totalorder %s18, 1
    %p62 = por %p60, %p61
    %p64 = scmp.ne.s32.totalorder %s47, %s63
    %p65 = scmp.eq.s32.totalorder %s18, 0
    %p66 = por %p64, %p65
    %s67 = ssub.s32 %s21, %s30
    %s68 = ssub.s32 %s20, %s34
    %s69 = sor.u32 %s67, %s68
    %p70 = scmp.eq.s32.totalorder %s69, 0
    %s72 = sadd.s32 %s71, 1
    %s73 = scalar_select %p70, %s71, %s72
    %p76 = pneg %p70
    %p77 = scmp.eq.s32.totalorder %s12, 1
    %p78 = por %p76, %p77
    %p79 = scmp.ne.s32.totalorder %s71, %s74
    %p80 = scmp.eq.s32.totalorder %s12, 0
    %p81 = por %p79, %p80
    %p82 = scmp.ne.s32.totalorder %s71, %s74
    %p83 = scmp.eq.s32.totalorder %s17, 1
    %p84 = por %p82, %p83
    %p85 = scmp.ne.s32.totalorder %s74, %s75
    %p86 = scmp.eq.s32.totalorder %s17, 0
    %p87 = por %p85, %p86
    %p88 = scmp.ne.s32.totalorder %s74, %s75
    %p89 = scmp.eq.s32.totalorder %s18, 1
    %p90 = por %p88, %p89
    %p92 = scmp.ne.s32.totalorder %s75, %s91
    %p93 = scmp.eq.s32.totalorder %s18, 0
    %p94 = por %p92, %p93
    %s95 = ssub.s32 %s20, %s34
    %p96 = scmp.eq.s32.totalorder %s95, 0
    %s98 = sadd.s32 %s97, 1
    %s99 = scalar_select %p96, %s97, %s98
    %p102 = pneg %p96
    %p103 = scmp.eq.s32.totalorder %s12, 1
    %p104 = por %p102, %p103
    %p105 = scmp.ne.s32.totalorder %s97, %s100
    %p106 = scmp.eq.s32.totalorder %s12, 0
    %p107 = por %p105, %p106
    %p108 = scmp.ne.s32.totalorder %s97, %s100
    %p109 = scmp.eq.s32.totalorder %s17, 1
    %p110 = por %p108, %p109
    %p111 = scmp.ne.s32.totalorder %s100, %s101
    %p112 = scmp.eq.s32.totalorder %s17, 0
    %p113 = por %p111, %p112
    %p114 = scmp.ne.s32.totalorder %s100, %s101
    %p115 = scmp.eq.s32.totalorder %s18, 1
    %p116 = por %p114, %p115
    %p118 = scmp.ne.s32.totalorder %s101, %s117
    %p119 = scmp.eq.s32.totalorder %s18, 0
    %p120 = por %p118, %p119
    %s121 = ssub.s32 %s19, %s38
    %s122 = ssub.s32 %s20, %s34
    %s123 = sor.u32 %s121, %s122
    %p124 = scmp.eq.s32.totalorder %s123, 0
    %s126 = sadd.s32 %s125, 1
    %s127 = scalar_select %p124, %s125, %s126
    %p130 = pneg %p124
    %p131 = scmp.eq.s32.totalorder %s12, 1
    %p132 = por %p130, %p131
    %p133 = scmp.ne.s32.totalorder %s125, %s128
    %p134 = scmp.eq.s32.totalorder %s12, 0
    %p135 = por %p133, %p134
    %p136 = scmp.ne.s32.totalorder %s125, %s128
    %p137 = scmp.eq.s32.totalorder %s17, 1
    %p138 = por %p136, %p137
    %p139 = scmp.ne.s32.totalorder %s128, %s129
    %p140 = scmp.eq.s32.totalorder %s17, 0
    %p141 = por %p139, %p140
    %p142 = scmp.ne.s32.totalorder %s128, %s129
    %p143 = scmp.eq.s32.totalorder %s18, 1
    %p144 = por %p142, %p143
    %p146 = scmp.ne.s32.totalorder %s129, %s145
    %p147 = scmp.eq.s32.totalorder %s18, 0
    %p148 = por %p146, %p147
    %s149 = ssub.s32 %s19, %s38
    %s150 = ssub.s32 %s20, %s34
    %s151 = sor.u32 %s149, %s150
    %p152 = scmp.eq.s32.totalorder %s151, 0
    %s154 = sadd.s32 %s153, 1
    %s155 = scalar_select %p152, %s153, %s154
    %p158 = pneg %p152
    %p159 = scmp.eq.s32.totalorder %s12, 1
    %p160 = por %p158, %p159
    %p161 = scmp.ne.s32.totalorder %s153, %s156
    %p162 = scmp.eq.s32.totalorder %s12, 0
    %p163 = por %p161, %p162
    %p164 = scmp.ne.s32.totalorder %s153, %s156
    %p165 = scmp.eq.s32.totalorder %s17, 1
    %p166 = por %p164, %p165
    %p167 = scmp.ne.s32.totalorder %s156, %s157
    %p168 = scmp.eq.s32.totalorder %s17, 0
    %p169 = por %p167, %p168
    %p170 = scmp.ne.s32.totalorder %s156, %s157
    %p171 = scmp.eq.s32.totalorder %s18, 1
    %p172 = por %p170, %p171
    %p174 = scmp.ne.s32.totalorder %s157, %s173
    %p175 = scmp.eq.s32.totalorder %s18, 0
    %p176 = por %p174, %p175
    %s177 = ssub.s32 %s19, %s38
    %s178 = ssub.s32 %s20, %s34
    %s179 = sor.u32 %s177, %s178
    %p180 = scmp.eq.s32.totalorder %s179, 0
    %s182 = sadd.s32 %s181, 1
    %s183 = scalar_select %p180, %s181, %s182
    %p186 = pneg %p180
    %p187 = scmp.eq.s32.totalorder %s12, 1
    %p188 = por %p186, %p187
    %p189 = scmp.ne.s32.totalorder %s181, %s184
    %p190 = scmp.eq.s32.totalorder %s12, 0
    %p191 = por %p189, %p190
    %p192 = scmp.ne.s32.totalorder %s181, %s184
    %p193 = scmp.eq.s32.totalorder %s17, 1
    %p194 = por %p192, %p193
    %p195 = scmp.ne.s32.totalorder %s184, %s185
    %p196 = scmp.eq.s32.totalorder %s17, 0
    %p197 = por %p195, %p196
    %p198 = scmp.ne.s32.totalorder %s184, %s185
    %p199 = scmp.eq.s32.totalorder %s18, 1
    %p200 = por %p198, %p199
    %p202 = scmp.ne.s32.totalorder %s185, %s201
    %p203 = scmp.eq.s32.totalorder %s18, 0
    %p204 = por %p202, %p203
    %p205 = scmp.le.s32.totalorder 1, %s12
    %p206 = scmp.lt.s32.totalorder %s12, 3
    %p207 = pnand %p205, %p206
    %p208 = pneg %p207
    // Predicated region
    $region9: #{con2d_forward.4} parent=5 // pred_check
      _
    $region10: #{con2d_forward.4} parent=5 // pred_check_branch
      %210 = sbr.rel (%p207) target = $region12
    $region11: #{con2d_forward.4} parent=5 // pred_region
      %s211 = ssub.s32 %s12, 1
      // Predicated region
      $region13: #{con2d_forward.4} parent=11 // pred_check
        %p212 = pneg %p87
      $region14: #{con2d_forward.4} parent=11 // pred_check_branch
        %214 = sbr.rel (%p212) target = $region16
      $region15: #{con2d_forward.4} parent=11 // pred_region
        %s215 = smul.u32 16, %s24
        %p216 = scmp.lt.s32.totalorder %s215, 15
        %s217 = scalar_select %p216, %s215, 15
        %p218 = scmp.lt.s32.totalorder %s23, 0
        %s219 = scalar_select %p218, %s23, 0
        %s220 = sadd.s32 %s219, %s217
        %s221 = smul.addr %s220, 4
        %s222 = scalar_lea.vmem %s1, %s221
        %s223 = smul.u32 16, %s24
      $region16: #{con2d_forward.4} parent=11 // pred_fallthru
        _
      // Predicated region
      $region17: #{con2d_forward.4} parent=11 // pred_check
        %p224 = pneg %p113
      $region18: #{con2d_forward.4} parent=11 // pred_check_branch
        %226 = sbr.rel (%p224) target = $region20
      $region19: #{con2d_forward.4} parent=11 // pred_region
        %p227 = scmp.lt.s32.totalorder %s23, 0
        %s228 = scalar_select %p227, %s23, 0
        %s229 = scalar_lea.vmem %s2, %s228
      $region20: #{con2d_forward.4} parent=11 // pred_fallthru
        _
    $region12: #{con2d_forward.4} parent=5 // pred_fallthru
      _
    %p230 = scmp.lt.s32.totalorder %s12, 2
    // Predicated region
    $region21: #{con2d_forward.4} parent=5 // pred_check
      %p231 = pneg %p230
    $region22: #{con2d_forward.4} parent=5 // pred_check_branch
      %233 = sbr.rel (%p231) target = $region24
    $region23: #{con2d_forward.4} parent=5 // pred_region
      // Predicated region
      $region25: #{con2d_forward.4} parent=23 // pred_check
        %p234 = pneg %p53
      $region26: #{con2d_forward.4} parent=23 // pred_check_branch
        %236 = sbr.rel (%p234) target = $region28
      $region27: #{con2d_forward.4} parent=23 // pred_region
        %s237 = smul.u32 32, %s19
        %p238 = scmp.lt.s32.totalorder %s237, 63
        %s239 = scalar_select %p238, %s237, 63
        %p240 = scmp.lt.s32.totalorder %s21, 0
        %s241 = scalar_select %p240, %s21, 0
        %s242 = sadd.s32 %s241, %s239
        %s243 = smul.addr %s242, 4
        %s244 = scalar_lea.vmem %s0, %s243
        %s245 = smul.u32 32, %s19
      $region28: #{con2d_forward.4} parent=23 // pred_fallthru
        _
    $region24: #{con2d_forward.4} parent=5 // pred_fallthru
      _
    %p246 = scmp.le.s32.totalorder 1, %s12
    %p247 = scmp.lt.s32.totalorder %s12, 3
    %p248 = pnand %p246, %p247
    %p249 = pneg %p248
    // Predicated region
    $region29: #{con2d_forward.4} parent=5 // pred_check
      _
    $region30: #{con2d_forward.4} parent=5 // pred_check_branch
      %251 = sbr.rel (%p248) target = $region32
    $region31: #{con2d_forward.4} parent=5 // pred_region
      %s252 = ssub.s32 %s12, 1
      %s253 = smul.u32 32, %s22
      %p254 = scmp.lt.s32.totalorder %s253, 63
      %s255 = scalar_select %p254, %s253, 63
      %p256 = scmp.lt.s32.totalorder %s24, 0
      %s257 = scalar_select %p256, %s24, 0
      %s258 = sadd.s32 %s257, %s255
      %s259 = smul.addr %s258, 4
      %s260 = scalar_lea.vmem %s0, %s259
      %p261 = pneg %p59
      %p262 = pneg %p56
      %s263 = smul.u32 16, %s24
      %p264 = scmp.lt.s32.totalorder %s263, 15
      %s265 = scalar_select %p264, %s263, 15
      %p266 = scmp.lt.s32.totalorder %s23, 0
      %s267 = scalar_select %p266, %s23, 0
      %s268 = sadd.s32 %s267, %s265
      %s269 = smul.addr %s268, 4
      %s270 = scalar_lea.vmem %s1, %s269
      %p271 = pneg %p87
      %p272 = pneg %p84
      %p273 = scmp.lt.s32.totalorder %s23, 0
      %s274 = scalar_select %p273, %s23, 0
      %s275 = scalar_lea.vmem %s2, %s274
      %p276 = pneg %p113
      %p277 = pneg %p110
      %p278 = pneg %p141
      %p279 = pneg %p138
      %s280 = smul.u32 32, %s22
      %p281 = scmp.lt.s32.totalorder %s280, 63
      %s282 = scalar_select %p281, %s280, 63
      %p283 = scmp.lt.s32.totalorder %s23, 0
      %s284 = scalar_select %p283, %s23, 0
      %s285 = sadd.s32 %s284, %s282
      %s286 = smul.addr %s285, 4
      %s287 = scalar_lea.vmem %s3, %s286
      %p288 = pneg %p169
      %p289 = pneg %p166
      %p290 = scmp.lt.s32.totalorder %s22, 1
      %s291 = scalar_select %p290, %s22, 1
      %p292 = scmp.lt.s32.totalorder %s23, 0
      %s293 = scalar_select %p292, %s23, 0
      %s294 = sadd.s32 %s293, %s291
      %s295 = scalar_lea.vmem %s4, %s294
      %p296 = pneg %p197
      %p297 = pneg %p194
      %p298 = scmp.lt.s32.totalorder %s22, 1
      %s299 = scalar_select %p298, %s22, 1
      %p300 = scmp.lt.s32.totalorder %s23, 0
      %s301 = scalar_select %p300, %s23, 0
      %s302 = sadd.s32 %s301, %s299
      %s303 = scalar_lea.vmem %s5, %s302
      %s304 = smul.u32 32, %s22
      %p305 = scmp.lt.s32.totalorder %s304, 63
      %s306 = scalar_select %p305, %s304, 63
      %p307 = scmp.lt.s32.totalorder %s24, 0
      %s308 = scalar_select %p307, %s24, 0
      %s309 = sadd.s32 %s308, %s306
      %s310 = smul.addr %s309, 4
      %s311 = scalar_lea.vmem %s0, %s310
      %s312 = smul.u32 32, %s22
      %s313 = smul.u32 16, %s24
      %p314 = scmp.lt.s32.totalorder %s313, 15
      %s315 = scalar_select %p314, %s313, 15
      %p316 = scmp.lt.s32.totalorder %s23, 0
      %s317 = scalar_select %p316, %s23, 0
      %s318 = sadd.s32 %s317, %s315
      %s319 = smul.addr %s318, 4
      %s320 = scalar_lea.vmem %s1, %s319
      %s321 = smul.u32 16, %s24
      %p322 = scmp.lt.s32.totalorder %s23, 0
      %s323 = scalar_select %p322, %s23, 0
      %s324 = scalar_lea.vmem %s2, %s323
      %s325 = smul.u32 32, %s22
      %p326 = scmp.lt.s32.totalorder %s325, 63
      %s327 = scalar_select %p326, %s325, 63
      %p328 = scmp.lt.s32.totalorder %s23, 0
      %s329 = scalar_select %p328, %s23, 0
      %s330 = sadd.s32 %s329, %s327
      %s331 = smul.addr %s330, 4
      %s332 = scalar_lea.vmem %s3, %s331
      %s333 = smul.u32 32, %s22
      %p334 = scmp.lt.s32.totalorder %s22, 1
      %s335 = scalar_select %p334, %s22, 1
      %p336 = scmp.lt.s32.totalorder %s23, 0
      %s337 = scalar_select %p336, %s23, 0
      %s338 = sadd.s32 %s337, %s335
      %s339 = scalar_lea.vmem %s4, %s338
      %p340 = scmp.lt.s32.totalorder %s22, 1
      %s341 = scalar_select %p340, %s22, 1
      %p342 = scmp.lt.s32.totalorder %s23, 0
      %s343 = scalar_select %p342, %s23, 0
      %s344 = sadd.s32 %s343, %s341
      %s345 = scalar_lea.vmem %s5, %s344
      %v347 = vld [vmem:[%s311] sm:$0xf]
      %v348 = vld [vmem:[%s311 + $0x4] sm:$0xf]
      %v349 = vld [vmem:[%s311 + $0x8] sm:$0xf]
      %v350 = vld [vmem:[%s311 + $0xc] sm:$0xf]
      %v351 = vld [vmem:[%s311 + $0x10] sm:$0xf]
      %v352 = vld [vmem:[%s311 + $0x14] sm:$0xf]
      %v353 = vld [vmem:[%s311 + $0x18] sm:$0xf]
      %v354 = vld [vmem:[%s311 + $0x1c] sm:$0xf]
      %v355 = vld [vmem:[%s311 + $0x20] sm:$0xf]
      %v356 = vld [vmem:[%s311 + $0x24] sm:$0xf]
      %v357 = vld [vmem:[%s311 + $0x28] sm:$0xf]
      %v358 = vld [vmem:[%s311 + $0x2c] sm:$0xf]
      %v359 = vld [vmem:[%s311 + $0x30] sm:$0xf]
      %v360 = vld [vmem:[%s311 + $0x34] sm:$0xf]
      %v361 = vld [vmem:[%s311 + $0x38] sm:$0xf]
      %v362 = vld [vmem:[%s311 + $0x3c] sm:$0xf]
      %v363 = vld [vmem:[%s311 + $0x40] sm:$0xf]
      %v364 = vld [vmem:[%s311 + $0x44] sm:$0xf]
      %v365 = vld [vmem:[%s311 + $0x48] sm:$0xf]
      %v366 = vld [vmem:[%s311 + $0x4c] sm:$0xf]
      %v367 = vld [vmem:[%s311 + $0x50] sm:$0xf]
      %v368 = vld [vmem:[%s311 + $0x54] sm:$0xf]
      %v369 = vld [vmem:[%s311 + $0x58] sm:$0xf]
      %v370 = vld [vmem:[%s311 + $0x5c] sm:$0xf]
      %v371 = vld [vmem:[%s311 + $0x60] sm:$0xf]
      %v372 = vld [vmem:[%s311 + $0x64] sm:$0xf]
      %v373 = vld [vmem:[%s311 + $0x68] sm:$0xf]
      %v374 = vld [vmem:[%s311 + $0x6c] sm:$0xf]
      %v375 = vld [vmem:[%s311 + $0x70] sm:$0xf]
      %v376 = vld [vmem:[%s311 + $0x74] sm:$0xf]
      %v377 = vld [vmem:[%s311 + $0x78] sm:$0xf]
      %v378 = vld [vmem:[%s311 + $0x7c] sm:$0xf]
      %v379 = vld [vmem:[%s320] sm:$0xf]
      %v380 = vld [vmem:[%s320 + $0x4] sm:$0xf]
      %v381 = vld [vmem:[%s320 + $0x8] sm:$0xf]
      %v382 = vld [vmem:[%s320 + $0xc] sm:$0xf]
      %v383 = vld [vmem:[%s320 + $0x10] sm:$0xf]
      %v384 = vld [vmem:[%s320 + $0x14] sm:$0xf]
      %v385 = vld [vmem:[%s320 + $0x18] sm:$0xf]
      %v386 = vld [vmem:[%s320 + $0x1c] sm:$0xf]
      %v387 = vld [vmem:[%s320 + $0x20] sm:$0xf]
      %v388 = vld [vmem:[%s320 + $0x24] sm:$0xf]
      %v389 = vld [vmem:[%s320 + $0x28] sm:$0xf]
      %v390 = vld [vmem:[%s320 + $0x2c] sm:$0xf]
      %v391 = vld [vmem:[%s320 + $0x30] sm:$0xf]
      %v392 = vld [vmem:[%s320 + $0x34] sm:$0xf]
      %v393 = vld [vmem:[%s320 + $0x38] sm:$0xf]
      %v394 = vld [vmem:[%s320 + $0x3c] sm:$0xf]
      %v395 = vld [vmem:[%s324] sm:$0x1]
      %v397 = vlaneseq
      %v398 = vshrl.u32 %v397, 7
      %v399 = vsub.s32 0, %v398
      %v400 = vrot.slane %v395, %v399
      %v434 = vunpack.c.l.b16 %v347
      %v435 = vunpack.c.l.b16 %v348
      %v436 = vunpack.c.l.b16 %v349
      %v437 = vunpack.c.l.b16 %v350
      %v438 = vunpack.c.l.b16 %v351
      %v439 = vunpack.c.l.b16 %v352
      %v440 = vunpack.c.l.b16 %v353
      %v441 = vunpack.c.l.b16 %v354
      %v442 = vunpack.c.l.b16 %v355
      %v443 = vunpack.c.l.b16 %v356
      %v444 = vunpack.c.l.b16 %v357
      %v445 = vunpack.c.l.b16 %v358
      %v446 = vunpack.c.l.b16 %v359
      %v447 = vunpack.c.l.b16 %v360
      %v448 = vunpack.c.l.b16 %v361
      %v449 = vunpack.c.l.b16 %v362
      %v450 = vunpack.c.l.b16 %v363
      %v451 = vunpack.c.l.b16 %v364
      %v452 = vunpack.c.l.b16 %v365
      %v453 = vunpack.c.l.b16 %v366
      %v454 = vunpack.c.l.b16 %v367
      %v455 = vunpack.c.l.b16 %v368
      %v456 = vunpack.c.l.b16 %v369
      %v457 = vunpack.c.l.b16 %v370
      %v458 = vunpack.c.l.b16 %v371
      %v459 = vunpack.c.l.b16 %v372
      %v460 = vunpack.c.l.b16 %v373
      %v461 = vunpack.c.l.b16 %v374
      %v462 = vunpack.c.l.b16 %v375
      %v463 = vunpack.c.l.b16 %v376
      %v464 = vunpack.c.l.b16 %v377
      %v465 = vunpack.c.l.b16 %v378
      %v466 = vpack.c.b16 %v435, %v434
      %v467 = vpack.c.b16 %v437, %v436
      %v468 = vpack.c.b16 %v439, %v438
      %v469 = vpack.c.b16 %v441, %v440
      %v470 = vpack.c.b16 %v443, %v442
      %v471 = vpack.c.b16 %v445, %v444
      %v472 = vpack.c.b16 %v447, %v446
      %v473 = vpack.c.b16 %v449, %v448
      %v474 = vpack.c.b16 %v451, %v450
      %v475 = vpack.c.b16 %v453, %v452
      %v476 = vpack.c.b16 %v455, %v454
      %v477 = vpack.c.b16 %v457, %v456
      %v478 = vpack.c.b16 %v459, %v458
      %v479 = vpack.c.b16 %v461, %v460
      %v480 = vpack.c.b16 %v463, %v462
      %v481 = vpack.c.b16 %v465, %v464
      %v514 = vunpack.c.l.b16 %v379
      %v515 = vunpack.c.l.b16 %v380
      %v516 = vunpack.c.l.b16 %v381
      %v517 = vunpack.c.l.b16 %v382
      %v518 = vunpack.c.l.b16 %v383
      %v519 = vunpack.c.l.b16 %v384
      %v520 = vunpack.c.l.b16 %v385
      %v521 = vunpack.c.l.b16 %v386
      %v522 = vunpack.c.l.b16 %v387
      %v523 = vunpack.c.l.b16 %v388
      %v524 = vunpack.c.l.b16 %v389
      %v525 = vunpack.c.l.b16 %v390
      %v526 = vunpack.c.l.b16 %v391
      %v527 = vunpack.c.l.b16 %v392
      %v528 = vunpack.c.l.b16 %v393
      %v529 = vunpack.c.l.b16 %v394
      %v530 = vpack.c.b16 %v515, %v514
      %v531 = vpack.c.b16 %v517, %v516
      %v532 = vpack.c.b16 %v519, %v518
      %v533 = vpack.c.b16 %v521, %v520
      %v534 = vpack.c.b16 %v523, %v522
      %v535 = vpack.c.b16 %v525, %v524
      %v536 = vpack.c.b16 %v527, %v526
      %v537 = vpack.c.b16 %v529, %v528
      %546 = vmatprep.subr.bf16.mxu0 0
      %547 = vmatpush1.bf16.msra.mxu0 %v537
      %548 = vmatprep.subr.bf16.mxu0 0
      %549 = vmatpush1.bf16.msra.mxu0 %v536
      %550 = vmatprep.subr.bf16.mxu0 0
      %551 = vmatpush1.bf16.msra.mxu0 %v535
      %552 = vmatprep.subr.bf16.mxu0 0
      %553 = vmatpush1.bf16.msra.mxu0 %v534
      %554 = vmatprep.subr.bf16.mxu0 0
      %555 = vmatpush1.bf16.msra.mxu0 %v533
      %556 = vmatprep.subr.bf16.mxu0 0
      %557 = vmatpush1.bf16.msra.mxu0 %v532
      %558 = vmatprep.subr.bf16.mxu0 0
      %559 = vmatpush1.bf16.msra.mxu0 %v531
      %560 = vmatprep.subr.bf16.mxu0 0
      %561 = vmatpush1.bf16.msra.mxu0 %v530
      %562 = vmatprep.subr.bf16.mxu0 0
      %563 = vmatpush2.bf16.msra.mxu0 0
      %564 = vmatprep.subr.bf16.mxu0 0
      %565 = vmatpush2.bf16.msra.mxu0 0
      %566 = vmatprep.subr.bf16.mxu0 0
      %567 = vmatpush2.bf16.msra.mxu0 0
      %568 = vmatprep.subr.bf16.mxu0 0
      %569 = vmatpush2.bf16.msra.mxu0 0
      %570 = vmatprep.subr.bf16.mxu0 0
      %571 = vmatpush2.bf16.msra.mxu0 0
      %572 = vmatprep.subr.bf16.mxu0 0
      %573 = vmatpush2.bf16.msra.mxu0 0
      %574 = vmatprep.subr.bf16.mxu0 0
      %575 = vmatpush2.bf16.msra.mxu0 0
      %576 = vmatprep.subr.bf16.mxu0 0
      %577 = vmatpush2.bf16.msra.mxu0 0
      %578 = vmatprep.mubr.bf16.mxu0 0
      %579 = vmatmul.mubr.bf16.gmra.mxu0 %v466
      %v580 = vpop.f32.mrf.mxu0
      %v581 = vadd.f32 %v400, %v580
      %v582 = vpop.f32.mrf.mxu0
      %v583 = vpop.f32.mrf.mxu0
      %v584 = vadd.f32 %v400, %v583
      %v585 = vpop.f32.mrf.mxu0
      %586 = vmatprep.mubr.bf16.mxu0 0
      %587 = vmatmul.mubr.bf16.gmra.mxu0 %v467
      %v588 = vpop.f32.mrf.mxu0
      %v589 = vadd.f32 %v400, %v588
      %v590 = vpop.f32.mrf.mxu0
      %v591 = vpop.f32.mrf.mxu0
      %v592 = vadd.f32 %v400, %v591
      %v593 = vpop.f32.mrf.mxu0
      %594 = vmatprep.mubr.bf16.mxu0 0
      %595 = vmatmul.mubr.bf16.gmra.mxu0 %v468
      %v596 = vpop.f32.mrf.mxu0
      %v597 = vadd.f32 %v400, %v596
      %v598 = vpop.f32.mrf.mxu0
      %v599 = vpop.f32.mrf.mxu0
      %v600 = vadd.f32 %v400, %v599
      %v601 = vpop.f32.mrf.mxu0
      %602 = vmatprep.mubr.bf16.mxu0 0
      %603 = vmatmul.mubr.bf16.gmra.mxu0 %v469
      %v604 = vpop.f32.mrf.mxu0
      %v605 = vadd.f32 %v400, %v604
      %v606 = vpop.f32.mrf.mxu0
      %v607 = vpop.f32.mrf.mxu0
      %v608 = vadd.f32 %v400, %v607
      %v609 = vpop.f32.mrf.mxu0
      %610 = vmatprep.mubr.bf16.mxu0 0
      %611 = vmatmul.mubr.bf16.gmra.mxu0 %v470
      %v612 = vpop.f32.mrf.mxu0
      %v613 = vadd.f32 %v400, %v612
      %v614 = vpop.f32.mrf.mxu0
      %v615 = vpop.f32.mrf.mxu0
      %v616 = vadd.f32 %v400, %v615
      %v617 = vpop.f32.mrf.mxu0
      %618 = vmatprep.mubr.bf16.mxu0 0
      %619 = vmatmul.mubr.bf16.gmra.mxu0 %v471
      %v620 = vpop.f32.mrf.mxu0
      %v621 = vadd.f32 %v400, %v620
      %v622 = vpop.f32.mrf.mxu0
      %v623 = vpop.f32.mrf.mxu0
      %v624 = vadd.f32 %v400, %v623
      %v625 = vpop.f32.mrf.mxu0
      %626 = vmatprep.mubr.bf16.mxu0 0
      %627 = vmatmul.mubr.bf16.gmra.mxu0 %v472
      %v628 = vpop.f32.mrf.mxu0
      %v629 = vadd.f32 %v400, %v628
      %v630 = vpop.f32.mrf.mxu0
      %v631 = vpop.f32.mrf.mxu0
      %v632 = vadd.f32 %v400, %v631
      %v633 = vpop.f32.mrf.mxu0
      %634 = vmatprep.mubr.bf16.mxu0 0
      %635 = vmatmul.mubr.bf16.gmra.mxu0 %v473
      %v636 = vpop.f32.mrf.mxu0
      %v637 = vadd.f32 %v400, %v636
      %v638 = vpop.f32.mrf.mxu0
      %v639 = vpop.f32.mrf.mxu0
      %v640 = vadd.f32 %v400, %v639
      %v641 = vpop.f32.mrf.mxu0
      %642 = vmatprep.mubr.bf16.mxu0 0
      %643 = vmatmul.mubr.bf16.gmra.mxu0 %v474
      %v644 = vpop.f32.mrf.mxu0
      %v645 = vadd.f32 %v400, %v644
      %v646 = vpop.f32.mrf.mxu0
      %v647 = vpop.f32.mrf.mxu0
      %v648 = vadd.f32 %v400, %v647
      %v649 = vpop.f32.mrf.mxu0
      %650 = vmatprep.mubr.bf16.mxu0 0
      %651 = vmatmul.mubr.bf16.gmra.mxu0 %v475
      %v652 = vpop.f32.mrf.mxu0
      %v653 = vadd.f32 %v400, %v652
      %v654 = vpop.f32.mrf.mxu0
      %v655 = vpop.f32.mrf.mxu0
      %v656 = vadd.f32 %v400, %v655
      %v657 = vpop.f32.mrf.mxu0
      %658 = vmatprep.mubr.bf16.mxu0 0
      %659 = vmatmul.mubr.bf16.gmra.mxu0 %v476
      %v660 = vpop.f32.mrf.mxu0
      %v661 = vadd.f32 %v400, %v660
      %v662 = vpop.f32.mrf.mxu0
      %v663 = vpop.f32.mrf.mxu0
      %v664 = vadd.f32 %v400, %v663
      %v665 = vpop.f32.mrf.mxu0
      %666 = vmatprep.mubr.bf16.mxu0 0
      %667 = vmatmul.mubr.bf16.gmra.mxu0 %v477
      %v668 = vpop.f32.mrf.mxu0
      %v669 = vadd.f32 %v400, %v668
      %v670 = vpop.f32.mrf.mxu0
      %v671 = vpop.f32.mrf.mxu0
      %v672 = vadd.f32 %v400, %v671
      %v673 = vpop.f32.mrf.mxu0
      %674 = vmatprep.mubr.bf16.mxu0 0
      %675 = vmatmul.mubr.bf16.gmra.mxu0 %v478
      %v676 = vpop.f32.mrf.mxu0
      %v677 = vadd.f32 %v400, %v676
      %v678 = vpop.f32.mrf.mxu0
      %v679 = vpop.f32.mrf.mxu0
      %v680 = vadd.f32 %v400, %v679
      %v681 = vpop.f32.mrf.mxu0
      %682 = vmatprep.mubr.bf16.mxu0 0
      %683 = vmatmul.mubr.bf16.gmra.mxu0 %v479
      %v684 = vpop.f32.mrf.mxu0
      %v685 = vadd.f32 %v400, %v684
      %v686 = vpop.f32.mrf.mxu0
      %v687 = vpop.f32.mrf.mxu0
      %v688 = vadd.f32 %v400, %v687
      %v689 = vpop.f32.mrf.mxu0
      %690 = vmatprep.mubr.bf16.mxu0 0
      %691 = vmatmul.mubr.bf16.gmra.mxu0 %v480
      %v692 = vpop.f32.mrf.mxu0
      %v693 = vadd.f32 %v400, %v692
      %v694 = vpop.f32.mrf.mxu0
      %v695 = vpop.f32.mrf.mxu0
      %v696 = vadd.f32 %v400, %v695
      %v697 = vpop.f32.mrf.mxu0
      %698 = vmatprep.mubr.bf16.mxu0 0
      %699 = vmatmul.mubr.bf16.gmra.mxu0 %v481
      %v700 = vpop.f32.mrf.mxu0
      %v701 = vadd.f32 %v400, %v700
      %v702 = vpop.f32.mrf.mxu0
      %v703 = vpop.f32.mrf.mxu0
      %v704 = vadd.f32 %v400, %v703
      %v705 = vpop.f32.mrf.mxu0
      %706 = vdwg.mxu0
      %v707 = vadd.f32 %v581, %v584
      %v708 = vadd.f32 %v707, %v589
      %v709 = vadd.f32 %v708, %v592
      %v710 = vadd.f32 %v709, %v597
      %v711 = vadd.f32 %v710, %v600
      %v712 = vadd.f32 %v711, %v605
      %v713 = vadd.f32 %v712, %v608
      %v714 = vadd.f32 %v713, %v613
      %v715 = vadd.f32 %v714, %v616
      %v716 = vadd.f32 %v715, %v621
      %v717 = vadd.f32 %v716, %v624
      %v718 = vadd.f32 %v717, %v629
      %v719 = vadd.f32 %v718, %v632
      %v720 = vadd.f32 %v719, %v637
      %v721 = vadd.f32 %v720, %v640
      %v722 = vadd.f32 %v721, %v645
      %v723 = vadd.f32 %v722, %v648
      %v724 = vadd.f32 %v723, %v653
      %v725 = vadd.f32 %v724, %v656
      %v726 = vadd.f32 %v725, %v661
      %v727 = vadd.f32 %v726, %v664
      %v728 = vadd.f32 %v727, %v669
      %v729 = vadd.f32 %v728, %v672
      %v730 = vadd.f32 %v729, %v677
      %v731 = vadd.f32 %v730, %v680
      %v732 = vadd.f32 %v731, %v685
      %v733 = vadd.f32 %v732, %v688
      %v734 = vadd.f32 %v733, %v693
      %v735 = vadd.f32 %v734, %v696
      %v736 = vadd.f32 %v735, %v701
      %v737 = vadd.f32 %v736, %v704
      %v738 = vrot.slane %v737, 4
      %v739 = vadd.f32 %v737, %v738
      %v740 = vrot.slane %v739, 2
      %v741 = vadd.f32 %v739, %v740
      %v742 = vrot.slane %v741, 1
      %v743 = vadd.f32 %v741, %v742
      %744 = vst [vmem:[%s339] sm:$0x1] %v743
      %v745 = vmul.f32 %v581, %v581
      %v746 = vmul.f32 %v584, %v584
      %v747 = vmul.f32 %v589, %v589
      %v748 = vmul.f32 %v592, %v592
      %v749 = vmul.f32 %v597, %v597
      %v750 = vmul.f32 %v600, %v600
      %v751 = vmul.f32 %v605, %v605
      %v752 = vmul.f32 %v608, %v608
      %v753 = vmul.f32 %v613, %v613
      %v754 = vmul.f32 %v616, %v616
      %v755 = vmul.f32 %v621, %v621
      %v756 = vmul.f32 %v624, %v624
      %v757 = vmul.f32 %v629, %v629
      %v758 = vmul.f32 %v632, %v632
      %v759 = vmul.f32 %v637, %v637
      %v760 = vmul.f32 %v640, %v640
      %v761 = vmul.f32 %v645, %v645
      %v762 = vmul.f32 %v648, %v648
      %v763 = vmul.f32 %v653, %v653
      %v764 = vmul.f32 %v656, %v656
      %v765 = vmul.f32 %v661, %v661
      %v766 = vmul.f32 %v664, %v664
      %v767 = vmul.f32 %v669, %v669
      %v768 = vmul.f32 %v672, %v672
      %v769 = vmul.f32 %v677, %v677
      %v770 = vmul.f32 %v680, %v680
      %v771 = vmul.f32 %v685, %v685
      %v772 = vmul.f32 %v688, %v688
      %v773 = vmul.f32 %v693, %v693
      %v774 = vmul.f32 %v696, %v696
      %v775 = vmul.f32 %v701, %v701
      %v776 = vmul.f32 %v704, %v704
      %v777 = vadd.f32 %v745, %v746
      %v778 = vadd.f32 %v777, %v747
      %v779 = vadd.f32 %v778, %v748
      %v780 = vadd.f32 %v779, %v749
      %v781 = vadd.f32 %v780, %v750
      %v782 = vadd.f32 %v781, %v751
      %v783 = vadd.f32 %v782, %v752
      %v784 = vadd.f32 %v783, %v753
      %v785 = vadd.f32 %v784, %v754
      %v786 = vadd.f32 %v785, %v755
      %v787 = vadd.f32 %v786, %v756
      %v788 = vadd.f32 %v787, %v757
      %v789 = vadd.f32 %v788, %v758
      %v790 = vadd.f32 %v789, %v759
      %v791 = vadd.f32 %v790, %v760
      %v792 = vadd.f32 %v791, %v761
      %v793 = vadd.f32 %v792, %v762
      %v794 = vadd.f32 %v793, %v763
      %v795 = vadd.f32 %v794, %v764
      %v796 = vadd.f32 %v795, %v765
      %v797 = vadd.f32 %v796, %v766
      %v798 = vadd.f32 %v797, %v767
      %v799 = vadd.f32 %v798, %v768
      %v800 = vadd.f32 %v799, %v769
      %v801 = vadd.f32 %v800, %v770
      %v802 = vadd.f32 %v801, %v771
      %v803 = vadd.f32 %v802, %v772
      %v804 = vadd.f32 %v803, %v773
      %v805 = vadd.f32 %v804, %v774
      %v806 = vadd.f32 %v805, %v775
      %v807 = vadd.f32 %v806, %v776
      %v808 = vrot.slane %v807, 4
      %v809 = vadd.f32 %v807, %v808
      %v810 = vrot.slane %v809, 2
      %v811 = vadd.f32 %v809, %v810
      %v812 = vrot.slane %v811, 1
      %v813 = vadd.f32 %v811, %v812
      %814 = vst [vmem:[%s345] sm:$0x1] %v813
      %v815 = vpack.c.bf16 %v584, %v581
      %v816 = vpack.c.bf16 %v592, %v589
      %v817 = vpack.c.bf16 %v600, %v597
      %v818 = vpack.c.bf16 %v608, %v605
      %v819 = vpack.c.bf16 %v616, %v613
      %v820 = vpack.c.bf16 %v624, %v621
      %v821 = vpack.c.bf16 %v632, %v629
      %v822 = vpack.c.bf16 %v640, %v637
      %v823 = vpack.c.bf16 %v648, %v645
      %v824 = vpack.c.bf16 %v656, %v653
      %v825 = vpack.c.bf16 %v664, %v661
      %v826 = vpack.c.bf16 %v672, %v669
      %v827 = vpack.c.bf16 %v680, %v677
      %v828 = vpack.c.bf16 %v688, %v685
      %v829 = vpack.c.bf16 %v696, %v693
      %v830 = vpack.c.bf16 %v704, %v701
      %v847 = vunpack.c.l.b16 %v815
      %v848 = vunpack.c.h.b16 %v815
      %v849 = vunpack.c.l.b16 %v816
      %v850 = vunpack.c.h.b16 %v816
      %v851 = vunpack.c.l.b16 %v817
      %v852 = vunpack.c.h.b16 %v817
      %v853 = vunpack.c.l.b16 %v818
      %v854 = vunpack.c.h.b16 %v818
      %v855 = vunpack.c.l.b16 %v819
      %v856 = vunpack.c.h.b16 %v819
      %v857 = vunpack.c.l.b16 %v820
      %v858 = vunpack.c.h.b16 %v820
      %v859 = vunpack.c.l.b16 %v821
      %v860 = vunpack.c.h.b16 %v821
      %v861 = vunpack.c.l.b16 %v822
      %v862 = vunpack.c.h.b16 %v822
      %v863 = vunpack.c.l.b16 %v823
      %v864 = vunpack.c.h.b16 %v823
      %v865 = vunpack.c.l.b16 %v824
      %v866 = vunpack.c.h.b16 %v824
      %v867 = vunpack.c.l.b16 %v825
      %v868 = vunpack.c.h.b16 %v825
      %v869 = vunpack.c.l.b16 %v826
      %v870 = vunpack.c.h.b16 %v826
      %v871 = vunpack.c.l.b16 %v827
      %v872 = vunpack.c.h.b16 %v827
      %v873 = vunpack.c.l.b16 %v828
      %v874 = vunpack.c.h.b16 %v828
      %v875 = vunpack.c.l.b16 %v829
      %v876 = vunpack.c.h.b16 %v829
      %v877 = vunpack.c.l.b16 %v830
      %v878 = vunpack.c.h.b16 %v830
      %v879 = vpack.c.b16 %v847, %v847
      %v880 = vpack.c.b16 %v848, %v848
      %v881 = vpack.c.b16 %v849, %v849
      %v882 = vpack.c.b16 %v850, %v850
      %v883 = vpack.c.b16 %v851, %v851
      %v884 = vpack.c.b16 %v852, %v852
      %v885 = vpack.c.b16 %v853, %v853
      %v886 = vpack.c.b16 %v854, %v854
      %v887 = vpack.c.b16 %v855, %v855
      %v888 = vpack.c.b16 %v856, %v856
      %v889 = vpack.c.b16 %v857, %v857
      %v890 = vpack.c.b16 %v858, %v858
      %v891 = vpack.c.b16 %v859, %v859
      %v892 = vpack.c.b16 %v860, %v860
      %v893 = vpack.c.b16 %v861, %v861
      %v894 = vpack.c.b16 %v862, %v862
      %v895 = vpack.c.b16 %v863, %v863
      %v896 = vpack.c.b16 %v864, %v864
      %v897 = vpack.c.b16 %v865, %v865
      %v898 = vpack.c.b16 %v866, %v866
      %v899 = vpack.c.b16 %v867, %v867
      %v900 = vpack.c.b16 %v868, %v868
      %v901 = vpack.c.b16 %v869, %v869
      %v902 = vpack.c.b16 %v870, %v870
      %v903 = vpack.c.b16 %v871, %v871
      %v904 = vpack.c.b16 %v872, %v872
      %v905 = vpack.c.b16 %v873, %v873
      %v906 = vpack.c.b16 %v874, %v874
      %v907 = vpack.c.b16 %v875, %v875
      %v908 = vpack.c.b16 %v876, %v876
      %v909 = vpack.c.b16 %v877, %v877
      %v910 = vpack.c.b16 %v878, %v878
      %943 = vst [vmem:[%s332] sm:$0xf] %v879
      %944 = vst [vmem:[%s332 + $0x4] sm:$0xf] %v880
      %945 = vst [vmem:[%s332 + $0x8] sm:$0xf] %v881
      %946 = vst [vmem:[%s332 + $0xc] sm:$0xf] %v882
      %947 = vst [vmem:[%s332 + $0x10] sm:$0xf] %v883
      %948 = vst [vmem:[%s332 + $0x14] sm:$0xf] %v884
      %949 = vst [vmem:[%s332 + $0x18] sm:$0xf] %v885
      %950 = vst [vmem:[%s332 + $0x1c] sm:$0xf] %v886
      %951 = vst [vmem:[%s332 + $0x20] sm:$0xf] %v887
      %952 = vst [vmem:[%s332 + $0x24] sm:$0xf] %v888
      %953 = vst [vmem:[%s332 + $0x28] sm:$0xf] %v889
      %954 = vst [vmem:[%s332 + $0x2c] sm:$0xf] %v890
      %955 = vst [vmem:[%s332 + $0x30] sm:$0xf] %v891
      %956 = vst [vmem:[%s332 + $0x34] sm:$0xf] %v892
      %957 = vst [vmem:[%s332 + $0x38] sm:$0xf] %v893
      %958 = vst [vmem:[%s332 + $0x3c] sm:$0xf] %v894
      %959 = vst [vmem:[%s332 + $0x40] sm:$0xf] %v895
      %960 = vst [vmem:[%s332 + $0x44] sm:$0xf] %v896
      %961 = vst [vmem:[%s332 + $0x48] sm:$0xf] %v897
      %962 = vst [vmem:[%s332 + $0x4c] sm:$0xf] %v898
      %963 = vst [vmem:[%s332 + $0x50] sm:$0xf] %v899
      %964 = vst [vmem:[%s332 + $0x54] sm:$0xf] %v900
      %965 = vst [vmem:[%s332 + $0x58] sm:$0xf] %v901
      %966 = vst [vmem:[%s332 + $0x5c] sm:$0xf] %v902
      %967 = vst [vmem:[%s332 + $0x60] sm:$0xf] %v903
      %968 = vst [vmem:[%s332 + $0x64] sm:$0xf] %v904
      %969 = vst [vmem:[%s332 + $0x68] sm:$0xf] %v905
      %970 = vst [vmem:[%s332 + $0x6c] sm:$0xf] %v906
      %971 = vst [vmem:[%s332 + $0x70] sm:$0xf] %v907
      %972 = vst [vmem:[%s332 + $0x74] sm:$0xf] %v908
      %973 = vst [vmem:[%s332 + $0x78] sm:$0xf] %v909
      %974 = vst [vmem:[%s332 + $0x7c] sm:$0xf] %v910
      %s975 = smul.u32 32, %s22
      %p976 = scmp.lt.s32.totalorder %s975, 63
      %s977 = scalar_select %p976, %s975, 63
      %p978 = scmp.lt.s32.totalorder %s23, 0
      %s979 = scalar_select %p978, %s23, 0
      %s980 = sadd.s32 %s979, %s977
      %s981 = smul.addr %s980, 4
      %s982 = scalar_lea.vmem %s3, %s981
      %p983 = scmp.lt.s32.totalorder %s22, 1
      %s984 = scalar_select %p983, %s22, 1
      %p985 = scmp.lt.s32.totalorder %s23, 0
      %s986 = scalar_select %p985, %s23, 0
      %s987 = sadd.s32 %s986, %s984
      %s988 = scalar_lea.vmem %s4, %s987
      %p989 = scmp.lt.s32.totalorder %s22, 1
      %s990 = scalar_select %p989, %s22, 1
      %p991 = scmp.lt.s32.totalorder %s23, 0
      %s992 = scalar_select %p991, %s23, 0
      %s993 = sadd.s32 %s992, %s990
      %s994 = scalar_lea.vmem %s5, %s993
      // Predicated region
      $region33: #{con2d_forward.4} parent=31 // pred_check
        %p995 = pneg %p138
      $region34: #{con2d_forward.4} parent=31 // pred_check_branch
        %997 = sbr.rel (%p995) target = $region36
      $region35: #{con2d_forward.4} parent=31 // pred_region
        %s998 = smul.u32 32, %s22
      $region36: #{con2d_forward.4} parent=31 // pred_fallthru
        _
      // Predicated region
      $region37: #{con2d_forward.4} parent=31 // pred_check
        %p999 = pneg %p166
      $region38: #{con2d_forward.4} parent=31 // pred_check_branch
        %1001 = sbr.rel (%p999) target = $region40
      $region39: #{con2d_forward.4} parent=31 // pred_region
        _
      $region40: #{con2d_forward.4} parent=31 // pred_fallthru
        _
      // Predicated region
      $region41: #{con2d_forward.4} parent=31 // pred_check
        %p1002 = pneg %p194
      $region42: #{con2d_forward.4} parent=31 // pred_check_branch
        %1004 = sbr.rel (%p1002) target = $region44
      $region43: #{con2d_forward.4} parent=31 // pred_region
        _
      $region44: #{con2d_forward.4} parent=31 // pred_fallthru
        _
    $region32: #{con2d_forward.4} parent=5 // pred_fallthru
      _
    %p1005 = scmp.le.s32.totalorder 2, %s12
    // Predicated region
    $region45: #{con2d_forward.4} parent=5 // pred_check
      %p1006 = pneg %p1005
    $region46: #{con2d_forward.4} parent=5 // pred_check_branch
      %1008 = sbr.rel (%p1006) target = $region48
    $region47: #{con2d_forward.4} parent=5 // pred_region
      %s1009 = ssub.s32 %s12, 2
      // Predicated region
      $region49: #{con2d_forward.4} parent=47 // pred_check
        %p1010 = pneg %p144
      $region50: #{con2d_forward.4} parent=47 // pred_check_branch
        %1012 = sbr.rel (%p1010) target = $region52
      $region51: #{con2d_forward.4} parent=47 // pred_region
        %s1013 = smul.u32 32, %s25
        %p1014 = scmp.lt.s32.totalorder %s1013, 63
        %s1015 = scalar_select %p1014, %s1013, 63
        %p1016 = scmp.lt.s32.totalorder %s26, 0
        %s1017 = scalar_select %p1016, %s26, 0
        %s1018 = sadd.s32 %s1017, %s1015
        %s1019 = smul.addr %s1018, 4
        %s1020 = scalar_lea.vmem %s3, %s1019
      $region52: #{con2d_forward.4} parent=47 // pred_fallthru
        _
      // Predicated region
      $region53: #{con2d_forward.4} parent=47 // pred_check
        %p1021 = pneg %p172
      $region54: #{con2d_forward.4} parent=47 // pred_check_branch
        %1023 = sbr.rel (%p1021) target = $region56
      $region55: #{con2d_forward.4} parent=47 // pred_region
        %p1024 = scmp.lt.s32.totalorder %s25, 1
        %s1025 = scalar_select %p1024, %s25, 1
        %p1026 = scmp.lt.s32.totalorder %s26, 0
        %s1027 = scalar_select %p1026, %s26, 0
        %s1028 = sadd.s32 %s1027, %s1025
        %s1029 = scalar_lea.vmem %s4, %s1028
      $region56: #{con2d_forward.4} parent=47 // pred_fallthru
        _
      // Predicated region
      $region57: #{con2d_forward.4} parent=47 // pred_check
        %p1030 = pneg %p200
      $region58: #{con2d_forward.4} parent=47 // pred_check_branch
        %1032 = sbr.rel (%p1030) target = $region60
      $region59: #{con2d_forward.4} parent=47 // pred_region
        %p1033 = scmp.lt.s32.totalorder %s25, 1
        %s1034 = scalar_select %p1033, %s25, 1
        %p1035 = scmp.lt.s32.totalorder %s26, 0
        %s1036 = scalar_select %p1035, %s26, 0
        %s1037 = sadd.s32 %s1036, %s1034
        %s1038 = scalar_lea.vmem %s5, %s1037
      $region60: #{con2d_forward.4} parent=47 // pred_fallthru
        _
    $region48: #{con2d_forward.4} parent=5 // pred_fallthru
      _
  $region6: #{con2d_forward.4} parent=0 // loop_footer
    %s16 = sadd.s32 1, %s12
  $region7: #{con2d_forward.4} parent=0 // loop_footer_branch
    %11 = sbr.rel target = $region3
  $region8: #{con2d_forward.4} parent=0 // loop_exit
    _

// kernel: con2d_forward.6
$region0: #{con2d_forward.6}
  #allocation0 [shape = 'u32[]', space=smem, size = 0x4, offset = 0x4, fixed_abs, tag = 'smem constant byte address 0x4 - core index']
  #allocation1 [shape = 'u32[144,128]{1,0:T(1,128)}', space=vmem, size = 0x12000, scoped, tag = 'internal scratch']
  %s0 = inlined_call_operand.vmem [shape: bf16[512,640], index: 0, kind: input, shape index: {}]
  %s1 = inlined_call_operand.vmem [shape: bf16[640,128], index: 1, kind: input, shape index: {}]
  %s2 = inlined_call_operand.vmem [shape: f32[1,128], index: 2, kind: input, shape index: {}]
  %s3 = inlined_call_operand.vmem [shape: bf16[512,128], index: 3, kind: output, shape index: {0}]
  %s4 = inlined_call_operand.vmem [shape: f32[2,1,128], index: 4, kind: output, shape index: {1}]
  %s5 = inlined_call_operand.vmem [shape: f32[2,1,128], index: 5, kind: output, shape index: {2}]
  %6 = xla_tuple %s3, %s4, %s5
  %s7 = sld [smem:[#allocation0]]
  $region61: #{con2d_forward.6} parent=0
    _
  %s9 = ssub.s32 1, %s7
  %s10 = scalar_select 0, %s9, %s7
  loop: start=0, step=1, limit=4
  $region2: #{con2d_forward.6} parent=0 // loop_pre_header
    _
  $region3: #{con2d_forward.6} parent=0 // loop_header
    %s12 = sphi 0, %s16
    %p13 = scmp.ge.s32.totalorder %s12, 4
    %s19 = sphi 0, %s38
    %s20 = sphi 0, %s34
    %s21 = sphi 0, %s30
    %s22 = sphi 0, %s19
    %s23 = sphi 0, %s20
    %s24 = sphi 0, %s21
    %s25 = sphi 0, %s22
    %s26 = sphi 0, %s23
    %s27 = sphi 0, %s24
    %s43 = sphi 0, %s45
    %s46 = sphi 0, %s43
    %s47 = sphi 0, %s46
    %s63 = sphi 0, %s47
    %s71 = sphi 0, %s73
    %s74 = sphi 0, %s71
    %s75 = sphi 0, %s74
    %s91 = sphi 0, %s75
    %s97 = sphi 0, %s99
    %s100 = sphi 0, %s97
    %s101 = sphi 0, %s100
    %s117 = sphi 0, %s101
    %s125 = sphi 0, %s127
    %s128 = sphi 0, %s125
    %s129 = sphi 0, %s128
    %s145 = sphi 0, %s129
    %s153 = sphi 0, %s155
    %s156 = sphi 0, %s153
    %s157 = sphi 0, %s156
    %s173 = sphi 0, %s157
    %s181 = sphi 0, %s183
    %s184 = sphi 0, %s181
    %s185 = sphi 0, %s184
    %s201 = sphi 0, %s185
  $region4: #{con2d_forward.6} parent=0 // loop_header_branch
    %15 = sbr.rel (%p13) target = $region8
  $region5: #{con2d_forward.6} parent=0 // loop_body
    %s17 = ssub.s32 %s12, 1
    %s18 = ssub.s32 %s12, 2
    %s28 = sadd.s32 1, %s21
    %p29 = scmp.ge.s32.totalorder %s28, 1
    %s30 = scalar_select %p29, 0, %s28
    %s31 = sadd.s32 1, %s20
    %s32 = scalar_select %p29, %s31, %s20
    %p33 = scmp.ge.s32.totalorder %s32, 1
    %s34 = scalar_select %p33, 0, %s32
    %s35 = sadd.s32 1, %s19
    %s36 = scalar_select %p33, %s35, %s19
    %p37 = scmp.ge.s32.totalorder %s36, 2
    %s38 = scalar_select %p37, 0, %s36
    %s39 = ssub.s32 %s19, %s38
    %s40 = ssub.s32 %s21, %s30
    %s41 = sor.u32 %s39, %s40
    %p42 = scmp.eq.s32.totalorder %s41, 0
    %s44 = sadd.s32 %s43, 1
    %s45 = scalar_select %p42, %s43, %s44
    %p48 = pneg %p42
    %p49 = scmp.eq.s32.totalorder %s12, 1
    %p50 = por %p48, %p49
    %p51 = scmp.ne.s32.totalorder %s43, %s46
    %p52 = scmp.eq.s32.totalorder %s12, 0
    %p53 = por %p51, %p52
    %p54 = scmp.ne.s32.totalorder %s43, %s46
    %p55 = scmp.eq.s32.totalorder %s17, 1
    %p56 = por %p54, %p55
    %p57 = scmp.ne.s32.totalorder %s46, %s47
    %p58 = scmp.eq.s32.totalorder %s17, 0
    %p59 = por %p57, %p58
    %p60 = scmp.ne.s32.totalorder %s46, %s47
    %p61 = scmp.eq.s32.totalorder %s18, 1
    %p62 = por %p60, %p61
    %p64 = scmp.ne.s32.totalorder %s47, %s63
    %p65 = scmp.eq.s32.totalorder %s18, 0
    %p66 = por %p64, %p65
    %s67 = ssub.s32 %s21, %s30
    %s68 = ssub.s32 %s20, %s34
    %s69 = sor.u32 %s67, %s68
    %p70 = scmp.eq.s32.totalorder %s69, 0
    %s72 = sadd.s32 %s71, 1
    %s73 = scalar_select %p70, %s71, %s72
    %p76 = pneg %p70
    %p77 = scmp.eq.s32.totalorder %s12, 1
    %p78 = por %p76, %p77
    %p79 = scmp.ne.s32.totalorder %s71, %s74
    %p80 = scmp.eq.s32.totalorder %s12, 0
    %p81 = por %p79, %p80
    %p82 = scmp.ne.s32.totalorder %s71, %s74
    %p83 = scmp.eq.s32.totalorder %s17, 1
    %p84 = por %p82, %p83
    %p85 = scmp.ne.s32.totalorder %s74, %s75
    %p86 = scmp.eq.s32.totalorder %s17, 0
    %p87 = por %p85, %p86
    %p88 = scmp.ne.s32.totalorder %s74, %s75
    %p89 = scmp.eq.s32.totalorder %s18, 1
    %p90 = por %p88, %p89
    %p92 = scmp.ne.s32.totalorder %s75, %s91
    %p93 = scmp.eq.s32.totalorder %s18, 0
    %p94 = por %p92, %p93
    %s95 = ssub.s32 %s20, %s34
    %p96 = scmp.eq.s32.totalorder %s95, 0
    %s98 = sadd.s32 %s97, 1
    %s99 = scalar_select %p96, %s97, %s98
    %p102 = pneg %p96
    %p103 = scmp.eq.s32.totalorder %s12, 1
    %p104 = por %p102, %p103
    %p105 = scmp.ne.s32.totalorder %s97, %s100
    %p106 = scmp.eq.s32.totalorder %s12, 0
    %p107 = por %p105, %p106
    %p108 = scmp.ne.s32.totalorder %s97, %s100
    %p109 = scmp.eq.s32.totalorder %s17, 1
    %p110 = por %p108, %p109
    %p111 = scmp.ne.s32.totalorder %s100, %s101
    %p112 = scmp.eq.s32.totalorder %s17, 0
    %p113 = por %p111, %p112
    %p114 = scmp.ne.s32.totalorder %s100, %s101
    %p115 = scmp.eq.s32.totalorder %s18, 1
    %p116 = por %p114, %p115
    %p118 = scmp.ne.s32.totalorder %s101, %s117
    %p119 = scmp.eq.s32.totalorder %s18, 0
    %p120 = por %p118, %p119
    %s121 = ssub.s32 %s19, %s38
    %s122 = ssub.s32 %s20, %s34
    %s123 = sor.u32 %s121, %s122
    %p124 = scmp.eq.s32.totalorder %s123, 0
    %s126 = sadd.s32 %s125, 1
    %s127 = scalar_select %p124, %s125, %s126
    %p130 = pneg %p124
    %p131 = scmp.eq.s32.totalorder %s12, 1
    %p132 = por %p130, %p131
    %p133 = scmp.ne.s32.totalorder %s125, %s128
    %p134 = scmp.eq.s32.totalorder %s12, 0
    %p135 = por %p133, %p134
    %p136 = scmp.ne.s32.totalorder %s125, %s128
    %p137 = scmp.eq.s32.totalorder %s17, 1
    %p138 = por %p136, %p137
    %p139 = scmp.ne.s32.totalorder %s128, %s129
    %p140 = scmp.eq.s32.totalorder %s17, 0
    %p141 = por %p139, %p140
    %p142 = scmp.ne.s32.totalorder %s128, %s129
    %p143 = scmp.eq.s32.totalorder %s18, 1
    %p144 = por %p142, %p143
    %p146 = scmp.ne.s32.totalorder %s129, %s145
    %p147 = scmp.eq.s32.totalorder %s18, 0
    %p148 = por %p146, %p147
    %s149 = ssub.s32 %s19, %s38
    %s150 = ssub.s32 %s20, %s34
    %s151 = sor.u32 %s149, %s150
    %p152 = scmp.eq.s32.totalorder %s151, 0
    %s154 = sadd.s32 %s153, 1
    %s155 = scalar_select %p152, %s153, %s154
    %p158 = pneg %p152
    %p159 = scmp.eq.s32.totalorder %s12, 1
    %p160 = por %p158, %p159
    %p161 = scmp.ne.s32.totalorder %s153, %s156
    %p162 = scmp.eq.s32.totalorder %s12, 0
    %p163 = por %p161, %p162
    %p164 = scmp.ne.s32.totalorder %s153, %s156
    %p165 = scmp.eq.s32.totalorder %s17, 1
    %p166 = por %p164, %p165
    %p167 = scmp.ne.s32.totalorder %s156, %s157
    %p168 = scmp.eq.s32.totalorder %s17, 0
    %p169 = por %p167, %p168
    %p170 = scmp.ne.s32.totalorder %s156, %s157
    %p171 = scmp.eq.s32.totalorder %s18, 1
    %p172 = por %p170, %p171
    %p174 = scmp.ne.s32.totalorder %s157, %s173
    %p175 = scmp.eq.s32.totalorder %s18, 0
    %p176 = por %p174, %p175
    %s177 = ssub.s32 %s19, %s38
    %s178 = ssub.s32 %s20, %s34
    %s179 = sor.u32 %s177, %s178
    %p180 = scmp.eq.s32.totalorder %s179, 0
    %s182 = sadd.s32 %s181, 1
    %s183 = scalar_select %p180, %s181, %s182
    %p186 = pneg %p180
    %p187 = scmp.eq.s32.totalorder %s12, 1
    %p188 = por %p186, %p187
    %p189 = scmp.ne.s32.totalorder %s181, %s184
    %p190 = scmp.eq.s32.totalorder %s12, 0
    %p191 = por %p189, %p190
    %p192 = scmp.ne.s32.totalorder %s181, %s184
    %p193 = scmp.eq.s32.totalorder %s17, 1
    %p194 = por %p192, %p193
    %p195 = scmp.ne.s32.totalorder %s184, %s185
    %p196 = scmp.eq.s32.totalorder %s17, 0
    %p197 = por %p195, %p196
    %p198 = scmp.ne.s32.totalorder %s184, %s185
    %p199 = scmp.eq.s32.totalorder %s18, 1
    %p200 = por %p198, %p199
    %p202 = scmp.ne.s32.totalorder %s185, %s201
    %p203 = scmp.eq.s32.totalorder %s18, 0
    %p204 = por %p202, %p203
    %p205 = scmp.le.s32.totalorder 1, %s12
    %p206 = scmp.lt.s32.totalorder %s12, 3
    %p207 = pnand %p205, %p206
    %p208 = pneg %p207
    // Predicated region
    $region9: #{con2d_forward.6} parent=5 // pred_check
      _
    $region10: #{con2d_forward.6} parent=5 // pred_check_branch
      %210 = sbr.rel (%p207) target = $region12
    $region11: #{con2d_forward.6} parent=5 // pred_region
      %s211 = ssub.s32 %s12, 1
      // Predicated region
      $region13: #{con2d_forward.6} parent=11 // pred_check
        %p212 = pneg %p87
      $region14: #{con2d_forward.6} parent=11 // pred_check_branch
        %214 = sbr.rel (%p212) target = $region16
      $region15: #{con2d_forward.6} parent=11 // pred_region
        %s215 = smul.u32 80, %s24
        %p216 = scmp.lt.s32.totalorder %s215, 79
        %s217 = scalar_select %p216, %s215, 79
        %p218 = scmp.lt.s32.totalorder %s23, 0
        %s219 = scalar_select %p218, %s23, 0
        %s220 = sadd.s32 %s219, %s217
        %s221 = smul.addr %s220, 4
        %s222 = scalar_lea.vmem %s1, %s221
        %s223 = smul.u32 80, %s24
      $region16: #{con2d_forward.6} parent=11 // pred_fallthru
        _
      // Predicated region
      $region17: #{con2d_forward.6} parent=11 // pred_check
        %p224 = pneg %p113
      $region18: #{con2d_forward.6} parent=11 // pred_check_branch
        %226 = sbr.rel (%p224) target = $region20
      $region19: #{con2d_forward.6} parent=11 // pred_region
        %p227 = scmp.lt.s32.totalorder %s23, 0
        %s228 = scalar_select %p227, %s23, 0
        %s229 = scalar_lea.vmem %s2, %s228
      $region20: #{con2d_forward.6} parent=11 // pred_fallthru
        _
    $region12: #{con2d_forward.6} parent=5 // pred_fallthru
      _
    %p230 = scmp.lt.s32.totalorder %s12, 2
    // Predicated region
    $region21: #{con2d_forward.6} parent=5 // pred_check
      %p231 = pneg %p230
    $region22: #{con2d_forward.6} parent=5 // pred_check_branch
      %233 = sbr.rel (%p231) target = $region24
    $region23: #{con2d_forward.6} parent=5 // pred_region
      // Predicated region
      $region25: #{con2d_forward.6} parent=23 // pred_check
        %p234 = pneg %p53
      $region26: #{con2d_forward.6} parent=23 // pred_check_branch
        %236 = sbr.rel (%p234) target = $region28
      $region27: #{con2d_forward.6} parent=23 // pred_region
        %s237 = smul.u32 32, %s19
        %s238 = smul.u32 5, %s21
        %p239 = scmp.lt.s32.totalorder %s237, 63
        %s240 = scalar_select %p239, %s237, 63
        %p241 = scmp.lt.s32.totalorder %s238, 4
        %s242 = scalar_select %p241, %s238, 4
        %s243 = smul.addr %s240, 5
        %s244 = sadd.s32 %s242, %s243
        %s245 = smul.addr %s244, 4
        %s246 = scalar_lea.vmem %s0, %s245
        %s247 = smul.u32 32, %s19
        %s248 = smul.u32 5, %s21
      $region28: #{con2d_forward.6} parent=23 // pred_fallthru
        _
    $region24: #{con2d_forward.6} parent=5 // pred_fallthru
      _
    %p249 = scmp.le.s32.totalorder 1, %s12
    %p250 = scmp.lt.s32.totalorder %s12, 3
    %p251 = pnand %p249, %p250
    %p252 = pneg %p251
    // Predicated region
    $region29: #{con2d_forward.6} parent=5 // pred_check
      _
    $region30: #{con2d_forward.6} parent=5 // pred_check_branch
      %254 = sbr.rel (%p251) target = $region32
    $region31: #{con2d_forward.6} parent=5 // pred_region
      %s255 = ssub.s32 %s12, 1
      %s256 = smul.u32 32, %s22
      %s257 = smul.u32 5, %s24
      %p258 = scmp.lt.s32.totalorder %s256, 63
      %s259 = scalar_select %p258, %s256, 63
      %p260 = scmp.lt.s32.totalorder %s257, 4
      %s261 = scalar_select %p260, %s257, 4
      %s262 = smul.addr %s259, 5
      %s263 = sadd.s32 %s261, %s262
      %s264 = smul.addr %s263, 4
      %s265 = scalar_lea.vmem %s0, %s264
      %p266 = pneg %p59
      %p267 = pneg %p56
      %s268 = smul.u32 80, %s24
      %p269 = scmp.lt.s32.totalorder %s268, 79
      %s270 = scalar_select %p269, %s268, 79
      %p271 = scmp.lt.s32.totalorder %s23, 0
      %s272 = scalar_select %p271, %s23, 0
      %s273 = sadd.s32 %s272, %s270
      %s274 = smul.addr %s273, 4
      %s275 = scalar_lea.vmem %s1, %s274
      %p276 = pneg %p87
      %p277 = pneg %p84
      %p278 = scmp.lt.s32.totalorder %s23, 0
      %s279 = scalar_select %p278, %s23, 0
      %s280 = scalar_lea.vmem %s2, %s279
      %p281 = pneg %p113
      %p282 = pneg %p110
      %p283 = pneg %p141
      %p284 = pneg %p138
      %s285 = smul.u32 32, %s22
      %p286 = scmp.lt.s32.totalorder %s285, 63
      %s287 = scalar_select %p286, %s285, 63
      %p288 = scmp.lt.s32.totalorder %s23, 0
      %s289 = scalar_select %p288, %s23, 0
      %s290 = sadd.s32 %s289, %s287
      %s291 = smul.addr %s290, 4
      %s292 = scalar_lea.vmem %s3, %s291
      %p293 = pneg %p169
      %p294 = pneg %p166
      %p295 = scmp.lt.s32.totalorder %s22, 1
      %s296 = scalar_select %p295, %s22, 1
      %p297 = scmp.lt.s32.totalorder %s23, 0
      %s298 = scalar_select %p297, %s23, 0
      %s299 = sadd.s32 %s298, %s296
      %s300 = scalar_lea.vmem %s4, %s299
      %p301 = pneg %p197
      %p302 = pneg %p194
      %p303 = scmp.lt.s32.totalorder %s22, 1
      %s304 = scalar_select %p303, %s22, 1
      %p305 = scmp.lt.s32.totalorder %s23, 0
      %s306 = scalar_select %p305, %s23, 0
      %s307 = sadd.s32 %s306, %s304
      %s308 = scalar_lea.vmem %s5, %s307
      %s309 = smul.u32 32, %s22
      %s310 = smul.u32 5, %s24
      %p311 = scmp.lt.s32.totalorder %s309, 63
      %s312 = scalar_select %p311, %s309, 63
      %p313 = scmp.lt.s32.totalorder %s310, 4
      %s314 = scalar_select %p313, %s310, 4
      %s315 = smul.addr %s312, 5
      %s316 = sadd.s32 %s314, %s315
      %s317 = smul.addr %s316, 4
      %s318 = scalar_lea.vmem %s0, %s317
      %s319 = smul.u32 32, %s22
      %s320 = smul.u32 5, %s24
      %s321 = smul.u32 80, %s24
      %p322 = scmp.lt.s32.totalorder %s321, 79
      %s323 = scalar_select %p322, %s321, 79
      %p324 = scmp.lt.s32.totalorder %s23, 0
      %s325 = scalar_select %p324, %s23, 0
      %s326 = sadd.s32 %s325, %s323
      %s327 = smul.addr %s326, 4
      %s328 = scalar_lea.vmem %s1, %s327
      %s329 = smul.u32 80, %s24
      %p330 = scmp.lt.s32.totalorder %s23, 0
      %s331 = scalar_select %p330, %s23, 0
      %s332 = scalar_lea.vmem %s2, %s331
      %s333 = smul.u32 32, %s22
      %p334 = scmp.lt.s32.totalorder %s333, 63
      %s335 = scalar_select %p334, %s333, 63
      %p336 = scmp.lt.s32.totalorder %s23, 0
      %s337 = scalar_select %p336, %s23, 0
      %s338 = sadd.s32 %s337, %s335
      %s339 = smul.addr %s338, 4
      %s340 = scalar_lea.vmem %s3, %s339
      %s341 = smul.u32 32, %s22
      %p342 = scmp.lt.s32.totalorder %s22, 1
      %s343 = scalar_select %p342, %s22, 1
      %p344 = scmp.lt.s32.totalorder %s23, 0
      %s345 = scalar_select %p344, %s23, 0
      %s346 = sadd.s32 %s345, %s343
      %s347 = scalar_lea.vmem %s4, %s346
      %p348 = scmp.lt.s32.totalorder %s22, 1
      %s349 = scalar_select %p348, %s22, 1
      %p350 = scmp.lt.s32.totalorder %s23, 0
      %s351 = scalar_select %p350, %s23, 0
      %s352 = sadd.s32 %s351, %s349
      %s353 = scalar_lea.vmem %s5, %s352
      %v355 = vld [vmem:[%s318] sm:$0xff]
      %v356 = vld [vmem:[%s318 + $0x8] sm:$0xff]
      %v357 = vld [vmem:[%s318 + $0x10] sm:$0xf]
      %v358 = vld [vmem:[%s318 + $0x14] sm:$0xff]
      %v359 = vld [vmem:[%s318 + $0x1c] sm:$0xff]
      %v360 = vld [vmem:[%s318 + $0x24] sm:$0xf]
      %v361 = vld [vmem:[%s318 + $0x28] sm:$0xff]
      %v362 = vld [vmem:[%s318 + $0x30] sm:$0xff]
      %v363 = vld [vmem:[%s318 + $0x38] sm:$0xf]
      %v364 = vld [vmem:[%s318 + $0x3c] sm:$0xff]
      %v365 = vld [vmem:[%s318 + $0x44] sm:$0xff]
      %v366 = vld [vmem:[%s318 + $0x4c] sm:$0xf]
      %v367 = vld [vmem:[%s318 + $0x50] sm:$0xff]
      %v368 = vld [vmem:[%s318 + $0x58] sm:$0xff]
      %v369 = vld [vmem:[%s318 + $0x60] sm:$0xf]
      %v370 = vld [vmem:[%s318 + $0x64] sm:$0xff]
      %v371 = vld [vmem:[%s318 + $0x6c] sm:$0xff]
      %v372 = vld [vmem:[%s318 + $0x74] sm:$0xf]
      %v373 = vld [vmem:[%s318 + $0x78] sm:$0xff]
      %v374 = vld [vmem:[%s318 + $0x80] sm:$0xff]
      %v375 = vld [vmem:[%s318 + $0x88] sm:$0xf]
      %v376 = vld [vmem:[%s318 + $0x8c] sm:$0xff]
      %v377 = vld [vmem:[%s318 + $0x94] sm:$0xff]
      %v378 = vld [vmem:[%s318 + $0x9c] sm:$0xf]
      %v379 = vld [vmem:[%s318 + $0xa0] sm:$0xff]
      %v380 = vld [vmem:[%s318 + $0xa8] sm:$0xff]
      %v381 = vld [vmem:[%s318 + $0xb0] sm:$0xf]
      %v382 = vld [vmem:[%s318 + $0xb4] sm:$0xff]
      %v383 = vld [vmem:[%s318 + $0xbc] sm:$0xff]
      %v384 = vld [vmem:[%s318 + $0xc4] sm:$0xf]
      %v385 = vld [vmem:[%s318 + $0xc8] sm:$0xff]
      %v386 = vld [vmem:[%s318 + $0xd0] sm:$0xff]
      %v387 = vld [vmem:[%s318 + $0xd8] sm:$0xf]
      %v388 = vld [vmem:[%s318 + $0xdc] sm:$0xff]
      %v389 = vld [vmem:[%s318 + $0xe4] sm:$0xff]
      %v390 = vld [vmem:[%s318 + $0xec] sm:$0xf]
      %v391 = vld [vmem:[%s318 + $0xf0] sm:$0xff]
      %v392 = vld [vmem:[%s318 + $0xf8] sm:$0xff]
      %v393 = vld [vmem:[%s318 + $0x100] sm:$0xf]
      %v394 = vld [vmem:[%s318 + $0x104] sm:$0xff]
      %v395 = vld [vmem:[%s318 + $0x10c] sm:$0xff]
      %v396 = vld [vmem:[%s318 + $0x114] sm:$0xf]
      %v397 = vld [vmem:[%s318 + $0x118] sm:$0xff]
      %v398 = vld [vmem:[%s318 + $0x120] sm:$0xff]
      %v399 = vld [vmem:[%s318 + $0x128] sm:$0xf]
      %v400 = vld [vmem:[%s318 + $0x12c] sm:$0xff]
      %v401 = vld [vmem:[%s318 + $0x134] sm:$0xff]
      %v402 = vld [vmem:[%s318 + $0x13c] sm:$0xf]
      %v403 = vld [vmem:[%s318 + $0x140] sm:$0xff]
      %v404 = vld [vmem:[%s318 + $0x148] sm:$0xff]
      %v405 = vld [vmem:[%s318 + $0x150] sm:$0xf]
      %v406 = vld [vmem:[%s318 + $0x154] sm:$0xff]
      %v407 = vld [vmem:[%s318 + $0x15c] sm:$0xff]
      %v408 = vld [vmem:[%s318 + $0x164] sm:$0xf]
      %v409 = vld [vmem:[%s318 + $0x168] sm:$0xff]
      %v410 = vld [vmem:[%s318 + $0x170] sm:$0xff]
      %v411 = vld [vmem:[%s318 + $0x178] sm:$0xf]
      %v412 = vld [vmem:[%s318 + $0x17c] sm:$0xff]
      %v413 = vld [vmem:[%s318 + $0x184] sm:$0xff]
      %v414 = vld [vmem:[%s318 + $0x18c] sm:$0xf]
      %v415 = vld [vmem:[%s318 + $0x190] sm:$0xff]
      %v416 = vld [vmem:[%s318 + $0x198] sm:$0xff]
      %v417 = vld [vmem:[%s318 + $0x1a0] sm:$0xf]
      %v418 = vld [vmem:[%s318 + $0x1a4] sm:$0xff]
      %v419 = vld [vmem:[%s318 + $0x1ac] sm:$0xff]
      %v420 = vld [vmem:[%s318 + $0x1b4] sm:$0xf]
      %v421 = vld [vmem:[%s318 + $0x1b8] sm:$0xff]
      %v422 = vld [vmem:[%s318 + $0x1c0] sm:$0xff]
      %v423 = vld [vmem:[%s318 + $0x1c8] sm:$0xf]
      %v424 = vld [vmem:[%s318 + $0x1cc] sm:$0xff]
      %v425 = vld [vmem:[%s318 + $0x1d4] sm:$0xff]
      %v426 = vld [vmem:[%s318 + $0x1dc] sm:$0xf]
      %v427 = vld [vmem:[%s318 + $0x1e0] sm:$0xff]
      %v428 = vld [vmem:[%s318 + $0x1e8] sm:$0xff]
      %v429 = vld [vmem:[%s318 + $0x1f0] sm:$0xf]
      %v430 = vld [vmem:[%s318 + $0x1f4] sm:$0xff]
      %v431 = vld [vmem:[%s318 + $0x1fc] sm:$0xff]
      %v432 = vld [vmem:[%s318 + $0x204] sm:$0xf]
      %v433 = vld [vmem:[%s318 + $0x208] sm:$0xff]
      %v434 = vld [vmem:[%s318 + $0x210] sm:$0xff]
      %v435 = vld [vmem:[%s318 + $0x218] sm:$0xf]
      %v436 = vld [vmem:[%s318 + $0x21c] sm:$0xff]
      %v437 = vld [vmem:[%s318 + $0x224] sm:$0xff]
      %v438 = vld [vmem:[%s318 + $0x22c] sm:$0xf]
      %v439 = vld [vmem:[%s318 + $0x230] sm:$0xff]
      %v440 = vld [vmem:[%s318 + $0x238] sm:$0xff]
      %v441 = vld [vmem:[%s318 + $0x240] sm:$0xf]
      %v442 = vld [vmem:[%s318 + $0x244] sm:$0xff]
      %v443 = vld [vmem:[%s318 + $0x24c] sm:$0xff]
      %v444 = vld [vmem:[%s318 + $0x254] sm:$0xf]
      %v445 = vld [vmem:[%s318 + $0x258] sm:$0xff]
      %v446 = vld [vmem:[%s318 + $0x260] sm:$0xff]
      %v447 = vld [vmem:[%s318 + $0x268] sm:$0xf]
      %v448 = vld [vmem:[%s318 + $0x26c] sm:$0xff]
      %v449 = vld [vmem:[%s318 + $0x274] sm:$0xff]
      %v450 = vld [vmem:[%s318 + $0x27c] sm:$0xf]
      %v451 = vld [vmem:[%s328] sm:$0xf]
      %v452 = vld [vmem:[%s328 + $0x4] sm:$0xf]
      %v453 = vld [vmem:[%s328 + $0x8] sm:$0xf]
      %v454 = vld [vmem:[%s328 + $0xc] sm:$0xf]
      %v455 = vld [vmem:[%s328 + $0x10] sm:$0xf]
      %v456 = vld [vmem:[%s328 + $0x14] sm:$0xf]
      %v457 = vld [vmem:[%s328 + $0x18] sm:$0xf]
      %v458 = vld [vmem:[%s328 + $0x1c] sm:$0xf]
      %v459 = vld [vmem:[%s328 + $0x20] sm:$0xf]
      %v460 = vld [vmem:[%s328 + $0x24] sm:$0xf]
      %v461 = vld [vmem:[%s328 + $0x28] sm:$0xf]
      %v462 = vld [vmem:[%s328 + $0x2c] sm:$0xf]
      %v463 = vld [vmem:[%s328 + $0x30] sm:$0xf]
      %v464 = vld [vmem:[%s328 + $0x34] sm:$0xf]
      %v465 = vld [vmem:[%s328 + $0x38] sm:$0xf]
      %v466 = vld [vmem:[%s328 + $0x3c] sm:$0xf]
      %v467 = vld [vmem:[%s328 + $0x40] sm:$0xf]
      %v468 = vld [vmem:[%s328 + $0x44] sm:$0xf]
      %v469 = vld [vmem:[%s328 + $0x48] sm:$0xf]
      %v470 = vld [vmem:[%s328 + $0x4c] sm:$0xf]
      %v471 = vld [vmem:[%s328 + $0x50] sm:$0xf]
      %v472 = vld [vmem:[%s328 + $0x54] sm:$0xf]
      %v473 = vld [vmem:[%s328 + $0x58] sm:$0xf]
      %v474 = vld [vmem:[%s328 + $0x5c] sm:$0xf]
      %v475 = vld [vmem:[%s328 + $0x60] sm:$0xf]
      %v476 = vld [vmem:[%s328 + $0x64] sm:$0xf]
      %v477 = vld [vmem:[%s328 + $0x68] sm:$0xf]
      %v478 = vld [vmem:[%s328 + $0x6c] sm:$0xf]
      %v479 = vld [vmem:[%s328 + $0x70] sm:$0xf]
      %v480 = vld [vmem:[%s328 + $0x74] sm:$0xf]
      %v481 = vld [vmem:[%s328 + $0x78] sm:$0xf]
      %v482 = vld [vmem:[%s328 + $0x7c] sm:$0xf]
      %v483 = vld [vmem:[%s328 + $0x80] sm:$0xf]
      %v484 = vld [vmem:[%s328 + $0x84] sm:$0xf]
      %v485 = vld [vmem:[%s328 + $0x88] sm:$0xf]
      %v486 = vld [vmem:[%s328 + $0x8c] sm:$0xf]
      %v487 = vld [vmem:[%s328 + $0x90] sm:$0xf]
      %v488 = vld [vmem:[%s328 + $0x94] sm:$0xf]
      %v489 = vld [vmem:[%s328 + $0x98] sm:$0xf]
      %v490 = vld [vmem:[%s328 + $0x9c] sm:$0xf]
      %v491 = vld [vmem:[%s328 + $0xa0] sm:$0xf]
      %v492 = vld [vmem:[%s328 + $0xa4] sm:$0xf]
      %v493 = vld [vmem:[%s328 + $0xa8] sm:$0xf]
      %v494 = vld [vmem:[%s328 + $0xac] sm:$0xf]
      %v495 = vld [vmem:[%s328 + $0xb0] sm:$0xf]
      %v496 = vld [vmem:[%s328 + $0xb4] sm:$0xf]
      %v497 = vld [vmem:[%s328 + $0xb8] sm:$0xf]
      %v498 = vld [vmem:[%s328 + $0xbc] sm:$0xf]
      %v499 = vld [vmem:[%s328 + $0xc0] sm:$0xf]
      %v500 = vld [vmem:[%s328 + $0xc4] sm:$0xf]
      %v501 = vld [vmem:[%s328 + $0xc8] sm:$0xf]
      %v502 = vld [vmem:[%s328 + $0xcc] sm:$0xf]
      %v503 = vld [vmem:[%s328 + $0xd0] sm:$0xf]
      %v504 = vld [vmem:[%s328 + $0xd4] sm:$0xf]
      %v505 = vld [vmem:[%s328 + $0xd8] sm:$0xf]
      %v506 = vld [vmem:[%s328 + $0xdc] sm:$0xf]
      %v507 = vld [vmem:[%s328 + $0xe0] sm:$0xf]
      %v508 = vld [vmem:[%s328 + $0xe4] sm:$0xf]
      %v509 = vld [vmem:[%s328 + $0xe8] sm:$0xf]
      %v510 = vld [vmem:[%s328 + $0xec] sm:$0xf]
      %v511 = vld [vmem:[%s328 + $0xf0] sm:$0xf]
      %v512 = vld [vmem:[%s328 + $0xf4] sm:$0xf]
      %v513 = vld [vmem:[%s328 + $0xf8] sm:$0xf]
      %v514 = vld [vmem:[%s328 + $0xfc] sm:$0xf]
      %v515 = vld [vmem:[%s328 + $0x100] sm:$0xf]
      %v516 = vld [vmem:[%s328 + $0x104] sm:$0xf]
      %v517 = vld [vmem:[%s328 + $0x108] sm:$0xf]
      %v518 = vld [vmem:[%s328 + $0x10c] sm:$0xf]
      %v519 = vld [vmem:[%s328 + $0x110] sm:$0xf]
      %v520 = vld [vmem:[%s328 + $0x114] sm:$0xf]
      %v521 = vld [vmem:[%s328 + $0x118] sm:$0xf]
      %v522 = vld [vmem:[%s328 + $0x11c] sm:$0xf]
      %v523 = vld [vmem:[%s328 + $0x120] sm:$0xf]
      %v524 = vld [vmem:[%s328 + $0x124] sm:$0xf]
      %v525 = vld [vmem:[%s328 + $0x128] sm:$0xf]
      %v526 = vld [vmem:[%s328 + $0x12c] sm:$0xf]
      %v527 = vld [vmem:[%s328 + $0x130] sm:$0xf]
      %v528 = vld [vmem:[%s328 + $0x134] sm:$0xf]
      %v529 = vld [vmem:[%s328 + $0x138] sm:$0xf]
      %v530 = vld [vmem:[%s328 + $0x13c] sm:$0xf]
      %v531 = vld [vmem:[%s332] sm:$0x1]
      %v533 = vlaneseq
      %v534 = vshrl.u32 %v533, 7
      %v535 = vsub.s32 0, %v534
      %v536 = vrot.slane %v531, %v535
      %v634 = vunpack.c.l.b16 %v355
      %v635 = vunpack.c.h.b16 %v355
      %v636 = vunpack.c.l.b16 %v356
      %v637 = vunpack.c.h.b16 %v356
      %v638 = vunpack.c.l.b16 %v357
      %v639 = vunpack.c.l.b16 %v358
      %v640 = vunpack.c.h.b16 %v358
      %v641 = vunpack.c.l.b16 %v359
      %v642 = vunpack.c.h.b16 %v359
      %v643 = vunpack.c.l.b16 %v360
      %v644 = vunpack.c.l.b16 %v361
      %v645 = vunpack.c.h.b16 %v361
      %v646 = vunpack.c.l.b16 %v362
      %v647 = vunpack.c.h.b16 %v362
      %v648 = vunpack.c.l.b16 %v363
      %v649 = vunpack.c.l.b16 %v364
      %v650 = vunpack.c.h.b16 %v364
      %v651 = vunpack.c.l.b16 %v365
      %v652 = vunpack.c.h.b16 %v365
      %v653 = vunpack.c.l.b16 %v366
      %v654 = vunpack.c.l.b16 %v367
      %v655 = vunpack.c.h.b16 %v367
      %v656 = vunpack.c.l.b16 %v368
      %v657 = vunpack.c.h.b16 %v368
      %v658 = vunpack.c.l.b16 %v369
      %v659 = vunpack.c.l.b16 %v370
      %v660 = vunpack.c.h.b16 %v370
      %v661 = vunpack.c.l.b16 %v371
      %v662 = vunpack.c.h.b16 %v371
      %v663 = vunpack.c.l.b16 %v372
      %v664 = vunpack.c.l.b16 %v373
      %v665 = vunpack.c.h.b16 %v373
      %v666 = vunpack.c.l.b16 %v374
      %v667 = vunpack.c.h.b16 %v374
      %v668 = vunpack.c.l.b16 %v375
      %v669 = vunpack.c.l.b16 %v376
      %v670 = vunpack.c.h.b16 %v376
      %v671 = vunpack.c.l.b16 %v377
      %v672 = vunpack.c.h.b16 %v377
      %v673 = vunpack.c.l.b16 %v378
      %v674 = vunpack.c.l.b16 %v379
      %v675 = vunpack.c.h.b16 %v379
      %v676 = vunpack.c.l.b16 %v380
      %v677 = vunpack.c.h.b16 %v380
      %v678 = vunpack.c.l.b16 %v381
      %v679 = vunpack.c.l.b16 %v382
      %v680 = vunpack.c.h.b16 %v382
      %v681 = vunpack.c.l.b16 %v383
      %v682 = vunpack.c.h.b16 %v383
      %v683 = vunpack.c.l.b16 %v384
      %v684 = vunpack.c.l.b16 %v385
      %v685 = vunpack.c.h.b16 %v385
      %v686 = vunpack.c.l.b16 %v386
      %v687 = vunpack.c.h.b16 %v386
      %v688 = vunpack.c.l.b16 %v387
      %v689 = vunpack.c.l.b16 %v388
      %v690 = vunpack.c.h.b16 %v388
      %v691 = vunpack.c.l.b16 %v389
      %v692 = vunpack.c.h.b16 %v389
      %v693 = vunpack.c.l.b16 %v390
      %v694 = vunpack.c.l.b16 %v391
      %v695 = vunpack.c.h.b16 %v391
      %v696 = vunpack.c.l.b16 %v392
      %v697 = vunpack.c.h.b16 %v392
      %v698 = vunpack.c.l.b16 %v393
      %v699 = vunpack.c.l.b16 %v394
      %v700 = vunpack.c.h.b16 %v394
      %v701 = vunpack.c.l.b16 %v395
      %v702 = vunpack.c.h.b16 %v395
      %v703 = vunpack.c.l.b16 %v396
      %v704 = vunpack.c.l.b16 %v397
      %v705 = vunpack.c.h.b16 %v397
      %v706 = vunpack.c.l.b16 %v398
      %v707 = vunpack.c.h.b16 %v398
      %v708 = vunpack.c.l.b16 %v399
      %v709 = vunpack.c.l.b16 %v400
      %v710 = vunpack.c.h.b16 %v400
      %v711 = vunpack.c.l.b16 %v401
      %v712 = vunpack.c.h.b16 %v401
      %v713 = vunpack.c.l.b16 %v402
      %v714 = vunpack.c.l.b16 %v403
      %v715 = vunpack.c.h.b16 %v403
      %v716 = vunpack.c.l.b16 %v404
      %v717 = vunpack.c.h.b16 %v404
      %v718 = vunpack.c.l.b16 %v405
      %v719 = vunpack.c.l.b16 %v406
      %v720 = vunpack.c.h.b16 %v406
      %v721 = vunpack.c.l.b16 %v407
      %v722 = vunpack.c.h.b16 %v407
      %v723 = vunpack.c.l.b16 %v408
      %v724 = vunpack.c.l.b16 %v409
      %v725 = vunpack.c.h.b16 %v409
      %v726 = vunpack.c.l.b16 %v410
      %v727 = vunpack.c.h.b16 %v410
      %v728 = vunpack.c.l.b16 %v411
      %v729 = vunpack.c.l.b16 %v412
      %v730 = vunpack.c.h.b16 %v412
      %v731 = vunpack.c.l.b16 %v413
      %v732 = vunpack.c.h.b16 %v413
      %v733 = vunpack.c.l.b16 %v414
      %v734 = vunpack.c.l.b16 %v415
      %v735 = vunpack.c.h.b16 %v415
      %v736 = vunpack.c.l.b16 %v416
      %v737 = vunpack.c.h.b16 %v416
      %v738 = vunpack.c.l.b16 %v417
      %v739 = vunpack.c.l.b16 %v418
      %v740 = vunpack.c.h.b16 %v418
      %v741 = vunpack.c.l.b16 %v419
      %v742 = vunpack.c.h.b16 %v419
      %v743 = vunpack.c.l.b16 %v420
      %v744 = vunpack.c.l.b16 %v421
      %v745 = vunpack.c.h.b16 %v421
      %v746 = vunpack.c.l.b16 %v422
      %v747 = vunpack.c.h.b16 %v422
      %v748 = vunpack.c.l.b16 %v423
      %v749 = vunpack.c.l.b16 %v424
      %v750 = vunpack.c.h.b16 %v424
      %v751 = vunpack.c.l.b16 %v425
      %v752 = vunpack.c.h.b16 %v425
      %v753 = vunpack.c.l.b16 %v426
      %v754 = vunpack.c.l.b16 %v427
      %v755 = vunpack.c.h.b16 %v427
      %v756 = vunpack.c.l.b16 %v428
      %v757 = vunpack.c.h.b16 %v428
      %v758 = vunpack.c.l.b16 %v429
      %v759 = vunpack.c.l.b16 %v430
      %v760 = vunpack.c.h.b16 %v430
      %v761 = vunpack.c.l.b16 %v431
      %v762 = vunpack.c.h.b16 %v431
      %v763 = vunpack.c.l.b16 %v432
      %v764 = vunpack.c.l.b16 %v433
      %v765 = vunpack.c.h.b16 %v433
      %v766 = vunpack.c.l.b16 %v434
      %v767 = vunpack.c.h.b16 %v434
      %v768 = vunpack.c.l.b16 %v435
      %v769 = vunpack.c.l.b16 %v436
      %v770 = vunpack.c.h.b16 %v436
      %v771 = vunpack.c.l.b16 %v437
      %v772 = vunpack.c.h.b16 %v437
      %v773 = vunpack.c.l.b16 %v438
      %v774 = vunpack.c.l.b16 %v439
      %v775 = vunpack.c.h.b16 %v439
      %v776 = vunpack.c.l.b16 %v440
      %v777 = vunpack.c.h.b16 %v440
      %v778 = vunpack.c.l.b16 %v441
      %v779 = vunpack.c.l.b16 %v442
      %v780 = vunpack.c.h.b16 %v442
      %v781 = vunpack.c.l.b16 %v443
      %v782 = vunpack.c.h.b16 %v443
      %v783 = vunpack.c.l.b16 %v444
      %v784 = vunpack.c.l.b16 %v445
      %v785 = vunpack.c.h.b16 %v445
      %v786 = vunpack.c.l.b16 %v446
      %v787 = vunpack.c.h.b16 %v446
      %v788 = vunpack.c.l.b16 %v447
      %v789 = vunpack.c.l.b16 %v448
      %v790 = vunpack.c.h.b16 %v448
      %v791 = vunpack.c.l.b16 %v449
      %v792 = vunpack.c.h.b16 %v449
      %v793 = vunpack.c.l.b16 %v450
      %v794 = vpack.c.b16 %v639, %v634
      %v795 = vpack.c.b16 %v640, %v635
      %v796 = vpack.c.b16 %v641, %v636
      %v797 = vpack.c.b16 %v642, %v637
      %v798 = vpack.c.b16 %v643, %v638
      %v799 = vpack.c.b16 %v649, %v644
      %v800 = vpack.c.b16 %v650, %v645
      %v801 = vpack.c.b16 %v651, %v646
      %v802 = vpack.c.b16 %v652, %v647
      %v803 = vpack.c.b16 %v653, %v648
      %v804 = vpack.c.b16 %v659, %v654
      %v805 = vpack.c.b16 %v660, %v655
      %v806 = vpack.c.b16 %v661, %v656
      %v807 = vpack.c.b16 %v662, %v657
      %v808 = vpack.c.b16 %v663, %v658
      %v809 = vpack.c.b16 %v669, %v664
      %v810 = vpack.c.b16 %v670, %v665
      %v811 = vpack.c.b16 %v671, %v666
      %v812 = vpack.c.b16 %v672, %v667
      %v813 = vpack.c.b16 %v673, %v668
      %v814 = vpack.c.b16 %v679, %v674
      %v815 = vpack.c.b16 %v680, %v675
      %v816 = vpack.c.b16 %v681, %v676
      %v817 = vpack.c.b16 %v682, %v677
      %v818 = vpack.c.b16 %v683, %v678
      %v819 = vpack.c.b16 %v689, %v684
      %v820 = vpack.c.b16 %v690, %v685
      %v821 = vpack.c.b16 %v691, %v686
      %v822 = vpack.c.b16 %v692, %v687
      %v823 = vpack.c.b16 %v693, %v688
      %v824 = vpack.c.b16 %v699, %v694
      %v825 = vpack.c.b16 %v700, %v695
      %v826 = vpack.c.b16 %v701, %v696
      %v827 = vpack.c.b16 %v702, %v697
      %v828 = vpack.c.b16 %v703, %v698
      %v829 = vpack.c.b16 %v709, %v704
      %v830 = vpack.c.b16 %v710, %v705
      %v831 = vpack.c.b16 %v711, %v706
      %v832 = vpack.c.b16 %v712, %v707
      %v833 = vpack.c.b16 %v713, %v708
      %v834 = vpack.c.b16 %v719, %v714
      %v835 = vpack.c.b16 %v720, %v715
      %v836 = vpack.c.b16 %v721, %v716
      %v837 = vpack.c.b16 %v722, %v717
      %v838 = vpack.c.b16 %v723, %v718
      %v839 = vpack.c.b16 %v729, %v724
      %v840 = vpack.c.b16 %v730, %v725
      %v841 = vpack.c.b16 %v731, %v726
      %v842 = vpack.c.b16 %v732, %v727
      %v843 = vpack.c.b16 %v733, %v728
      %v844 = vpack.c.b16 %v739, %v734
      %v845 = vpack.c.b16 %v740, %v735
      %v846 = vpack.c.b16 %v741, %v736
      %v847 = vpack.c.b16 %v742, %v737
      %v848 = vpack.c.b16 %v743, %v738
      %v849 = vpack.c.b16 %v749, %v744
      %v850 = vpack.c.b16 %v750, %v745
      %v851 = vpack.c.b16 %v751, %v746
      %v852 = vpack.c.b16 %v752, %v747
      %v853 = vpack.c.b16 %v753, %v748
      %v854 = vpack.c.b16 %v759, %v754
      %v855 = vpack.c.b16 %v760, %v755
      %v856 = vpack.c.b16 %v761, %v756
      %v857 = vpack.c.b16 %v762, %v757
      %v858 = vpack.c.b16 %v763, %v758
      %v859 = vpack.c.b16 %v769, %v764
      %v860 = vpack.c.b16 %v770, %v765
      %v861 = vpack.c.b16 %v771, %v766
      %v862 = vpack.c.b16 %v772, %v767
      %v863 = vpack.c.b16 %v773, %v768
      %v864 = vpack.c.b16 %v779, %v774
      %v865 = vpack.c.b16 %v780, %v775
      %v866 = vpack.c.b16 %v781, %v776
      %v867 = vpack.c.b16 %v782, %v777
      %v868 = vpack.c.b16 %v783, %v778
      %v869 = vpack.c.b16 %v789, %v784
      %v870 = vpack.c.b16 %v790, %v785
      %v871 = vpack.c.b16 %v791, %v786
      %v872 = vpack.c.b16 %v792, %v787
      %v873 = vpack.c.b16 %v793, %v788
      %v1034 = vunpack.c.l.b16 %v451
      %v1035 = vunpack.c.l.b16 %v452
      %v1036 = vunpack.c.l.b16 %v453
      %v1037 = vunpack.c.l.b16 %v454
      %v1038 = vunpack.c.l.b16 %v455
      %v1039 = vunpack.c.l.b16 %v456
      %v1040 = vunpack.c.l.b16 %v457
      %v1041 = vunpack.c.l.b16 %v458
      %v1042 = vunpack.c.l.b16 %v459
      %v1043 = vunpack.c.l.b16 %v460
      %v1044 = vunpack.c.l.b16 %v461
      %v1045 = vunpack.c.l.b16 %v462
      %v1046 = vunpack.c.l.b16 %v463
      %v1047 = vunpack.c.l.b16 %v464
      %v1048 = vunpack.c.l.b16 %v465
      %v1049 = vunpack.c.l.b16 %v466
      %v1050 = vunpack.c.l.b16 %v467
      %v1051 = vunpack.c.l.b16 %v468
      %v1052 = vunpack.c.l.b16 %v469
      %v1053 = vunpack.c.l.b16 %v470
      %v1054 = vunpack.c.l.b16 %v471
      %v1055 = vunpack.c.l.b16 %v472
      %v1056 = vunpack.c.l.b16 %v473
      %v1057 = vunpack.c.l.b16 %v474
      %v1058 = vunpack.c.l.b16 %v475
      %v1059 = vunpack.c.l.b16 %v476
      %v1060 = vunpack.c.l.b16 %v477
      %v1061 = vunpack.c.l.b16 %v478
      %v1062 = vunpack.c.l.b16 %v479
      %v1063 = vunpack.c.l.b16 %v480
      %v1064 = vunpack.c.l.b16 %v481
      %v1065 = vunpack.c.l.b16 %v482
      %v1066 = vunpack.c.l.b16 %v483
      %v1067 = vunpack.c.l.b16 %v484
      %v1068 = vunpack.c.l.b16 %v485
      %v1069 = vunpack.c.l.b16 %v486
      %v1070 = vunpack.c.l.b16 %v487
      %v1071 = vunpack.c.l.b16 %v488
      %v1072 = vunpack.c.l.b16 %v489
      %v1073 = vunpack.c.l.b16 %v490
      %v1074 = vunpack.c.l.b16 %v491
      %v1075 = vunpack.c.l.b16 %v492
      %v1076 = vunpack.c.l.b16 %v493
      %v1077 = vunpack.c.l.b16 %v494
      %v1078 = vunpack.c.l.b16 %v495
      %v1079 = vunpack.c.l.b16 %v496
      %v1080 = vunpack.c.l.b16 %v497
      %v1081 = vunpack.c.l.b16 %v498
      %v1082 = vunpack.c.l.b16 %v499
      %v1083 = vunpack.c.l.b16 %v500
      %v1084 = vunpack.c.l.b16 %v501
      %v1085 = vunpack.c.l.b16 %v502
      %v1086 = vunpack.c.l.b16 %v503
      %v1087 = vunpack.c.l.b16 %v504
      %v1088 = vunpack.c.l.b16 %v505
      %v1089 = vunpack.c.l.b16 %v506
      %v1090 = vunpack.c.l.b16 %v507
      %v1091 = vunpack.c.l.b16 %v508
      %v1092 = vunpack.c.l.b16 %v509
      %v1093 = vunpack.c.l.b16 %v510
      %v1094 = vunpack.c.l.b16 %v511
      %v1095 = vunpack.c.l.b16 %v512
      %v1096 = vunpack.c.l.b16 %v513
      %v1097 = vunpack.c.l.b16 %v514
      %v1098 = vunpack.c.l.b16 %v515
      %v1099 = vunpack.c.l.b16 %v516
      %v1100 = vunpack.c.l.b16 %v517
      %v1101 = vunpack.c.l.b16 %v518
      %v1102 = vunpack.c.l.b16 %v519
      %v1103 = vunpack.c.l.b16 %v520
      %v1104 = vunpack.c.l.b16 %v521
      %v1105 = vunpack.c.l.b16 %v522
      %v1106 = vunpack.c.l.b16 %v523
      %v1107 = vunpack.c.l.b16 %v524
      %v1108 = vunpack.c.l.b16 %v525
      %v1109 = vunpack.c.l.b16 %v526
      %v1110 = vunpack.c.l.b16 %v527
      %v1111 = vunpack.c.l.b16 %v528
      %v1112 = vunpack.c.l.b16 %v529
      %v1113 = vunpack.c.l.b16 %v530
      %v1114 = vpack.c.b16 %v1035, %v1034
      %v1115 = vpack.c.b16 %v1037, %v1036
      %v1116 = vpack.c.b16 %v1039, %v1038
      %v1117 = vpack.c.b16 %v1041, %v1040
      %v1118 = vpack.c.b16 %v1043, %v1042
      %v1119 = vpack.c.b16 %v1045, %v1044
      %v1120 = vpack.c.b16 %v1047, %v1046
      %v1121 = vpack.c.b16 %v1049, %v1048
      %v1122 = vpack.c.b16 %v1051, %v1050
      %v1123 = vpack.c.b16 %v1053, %v1052
      %v1124 = vpack.c.b16 %v1055, %v1054
      %v1125 = vpack.c.b16 %v1057, %v1056
      %v1126 = vpack.c.b16 %v1059, %v1058
      %v1127 = vpack.c.b16 %v1061, %v1060
      %v1128 = vpack.c.b16 %v1063, %v1062
      %v1129 = vpack.c.b16 %v1065, %v1064
      %v1130 = vpack.c.b16 %v1067, %v1066
      %v1131 = vpack.c.b16 %v1069, %v1068
      %v1132 = vpack.c.b16 %v1071, %v1070
      %v1133 = vpack.c.b16 %v1073, %v1072
      %v1134 = vpack.c.b16 %v1075, %v1074
      %v1135 = vpack.c.b16 %v1077, %v1076
      %v1136 = vpack.c.b16 %v1079, %v1078
      %v1137 = vpack.c.b16 %v1081, %v1080
      %v1138 = vpack.c.b16 %v1083, %v1082
      %v1139 = vpack.c.b16 %v1085, %v1084
      %v1140 = vpack.c.b16 %v1087, %v1086
      %v1141 = vpack.c.b16 %v1089, %v1088
      %v1142 = vpack.c.b16 %v1091, %v1090
      %v1143 = vpack.c.b16 %v1093, %v1092
      %v1144 = vpack.c.b16 %v1095, %v1094
      %v1145 = vpack.c.b16 %v1097, %v1096
      %v1146 = vpack.c.b16 %v1099, %v1098
      %v1147 = vpack.c.b16 %v1101, %v1100
      %v1148 = vpack.c.b16 %v1103, %v1102
      %v1149 = vpack.c.b16 %v1105, %v1104
      %v1150 = vpack.c.b16 %v1107, %v1106
      %v1151 = vpack.c.b16 %v1109, %v1108
      %v1152 = vpack.c.b16 %v1111, %v1110
      %v1153 = vpack.c.b16 %v1113, %v1112
      %1194 = vmatprep.subr.bf16.mxu0 0
      %1195 = vmatpush1.bf16.msra.mxu0 %v1121
      %1196 = vmatprep.subr.bf16.mxu0 0
      %1197 = vmatpush1.bf16.msra.mxu0 %v1120
      %1198 = vmatprep.subr.bf16.mxu0 0
      %1199 = vmatpush1.bf16.msra.mxu0 %v1119
      %1200 = vmatprep.subr.bf16.mxu0 0
      %1201 = vmatpush1.bf16.msra.mxu0 %v1118
      %1202 = vmatprep.subr.bf16.mxu0 0
      %1203 = vmatpush1.bf16.msra.mxu0 %v1117
      %1204 = vmatprep.subr.bf16.mxu0 0
      %1205 = vmatpush1.bf16.msra.mxu0 %v1116
      %1206 = vmatprep.subr.bf16.mxu0 0
      %1207 = vmatpush1.bf16.msra.mxu0 %v1115
      %1208 = vmatprep.subr.bf16.mxu0 0
      %1209 = vmatpush1.bf16.msra.mxu0 %v1114
      %1210 = vmatprep.subr.bf16.mxu0 0
      %1211 = vmatpush2.bf16.msra.mxu0 %v1129
      %1212 = vmatprep.subr.bf16.mxu0 0
      %1213 = vmatpush2.bf16.msra.mxu0 %v1128
      %1214 = vmatprep.subr.bf16.mxu0 0
      %1215 = vmatpush2.bf16.msra.mxu0 %v1127
      %1216 = vmatprep.subr.bf16.mxu0 0
      %1217 = vmatpush2.bf16.msra.mxu0 %v1126
      %1218 = vmatprep.subr.bf16.mxu0 0
      %1219 = vmatpush2.bf16.msra.mxu0 %v1125
      %1220 = vmatprep.subr.bf16.mxu0 0
      %1221 = vmatpush2.bf16.msra.mxu0 %v1124
      %1222 = vmatprep.subr.bf16.mxu0 0
      %1223 = vmatpush2.bf16.msra.mxu0 %v1123
      %1224 = vmatprep.subr.bf16.mxu0 0
      %1225 = vmatpush2.bf16.msra.mxu0 %v1122
      %1226 = vmatprep.mubr.bf16.mxu0 %v795
      %1227 = vmatmul.mubr.bf16.gmra.mxu0 %v794
      %v1228 = vpop.f32.mrf.mxu0
      %v1229 = vadd.f32 %v536, %v1228
      %v1230 = vpop.f32.mrf.mxu0
      %v1231 = vpop.f32.mrf.mxu0
      %v1232 = vadd.f32 %v536, %v1231
      %v1233 = vpop.f32.mrf.mxu0
      %1234 = vmatprep.mubr.bf16.mxu0 %v800
      %1235 = vmatmul.mubr.bf16.gmra.mxu0 %v799
      %v1236 = vpop.f32.mrf.mxu0
      %v1237 = vadd.f32 %v536, %v1236
      %v1238 = vpop.f32.mrf.mxu0
      %v1239 = vpop.f32.mrf.mxu0
      %v1240 = vadd.f32 %v536, %v1239
      %v1241 = vpop.f32.mrf.mxu0
      %1242 = vmatprep.mubr.bf16.mxu0 %v805
      %1243 = vmatmul.mubr.bf16.gmra.mxu0 %v804
      %v1244 = vpop.f32.mrf.mxu0
      %v1245 = vadd.f32 %v536, %v1244
      %v1246 = vpop.f32.mrf.mxu0
      %v1247 = vpop.f32.mrf.mxu0
      %v1248 = vadd.f32 %v536, %v1247
      %v1249 = vpop.f32.mrf.mxu0
      %1250 = vmatprep.mubr.bf16.mxu0 %v810
      %1251 = vmatmul.mubr.bf16.gmra.mxu0 %v809
      %v1252 = vpop.f32.mrf.mxu0
      %v1253 = vadd.f32 %v536, %v1252
      %v1254 = vpop.f32.mrf.mxu0
      %v1255 = vpop.f32.mrf.mxu0
      %v1256 = vadd.f32 %v536, %v1255
      %v1257 = vpop.f32.mrf.mxu0
      %1258 = vmatprep.mubr.bf16.mxu0 %v815
      %1259 = vmatmul.mubr.bf16.gmra.mxu0 %v814
      %v1260 = vpop.f32.mrf.mxu0
      %v1261 = vadd.f32 %v536, %v1260
      %v1262 = vpop.f32.mrf.mxu0
      %v1263 = vpop.f32.mrf.mxu0
      %v1264 = vadd.f32 %v536, %v1263
      %v1265 = vpop.f32.mrf.mxu0
      %1266 = vmatprep.mubr.bf16.mxu0 %v820
      %1267 = vmatmul.mubr.bf16.gmra.mxu0 %v819
      %v1268 = vpop.f32.mrf.mxu0
      %v1269 = vadd.f32 %v536, %v1268
      %v1270 = vpop.f32.mrf.mxu0
      %v1271 = vpop.f32.mrf.mxu0
      %v1272 = vadd.f32 %v536, %v1271
      %v1273 = vpop.f32.mrf.mxu0
      %1274 = vmatprep.mubr.bf16.mxu0 %v825
      %1275 = vmatmul.mubr.bf16.gmra.mxu0 %v824
      %v1276 = vpop.f32.mrf.mxu0
      %v1277 = vadd.f32 %v536, %v1276
      %v1278 = vpop.f32.mrf.mxu0
      %v1279 = vpop.f32.mrf.mxu0
      %v1280 = vadd.f32 %v536, %v1279
      %v1281 = vpop.f32.mrf.mxu0
      %1282 = vmatprep.mubr.bf16.mxu0 %v830
      %1283 = vmatmul.mubr.bf16.gmra.mxu0 %v829
      %v1284 = vpop.f32.mrf.mxu0
      %v1285 = vadd.f32 %v536, %v1284
      %v1286 = vpop.f32.mrf.mxu0
      %v1287 = vpop.f32.mrf.mxu0
      %v1288 = vadd.f32 %v536, %v1287
      %v1289 = vpop.f32.mrf.mxu0
      %1290 = vmatprep.mubr.bf16.mxu0 %v835
      %1291 = vmatmul.mubr.bf16.gmra.mxu0 %v834
      %v1292 = vpop.f32.mrf.mxu0
      %v1293 = vadd.f32 %v536, %v1292
      %v1294 = vpop.f32.mrf.mxu0
      %v1295 = vpop.f32.mrf.mxu0
      %v1296 = vadd.f32 %v536, %v1295
      %v1297 = vpop.f32.mrf.mxu0
      %1298 = vmatprep.mubr.bf16.mxu0 %v840
      %1299 = vmatmul.mubr.bf16.gmra.mxu0 %v839
      %v1300 = vpop.f32.mrf.mxu0
      %v1301 = vadd.f32 %v536, %v1300
      %v1302 = vpop.f32.mrf.mxu0
      %v1303 = vpop.f32.mrf.mxu0
      %v1304 = vadd.f32 %v536, %v1303
      %v1305 = vpop.f32.mrf.mxu0
      %1306 = vmatprep.mubr.bf16.mxu0 %v845
      %1307 = vmatmul.mubr.bf16.gmra.mxu0 %v844
      %v1308 = vpop.f32.mrf.mxu0
      %v1309 = vadd.f32 %v536, %v1308
      %v1310 = vpop.f32.mrf.mxu0
      %v1311 = vpop.f32.mrf.mxu0
      %v1312 = vadd.f32 %v536, %v1311
      %v1313 = vpop.f32.mrf.mxu0
      %1314 = vmatprep.mubr.bf16.mxu0 %v850
      %1315 = vmatmul.mubr.bf16.gmra.mxu0 %v849
      %v1316 = vpop.f32.mrf.mxu0
      %v1317 = vadd.f32 %v536, %v1316
      %v1318 = vpop.f32.mrf.mxu0
      %v1319 = vpop.f32.mrf.mxu0
      %v1320 = vadd.f32 %v536, %v1319
      %v1321 = vpop.f32.mrf.mxu0
      %1322 = vmatprep.mubr.bf16.mxu0 %v855
      %1323 = vmatmul.mubr.bf16.gmra.mxu0 %v854
      %v1324 = vpop.f32.mrf.mxu0
      %v1325 = vadd.f32 %v536, %v1324
      %v1326 = vpop.f32.mrf.mxu0
      %v1327 = vpop.f32.mrf.mxu0
      %v1328 = vadd.f32 %v536, %v1327
      %v1329 = vpop.f32.mrf.mxu0
      %1330 = vmatprep.mubr.bf16.mxu0 %v860
      %1331 = vmatmul.mubr.bf16.gmra.mxu0 %v859
      %v1332 = vpop.f32.mrf.mxu0
      %v1333 = vadd.f32 %v536, %v1332
      %v1334 = vpop.f32.mrf.mxu0
      %v1335 = vpop.f32.mrf.mxu0
      %v1336 = vadd.f32 %v536, %v1335
      %v1337 = vpop.f32.mrf.mxu0
      %1338 = vmatprep.mubr.bf16.mxu0 %v865
      %1339 = vmatmul.mubr.bf16.gmra.mxu0 %v864
      %v1340 = vpop.f32.mrf.mxu0
      %v1341 = vadd.f32 %v536, %v1340
      %v1342 = vpop.f32.mrf.mxu0
      %v1343 = vpop.f32.mrf.mxu0
      %v1344 = vadd.f32 %v536, %v1343
      %v1345 = vpop.f32.mrf.mxu0
      %1346 = vmatprep.mubr.bf16.mxu0 %v870
      %1347 = vmatmul.mubr.bf16.gmra.mxu0 %v869
      %v1348 = vpop.f32.mrf.mxu0
      %v1349 = vadd.f32 %v536, %v1348
      %v1350 = vpop.f32.mrf.mxu0
      %v1351 = vpop.f32.mrf.mxu0
      %v1352 = vadd.f32 %v536, %v1351
      %v1353 = vpop.f32.mrf.mxu0
      %1354 = vdwg.mxu0
      %1355 = vmatprep.subr.bf16.mxu0 0
      %1356 = vmatpush1.bf16.msra.mxu0 %v1137
      %1357 = vmatprep.subr.bf16.mxu0 0
      %1358 = vmatpush1.bf16.msra.mxu0 %v1136
      %1359 = vmatprep.subr.bf16.mxu0 0
      %1360 = vmatpush1.bf16.msra.mxu0 %v1135
      %1361 = vmatprep.subr.bf16.mxu0 0
      %1362 = vmatpush1.bf16.msra.mxu0 %v1134
      %1363 = vmatprep.subr.bf16.mxu0 0
      %1364 = vmatpush1.bf16.msra.mxu0 %v1133
      %1365 = vmatprep.subr.bf16.mxu0 0
      %1366 = vmatpush1.bf16.msra.mxu0 %v1132
      %1367 = vmatprep.subr.bf16.mxu0 0
      %1368 = vmatpush1.bf16.msra.mxu0 %v1131
      %1369 = vmatprep.subr.bf16.mxu0 0
      %1370 = vmatpush1.bf16.msra.mxu0 %v1130
      %1371 = vmatprep.subr.bf16.mxu0 0
      %1372 = vmatpush2.bf16.msra.mxu0 %v1145
      %1373 = vmatprep.subr.bf16.mxu0 0
      %1374 = vmatpush2.bf16.msra.mxu0 %v1144
      %1375 = vmatprep.subr.bf16.mxu0 0
      %1376 = vmatpush2.bf16.msra.mxu0 %v1143
      %1377 = vmatprep.subr.bf16.mxu0 0
      %1378 = vmatpush2.bf16.msra.mxu0 %v1142
      %1379 = vmatprep.subr.bf16.mxu0 0
      %1380 = vmatpush2.bf16.msra.mxu0 %v1141
      %1381 = vmatprep.subr.bf16.mxu0 0
      %1382 = vmatpush2.bf16.msra.mxu0 %v1140
      %1383 = vmatprep.subr.bf16.mxu0 0
      %1384 = vmatpush2.bf16.msra.mxu0 %v1139
      %1385 = vmatprep.subr.bf16.mxu0 0
      %1386 = vmatpush2.bf16.msra.mxu0 %v1138
      %1387 = vmatprep.mubr.bf16.mxu0 %v797
      %1388 = vmatmul.mubr.bf16.gmra.mxu0 %v796
      %v1389 = vpop.f32.mrf.mxu0
      %v1390 = vadd.f32 %v1229, %v1389
      %v1391 = vpop.f32.mrf.mxu0
      %v1392 = vpop.f32.mrf.mxu0
      %v1393 = vadd.f32 %v1232, %v1392
      %v1394 = vpop.f32.mrf.mxu0
      %1395 = vmatprep.mubr.bf16.mxu0 %v802
      %1396 = vmatmul.mubr.bf16.gmra.mxu0 %v801
      %v1397 = vpop.f32.mrf.mxu0
      %v1398 = vadd.f32 %v1237, %v1397
      %v1399 = vpop.f32.mrf.mxu0
      %v1400 = vpop.f32.mrf.mxu0
      %v1401 = vadd.f32 %v1240, %v1400
      %v1402 = vpop.f32.mrf.mxu0
      %1403 = vmatprep.mubr.bf16.mxu0 %v807
      %1404 = vmatmul.mubr.bf16.gmra.mxu0 %v806
      %v1405 = vpop.f32.mrf.mxu0
      %v1406 = vadd.f32 %v1245, %v1405
      %v1407 = vpop.f32.mrf.mxu0
      %v1408 = vpop.f32.mrf.mxu0
      %v1409 = vadd.f32 %v1248, %v1408
      %v1410 = vpop.f32.mrf.mxu0
      %1411 = vmatprep.mubr.bf16.mxu0 %v812
      %1412 = vmatmul.mubr.bf16.gmra.mxu0 %v811
      %v1413 = vpop.f32.mrf.mxu0
      %v1414 = vadd.f32 %v1253, %v1413
      %v1415 = vpop.f32.mrf.mxu0
      %v1416 = vpop.f32.mrf.mxu0
      %v1417 = vadd.f32 %v1256, %v1416
      %v1418 = vpop.f32.mrf.mxu0
      %1419 = vmatprep.mubr.bf16.mxu0 %v817
      %1420 = vmatmul.mubr.bf16.gmra.mxu0 %v816
      %v1421 = vpop.f32.mrf.mxu0
      %v1422 = vadd.f32 %v1261, %v1421
      %v1423 = vpop.f32.mrf.mxu0
      %v1424 = vpop.f32.mrf.mxu0
      %v1425 = vadd.f32 %v1264, %v1424
      %v1426 = vpop.f32.mrf.mxu0
      %1427 = vmatprep.mubr.bf16.mxu0 %v822
      %1428 = vmatmul.mubr.bf16.gmra.mxu0 %v821
      %v1429 = vpop.f32.mrf.mxu0
      %v1430 = vadd.f32 %v1269, %v1429
      %v1431 = vpop.f32.mrf.mxu0
      %v1432 = vpop.f32.mrf.mxu0
      %v1433 = vadd.f32 %v1272, %v1432
      %v1434 = vpop.f32.mrf.mxu0
      %1435 = vmatprep.mubr.bf16.mxu0 %v827
      %1436 = vmatmul.mubr.bf16.gmra.mxu0 %v826
      %v1437 = vpop.f32.mrf.mxu0
      %v1438 = vadd.f32 %v1277, %v1437
      %v1439 = vpop.f32.mrf.mxu0
      %v1440 = vpop.f32.mrf.mxu0
      %v1441 = vadd.f32 %v1280, %v1440
      %v1442 = vpop.f32.mrf.mxu0
      %1443 = vmatprep.mubr.bf16.mxu0 %v832
      %1444 = vmatmul.mubr.bf16.gmra.mxu0 %v831
      %v1445 = vpop.f32.mrf.mxu0
      %v1446 = vadd.f32 %v1285, %v1445
      %v1447 = vpop.f32.mrf.mxu0
      %v1448 = vpop.f32.mrf.mxu0
      %v1449 = vadd.f32 %v1288, %v1448
      %v1450 = vpop.f32.mrf.mxu0
      %1451 = vmatprep.mubr.bf16.mxu0 %v837
      %1452 = vmatmul.mubr.bf16.gmra.mxu0 %v836
      %v1453 = vpop.f32.mrf.mxu0
      %v1454 = vadd.f32 %v1293, %v1453
      %v1455 = vpop.f32.mrf.mxu0
      %v1456 = vpop.f32.mrf.mxu0
      %v1457 = vadd.f32 %v1296, %v1456
      %v1458 = vpop.f32.mrf.mxu0
      %1459 = vmatprep.mubr.bf16.mxu0 %v842
      %1460 = vmatmul.mubr.bf16.gmra.mxu0 %v841
      %v1461 = vpop.f32.mrf.mxu0
      %v1462 = vadd.f32 %v1301, %v1461
      %v1463 = vpop.f32.mrf.mxu0
      %v1464 = vpop.f32.mrf.mxu0
      %v1465 = vadd.f32 %v1304, %v1464
      %v1466 = vpop.f32.mrf.mxu0
      %1467 = vmatprep.mubr.bf16.mxu0 %v847
      %1468 = vmatmul.mubr.bf16.gmra.mxu0 %v846
      %v1469 = vpop.f32.mrf.mxu0
      %v1470 = vadd.f32 %v1309, %v1469
      %v1471 = vpop.f32.mrf.mxu0
      %v1472 = vpop.f32.mrf.mxu0
      %v1473 = vadd.f32 %v1312, %v1472
      %v1474 = vpop.f32.mrf.mxu0
      %1475 = vmatprep.mubr.bf16.mxu0 %v852
      %1476 = vmatmul.mubr.bf16.gmra.mxu0 %v851
      %v1477 = vpop.f32.mrf.mxu0
      %v1478 = vadd.f32 %v1317, %v1477
      %v1479 = vpop.f32.mrf.mxu0
      %v1480 = vpop.f32.mrf.mxu0
      %v1481 = vadd.f32 %v1320, %v1480
      %v1482 = vpop.f32.mrf.mxu0
      %1483 = vmatprep.mubr.bf16.mxu0 %v857
      %1484 = vmatmul.mubr.bf16.gmra.mxu0 %v856
      %v1485 = vpop.f32.mrf.mxu0
      %v1486 = vadd.f32 %v1325, %v1485
      %v1487 = vpop.f32.mrf.mxu0
      %v1488 = vpop.f32.mrf.mxu0
      %v1489 = vadd.f32 %v1328, %v1488
      %v1490 = vpop.f32.mrf.mxu0
      %1491 = vmatprep.mubr.bf16.mxu0 %v862
      %1492 = vmatmul.mubr.bf16.gmra.mxu0 %v861
      %v1493 = vpop.f32.mrf.mxu0
      %v1494 = vadd.f32 %v1333, %v1493
      %v1495 = vpop.f32.mrf.mxu0
      %v1496 = vpop.f32.mrf.mxu0
      %v1497 = vadd.f32 %v1336, %v1496
      %v1498 = vpop.f32.mrf.mxu0
      %1499 = vmatprep.mubr.bf16.mxu0 %v867
      %1500 = vmatmul.mubr.bf16.gmra.mxu0 %v866
      %v1501 = vpop.f32.mrf.mxu0
      %v1502 = vadd.f32 %v1341, %v1501
      %v1503 = vpop.f32.mrf.mxu0
      %v1504 = vpop.f32.mrf.mxu0
      %v1505 = vadd.f32 %v1344, %v1504
      %v1506 = vpop.f32.mrf.mxu0
      %1507 = vmatprep.mubr.bf16.mxu0 %v872
      %1508 = vmatmul.mubr.bf16.gmra.mxu0 %v871
      %v1509 = vpop.f32.mrf.mxu0
      %v1510 = vadd.f32 %v1349, %v1509
      %v1511 = vpop.f32.mrf.mxu0
      %v1512 = vpop.f32.mrf.mxu0
      %v1513 = vadd.f32 %v1352, %v1512
      %v1514 = vpop.f32.mrf.mxu0
      %1515 = vdwg.mxu0
      %1516 = vmatprep.subr.bf16.mxu0 0
      %1517 = vmatpush1.bf16.msra.mxu0 %v1153
      %1518 = vmatprep.subr.bf16.mxu0 0
      %1519 = vmatpush1.bf16.msra.mxu0 %v1152
      %1520 = vmatprep.subr.bf16.mxu0 0
      %1521 = vmatpush1.bf16.msra.mxu0 %v1151
      %1522 = vmatprep.subr.bf16.mxu0 0
      %1523 = vmatpush1.bf16.msra.mxu0 %v1150
      %1524 = vmatprep.subr.bf16.mxu0 0
      %1525 = vmatpush1.bf16.msra.mxu0 %v1149
      %1526 = vmatprep.subr.bf16.mxu0 0
      %1527 = vmatpush1.bf16.msra.mxu0 %v1148
      %1528 = vmatprep.subr.bf16.mxu0 0
      %1529 = vmatpush1.bf16.msra.mxu0 %v1147
      %1530 = vmatprep.subr.bf16.mxu0 0
      %1531 = vmatpush1.bf16.msra.mxu0 %v1146
      %1532 = vmatprep.subr.bf16.mxu0 0
      %1533 = vmatpush2.bf16.msra.mxu0 0
      %1534 = vmatprep.subr.bf16.mxu0 0
      %1535 = vmatpush2.bf16.msra.mxu0 0
      %1536 = vmatprep.subr.bf16.mxu0 0
      %1537 = vmatpush2.bf16.msra.mxu0 0
      %1538 = vmatprep.subr.bf16.mxu0 0
      %1539 = vmatpush2.bf16.msra.mxu0 0
      %1540 = vmatprep.subr.bf16.mxu0 0
      %1541 = vmatpush2.bf16.msra.mxu0 0
      %1542 = vmatprep.subr.bf16.mxu0 0
      %1543 = vmatpush2.bf16.msra.mxu0 0
      %1544 = vmatprep.subr.bf16.mxu0 0
      %1545 = vmatpush2.bf16.msra.mxu0 0
      %1546 = vmatprep.subr.bf16.mxu0 0
      %1547 = vmatpush2.bf16.msra.mxu0 0
      %1548 = vmatprep.mubr.bf16.mxu0 0
      %1549 = vmatmul.mubr.bf16.gmra.mxu0 %v798
      %v1550 = vpop.f32.mrf.mxu0
      %v1551 = vadd.f32 %v1390, %v1550
      %v1552 = vpop.f32.mrf.mxu0
      %v1553 = vpop.f32.mrf.mxu0
      %v1554 = vadd.f32 %v1393, %v1553
      %v1555 = vpop.f32.mrf.mxu0
      %1556 = vmatprep.mubr.bf16.mxu0 0
      %1557 = vmatmul.mubr.bf16.gmra.mxu0 %v803
      %v1558 = vpop.f32.mrf.mxu0
      %v1559 = vadd.f32 %v1398, %v1558
      %v1560 = vpop.f32.mrf.mxu0
      %v1561 = vpop.f32.mrf.mxu0
      %v1562 = vadd.f32 %v1401, %v1561
      %v1563 = vpop.f32.mrf.mxu0
      %1564 = vmatprep.mubr.bf16.mxu0 0
      %1565 = vmatmul.mubr.bf16.gmra.mxu0 %v808
      %v1566 = vpop.f32.mrf.mxu0
      %v1567 = vadd.f32 %v1406, %v1566
      %v1568 = vpop.f32.mrf.mxu0
      %v1569 = vpop.f32.mrf.mxu0
      %v1570 = vadd.f32 %v1409, %v1569
      %v1571 = vpop.f32.mrf.mxu0
      %1572 = vmatprep.mubr.bf16.mxu0 0
      %1573 = vmatmul.mubr.bf16.gmra.mxu0 %v813
      %v1574 = vpop.f32.mrf.mxu0
      %v1575 = vadd.f32 %v1414, %v1574
      %v1576 = vpop.f32.mrf.mxu0
      %v1577 = vpop.f32.mrf.mxu0
      %v1578 = vadd.f32 %v1417, %v1577
      %v1579 = vpop.f32.mrf.mxu0
      %1580 = vmatprep.mubr.bf16.mxu0 0
      %1581 = vmatmul.mubr.bf16.gmra.mxu0 %v818
      %v1582 = vpop.f32.mrf.mxu0
      %v1583 = vadd.f32 %v1422, %v1582
      %v1584 = vpop.f32.mrf.mxu0
      %v1585 = vpop.f32.mrf.mxu0
      %v1586 = vadd.f32 %v1425, %v1585
      %v1587 = vpop.f32.mrf.mxu0
      %1588 = vmatprep.mubr.bf16.mxu0 0
      %1589 = vmatmul.mubr.bf16.gmra.mxu0 %v823
      %v1590 = vpop.f32.mrf.mxu0
      %v1591 = vadd.f32 %v1430, %v1590
      %v1592 = vpop.f32.mrf.mxu0
      %v1593 = vpop.f32.mrf.mxu0
      %v1594 = vadd.f32 %v1433, %v1593
      %v1595 = vpop.f32.mrf.mxu0
      %1596 = vmatprep.mubr.bf16.mxu0 0
      %1597 = vmatmul.mubr.bf16.gmra.mxu0 %v828
      %v1598 = vpop.f32.mrf.mxu0
      %v1599 = vadd.f32 %v1438, %v1598
      %v1600 = vpop.f32.mrf.mxu0
      %v1601 = vpop.f32.mrf.mxu0
      %v1602 = vadd.f32 %v1441, %v1601
      %v1603 = vpop.f32.mrf.mxu0
      %1604 = vmatprep.mubr.bf16.mxu0 0
      %1605 = vmatmul.mubr.bf16.gmra.mxu0 %v833
      %v1606 = vpop.f32.mrf.mxu0
      %v1607 = vadd.f32 %v1446, %v1606
      %v1608 = vpop.f32.mrf.mxu0
      %v1609 = vpop.f32.mrf.mxu0
      %v1610 = vadd.f32 %v1449, %v1609
      %v1611 = vpop.f32.mrf.mxu0
      %1612 = vmatprep.mubr.bf16.mxu0 0
      %1613 = vmatmul.mubr.bf16.gmra.mxu0 %v838
      %v1614 = vpop.f32.mrf.mxu0
      %v1615 = vadd.f32 %v1454, %v1614
      %v1616 = vpop.f32.mrf.mxu0
      %v1617 = vpop.f32.mrf.mxu0
      %v1618 = vadd.f32 %v1457, %v1617
      %v1619 = vpop.f32.mrf.mxu0
      %1620 = vmatprep.mubr.bf16.mxu0 0
      %1621 = vmatmul.mubr.bf16.gmra.mxu0 %v843
      %v1622 = vpop.f32.mrf.mxu0
      %v1623 = vadd.f32 %v1462, %v1622
      %v1624 = vpop.f32.mrf.mxu0
      %v1625 = vpop.f32.mrf.mxu0
      %v1626 = vadd.f32 %v1465, %v1625
      %v1627 = vpop.f32.mrf.mxu0
      %1628 = vmatprep.mubr.bf16.mxu0 0
      %1629 = vmatmul.mubr.bf16.gmra.mxu0 %v848
      %v1630 = vpop.f32.mrf.mxu0
      %v1631 = vadd.f32 %v1470, %v1630
      %v1632 = vpop.f32.mrf.mxu0
      %v1633 = vpop.f32.mrf.mxu0
      %v1634 = vadd.f32 %v1473, %v1633
      %v1635 = vpop.f32.mrf.mxu0
      %1636 = vmatprep.mubr.bf16.mxu0 0
      %1637 = vmatmul.mubr.bf16.gmra.mxu0 %v853
      %v1638 = vpop.f32.mrf.mxu0
      %v1639 = vadd.f32 %v1478, %v1638
      %v1640 = vpop.f32.mrf.mxu0
      %v1641 = vpop.f32.mrf.mxu0
      %v1642 = vadd.f32 %v1481, %v1641
      %v1643 = vpop.f32.mrf.mxu0
      %1644 = vmatprep.mubr.bf16.mxu0 0
      %1645 = vmatmul.mubr.bf16.gmra.mxu0 %v858
      %v1646 = vpop.f32.mrf.mxu0
      %v1647 = vadd.f32 %v1486, %v1646
      %v1648 = vpop.f32.mrf.mxu0
      %v1649 = vpop.f32.mrf.mxu0
      %v1650 = vadd.f32 %v1489, %v1649
      %v1651 = vpop.f32.mrf.mxu0
      %1652 = vmatprep.mubr.bf16.mxu0 0
      %1653 = vmatmul.mubr.bf16.gmra.mxu0 %v863
      %v1654 = vpop.f32.mrf.mxu0
      %v1655 = vadd.f32 %v1494, %v1654
      %v1656 = vpop.f32.mrf.mxu0
      %v1657 = vpop.f32.mrf.mxu0
      %v1658 = vadd.f32 %v1497, %v1657
      %v1659 = vpop.f32.mrf.mxu0
      %1660 = vmatprep.mubr.bf16.mxu0 0
      %1661 = vmatmul.mubr.bf16.gmra.mxu0 %v868
      %v1662 = vpop.f32.mrf.mxu0
      %v1663 = vadd.f32 %v1502, %v1662
      %v1664 = vpop.f32.mrf.mxu0
      %v1665 = vpop.f32.mrf.mxu0
      %v1666 = vadd.f32 %v1505, %v1665
      %v1667 = vpop.f32.mrf.mxu0
      %1668 = vmatprep.mubr.bf16.mxu0 0
      %1669 = vmatmul.mubr.bf16.gmra.mxu0 %v873
      %v1670 = vpop.f32.mrf.mxu0
      %v1671 = vadd.f32 %v1510, %v1670
      %v1672 = vpop.f32.mrf.mxu0
      %v1673 = vpop.f32.mrf.mxu0
      %v1674 = vadd.f32 %v1513, %v1673
      %v1675 = vpop.f32.mrf.mxu0
      %1676 = vdwg.mxu0
      %v1677 = vadd.f32 %v1551, %v1554
      %v1678 = vadd.f32 %v1677, %v1559
      %v1679 = vadd.f32 %v1678, %v1562
      %v1680 = vadd.f32 %v1679, %v1567
      %v1681 = vadd.f32 %v1680, %v1570
      %v1682 = vadd.f32 %v1681, %v1575
      %v1683 = vadd.f32 %v1682, %v1578
      %v1684 = vadd.f32 %v1683, %v1583
      %v1685 = vadd.f32 %v1684, %v1586
      %v1686 = vadd.f32 %v1685, %v1591
      %v1687 = vadd.f32 %v1686, %v1594
      %v1688 = vadd.f32 %v1687, %v1599
      %v1689 = vadd.f32 %v1688, %v1602
      %v1690 = vadd.f32 %v1689, %v1607
      %v1691 = vadd.f32 %v1690, %v1610
      %v1692 = vadd.f32 %v1691, %v1615
      %v1693 = vadd.f32 %v1692, %v1618
      %v1694 = vadd.f32 %v1693, %v1623
      %v1695 = vadd.f32 %v1694, %v1626
      %v1696 = vadd.f32 %v1695, %v1631
      %v1697 = vadd.f32 %v1696, %v1634
      %v1698 = vadd.f32 %v1697, %v1639
      %v1699 = vadd.f32 %v1698, %v1642
      %v1700 = vadd.f32 %v1699, %v1647
      %v1701 = vadd.f32 %v1700, %v1650
      %v1702 = vadd.f32 %v1701, %v1655
      %v1703 = vadd.f32 %v1702, %v1658
      %v1704 = vadd.f32 %v1703, %v1663
      %v1705 = vadd.f32 %v1704, %v1666
      %v1706 = vadd.f32 %v1705, %v1671
      %v1707 = vadd.f32 %v1706, %v1674
      %v1708 = vrot.slane %v1707, 4
      %v1709 = vadd.f32 %v1707, %v1708
      %v1710 = vrot.slane %v1709, 2
      %v1711 = vadd.f32 %v1709, %v1710
      %v1712 = vrot.slane %v1711, 1
      %v1713 = vadd.f32 %v1711, %v1712
      %1714 = vst [vmem:[%s347] sm:$0x1] %v1713
      %v1715 = vmul.f32 %v1551, %v1551
      %v1716 = vmul.f32 %v1554, %v1554
      %v1717 = vmul.f32 %v1559, %v1559
      %v1718 = vmul.f32 %v1562, %v1562
      %v1719 = vmul.f32 %v1567, %v1567
      %v1720 = vmul.f32 %v1570, %v1570
      %v1721 = vmul.f32 %v1575, %v1575
      %v1722 = vmul.f32 %v1578, %v1578
      %v1723 = vmul.f32 %v1583, %v1583
      %v1724 = vmul.f32 %v1586, %v1586
      %v1725 = vmul.f32 %v1591, %v1591
      %v1726 = vmul.f32 %v1594, %v1594
      %v1727 = vmul.f32 %v1599, %v1599
      %v1728 = vmul.f32 %v1602, %v1602
      %v1729 = vmul.f32 %v1607, %v1607
      %v1730 = vmul.f32 %v1610, %v1610
      %v1731 = vmul.f32 %v1615, %v1615
      %v1732 = vmul.f32 %v1618, %v1618
      %v1733 = vmul.f32 %v1623, %v1623
      %v1734 = vmul.f32 %v1626, %v1626
      %v1735 = vmul.f32 %v1631, %v1631
      %v1736 = vmul.f32 %v1634, %v1634
      %v1737 = vmul.f32 %v1639, %v1639
      %v1738 = vmul.f32 %v1642, %v1642
      %v1739 = vmul.f32 %v1647, %v1647
      %v1740 = vmul.f32 %v1650, %v1650
      %v1741 = vmul.f32 %v1655, %v1655
      %v1742 = vmul.f32 %v1658, %v1658
      %v1743 = vmul.f32 %v1663, %v1663
      %v1744 = vmul.f32 %v1666, %v1666
      %v1745 = vmul.f32 %v1671, %v1671
      %v1746 = vmul.f32 %v1674, %v1674
      %v1747 = vadd.f32 %v1715, %v1716
      %v1748 = vadd.f32 %v1747, %v1717
      %v1749 = vadd.f32 %v1748, %v1718
      %v1750 = vadd.f32 %v1749, %v1719
      %v1751 = vadd.f32 %v1750, %v1720
      %v1752 = vadd.f32 %v1751, %v1721
      %v1753 = vadd.f32 %v1752, %v1722
      %v1754 = vadd.f32 %v1753, %v1723
      %v1755 = vadd.f32 %v1754, %v1724
      %v1756 = vadd.f32 %v1755, %v1725
      %v1757 = vadd.f32 %v1756, %v1726
      %v1758 = vadd.f32 %v1757, %v1727
      %v1759 = vadd.f32 %v1758, %v1728
      %v1760 = vadd.f32 %v1759, %v1729
      %v1761 = vadd.f32 %v1760, %v1730
      %v1762 = vadd.f32 %v1761, %v1731
      %v1763 = vadd.f32 %v1762, %v1732
      %v1764 = vadd.f32 %v1763, %v1733
      %v1765 = vadd.f32 %v1764, %v1734
      %v1766 = vadd.f32 %v1765, %v1735
      %v1767 = vadd.f32 %v1766, %v1736
      %v1768 = vadd.f32 %v1767, %v1737
      %v1769 = vadd.f32 %v1768, %v1738
      %v1770 = vadd.f32 %v1769, %v1739
      %v1771 = vadd.f32 %v1770, %v1740
      %v1772 = vadd.f32 %v1771, %v1741
      %v1773 = vadd.f32 %v1772, %v1742
      %v1774 = vadd.f32 %v1773, %v1743
      %v1775 = vadd.f32 %v1774, %v1744
      %v1776 = vadd.f32 %v1775, %v1745
      %v1777 = vadd.f32 %v1776, %v1746
      %v1778 = vrot.slane %v1777, 4
      %v1779 = vadd.f32 %v1777, %v1778
      %v1780 = vrot.slane %v1779, 2
      %v1781 = vadd.f32 %v1779, %v1780
      %v1782 = vrot.slane %v1781, 1
      %v1783 = vadd.f32 %v1781, %v1782
      %1784 = vst [vmem:[%s353] sm:$0x1] %v1783
      %v1785 = vpack.c.bf16 %v1554, %v1551
      %v1786 = vpack.c.bf16 %v1562, %v1559
      %v1787 = vpack.c.bf16 %v1570, %v1567
      %v1788 = vpack.c.bf16 %v1578, %v1575
      %v1789 = vpack.c.bf16 %v1586, %v1583
      %v1790 = vpack.c.bf16 %v1594, %v1591
      %v1791 = vpack.c.bf16 %v1602, %v1599
      %v1792 = vpack.c.bf16 %v1610, %v1607
      %v1793 = vpack.c.bf16 %v1618, %v1615
      %v1794 = vpack.c.bf16 %v1626, %v1623
      %v1795 = vpack.c.bf16 %v1634, %v1631
      %v1796 = vpack.c.bf16 %v1642, %v1639
      %v1797 = vpack.c.bf16 %v1650, %v1647
      %v1798 = vpack.c.bf16 %v1658, %v1655
      %v1799 = vpack.c.bf16 %v1666, %v1663
      %v1800 = vpack.c.bf16 %v1674, %v1671
      %v1817 = vunpack.c.l.b16 %v1785
      %v1818 = vunpack.c.h.b16 %v1785
      %v1819 = vunpack.c.l.b16 %v1786
      %v1820 = vunpack.c.h.b16 %v1786
      %v1821 = vunpack.c.l.b16 %v1787
      %v1822 = vunpack.c.h.b16 %v1787
      %v1823 = vunpack.c.l.b16 %v1788
      %v1824 = vunpack.c.h.b16 %v1788
      %v1825 = vunpack.c.l.b16 %v1789
      %v1826 = vunpack.c.h.b16 %v1789
      %v1827 = vunpack.c.l.b16 %v1790
      %v1828 = vunpack.c.h.b16 %v1790
      %v1829 = vunpack.c.l.b16 %v1791
      %v1830 = vunpack.c.h.b16 %v1791
      %v1831 = vunpack.c.l.b16 %v1792
      %v1832 = vunpack.c.h.b16 %v1792
      %v1833 = vunpack.c.l.b16 %v1793
      %v1834 = vunpack.c.h.b16 %v1793
      %v1835 = vunpack.c.l.b16 %v1794
      %v1836 = vunpack.c.h.b16 %v1794
      %v1837 = vunpack.c.l.b16 %v1795
      %v1838 = vunpack.c.h.b16 %v1795
      %v1839 = vunpack.c.l.b16 %v1796
      %v1840 = vunpack.c.h.b16 %v1796
      %v1841 = vunpack.c.l.b16 %v1797
      %v1842 = vunpack.c.h.b16 %v1797
      %v1843 = vunpack.c.l.b16 %v1798
      %v1844 = vunpack.c.h.b16 %v1798
      %v1845 = vunpack.c.l.b16 %v1799
      %v1846 = vunpack.c.h.b16 %v1799
      %v1847 = vunpack.c.l.b16 %v1800
      %v1848 = vunpack.c.h.b16 %v1800
      %v1849 = vpack.c.b16 %v1817, %v1817
      %v1850 = vpack.c.b16 %v1818, %v1818
      %v1851 = vpack.c.b16 %v1819, %v1819
      %v1852 = vpack.c.b16 %v1820, %v1820
      %v1853 = vpack.c.b16 %v1821, %v1821
      %v1854 = vpack.c.b16 %v1822, %v1822
      %v1855 = vpack.c.b16 %v1823, %v1823
      %v1856 = vpack.c.b16 %v1824, %v1824
      %v1857 = vpack.c.b16 %v1825, %v1825
      %v1858 = vpack.c.b16 %v1826, %v1826
      %v1859 = vpack.c.b16 %v1827, %v1827
      %v1860 = vpack.c.b16 %v1828, %v1828
      %v1861 = vpack.c.b16 %v1829, %v1829
      %v1862 = vpack.c.b16 %v1830, %v1830
      %v1863 = vpack.c.b16 %v1831, %v1831
      %v1864 = vpack.c.b16 %v1832, %v1832
      %v1865 = vpack.c.b16 %v1833, %v1833
      %v1866 = vpack.c.b16 %v1834, %v1834
      %v1867 = vpack.c.b16 %v1835, %v1835
      %v1868 = vpack.c.b16 %v1836, %v1836
      %v1869 = vpack.c.b16 %v1837, %v1837
      %v1870 = vpack.c.b16 %v1838, %v1838
      %v1871 = vpack.c.b16 %v1839, %v1839
      %v1872 = vpack.c.b16 %v1840, %v1840
      %v1873 = vpack.c.b16 %v1841, %v1841
      %v1874 = vpack.c.b16 %v1842, %v1842
      %v1875 = vpack.c.b16 %v1843, %v1843
      %v1876 = vpack.c.b16 %v1844, %v1844
      %v1877 = vpack.c.b16 %v1845, %v1845
      %v1878 = vpack.c.b16 %v1846, %v1846
      %v1879 = vpack.c.b16 %v1847, %v1847
      %v1880 = vpack.c.b16 %v1848, %v1848
      %1913 = vst [vmem:[%s340] sm:$0xf] %v1849
      %1914 = vst [vmem:[%s340 + $0x4] sm:$0xf] %v1850
      %1915 = vst [vmem:[%s340 + $0x8] sm:$0xf] %v1851
      %1916 = vst [vmem:[%s340 + $0xc] sm:$0xf] %v1852
      %1917 = vst [vmem:[%s340 + $0x10] sm:$0xf] %v1853
      %1918 = vst [vmem:[%s340 + $0x14] sm:$0xf] %v1854
      %1919 = vst [vmem:[%s340 + $0x18] sm:$0xf] %v1855
      %1920 = vst [vmem:[%s340 + $0x1c] sm:$0xf] %v1856
      %1921 = vst [vmem:[%s340 + $0x20] sm:$0xf] %v1857
      %1922 = vst [vmem:[%s340 + $0x24] sm:$0xf] %v1858
      %1923 = vst [vmem:[%s340 + $0x28] sm:$0xf] %v1859
      %1924 = vst [vmem:[%s340 + $0x2c] sm:$0xf] %v1860
      %1925 = vst [vmem:[%s340 + $0x30] sm:$0xf] %v1861
      %1926 = vst [vmem:[%s340 + $0x34] sm:$0xf] %v1862
      %1927 = vst [vmem:[%s340 + $0x38] sm:$0xf] %v1863
      %1928 = vst [vmem:[%s340 + $0x3c] sm:$0xf] %v1864
      %1929 = vst [vmem:[%s340 + $0x40] sm:$0xf] %v1865
      %1930 = vst [vmem:[%s340 + $0x44] sm:$0xf] %v1866
      %1931 = vst [vmem:[%s340 + $0x48] sm:$0xf] %v1867
      %1932 = vst [vmem:[%s340 + $0x4c] sm:$0xf] %v1868
      %1933 = vst [vmem:[%s340 + $0x50] sm:$0xf] %v1869
      %1934 = vst [vmem:[%s340 + $0x54] sm:$0xf] %v1870
      %1935 = vst [vmem:[%s340 + $0x58] sm:$0xf] %v1871
      %1936 = vst [vmem:[%s340 + $0x5c] sm:$0xf] %v1872
      %1937 = vst [vmem:[%s340 + $0x60] sm:$0xf] %v1873
      %1938 = vst [vmem:[%s340 + $0x64] sm:$0xf] %v1874
      %1939 = vst [vmem:[%s340 + $0x68] sm:$0xf] %v1875
      %1940 = vst [vmem:[%s340 + $0x6c] sm:$0xf] %v1876
      %1941 = vst [vmem:[%s340 + $0x70] sm:$0xf] %v1877
      %1942 = vst [vmem:[%s340 + $0x74] sm:$0xf] %v1878
      %1943 = vst [vmem:[%s340 + $0x78] sm:$0xf] %v1879
      %1944 = vst [vmem:[%s340 + $0x7c] sm:$0xf] %v1880
      %s1945 = smul.u32 32, %s22
      %p1946 = scmp.lt.s32.totalorder %s1945, 63
      %s1947 = scalar_select %p1946, %s1945, 63
      %p1948 = scmp.lt.s32.totalorder %s23, 0
      %s1949 = scalar_select %p1948, %s23, 0
      %s1950 = sadd.s32 %s1949, %s1947
      %s1951 = smul.addr %s1950, 4
      %s1952 = scalar_lea.vmem %s3, %s1951
      %p1953 = scmp.lt.s32.totalorder %s22, 1
      %s1954 = scalar_select %p1953, %s22, 1
      %p1955 = scmp.lt.s32.totalorder %s23, 0
      %s1956 = scalar_select %p1955, %s23, 0
      %s1957 = sadd.s32 %s1956, %s1954
      %s1958 = scalar_lea.vmem %s4, %s1957
      %p1959 = scmp.lt.s32.totalorder %s22, 1
      %s1960 = scalar_select %p1959, %s22, 1
      %p1961 = scmp.lt.s32.totalorder %s23, 0
      %s1962 = scalar_select %p1961, %s23, 0
      %s1963 = sadd.s32 %s1962, %s1960
      %s1964 = scalar_lea.vmem %s5, %s1963
      // Predicated region
      $region33: #{con2d_forward.6} parent=31 // pred_check
        %p1965 = pneg %p138
      $region34: #{con2d_forward.6} parent=31 // pred_check_branch
        %1967 = sbr.rel (%p1965) target = $region36
      $region35: #{con2d_forward.6} parent=31 // pred_region
        %s1968 = smul.u32 32, %s22
      $region36: #{con2d_forward.6} parent=31 // pred_fallthru
        _
      // Predicated region
      $region37: #{con2d_forward.6} parent=31 // pred_check
        %p1969 = pneg %p166
      $region38: #{con2d_forward.6} parent=31 // pred_check_branch
        %1971 = sbr.rel (%p1969) target = $region40
      $region39: #{con2d_forward.6} parent=31 // pred_region
        _
      $region40: #{con2d_forward.6} parent=31 // pred_fallthru
        _
      // Predicated region
      $region41: #{con2d_forward.6} parent=31 // pred_check
        %p1972 = pneg %p194
      $region42: #{con2d_forward.6} parent=31 // pred_check_branch
        %1974 = sbr.rel (%p1972) target = $region44
      $region43: #{con2d_forward.6} parent=31 // pred_region
        _
      $region44: #{con2d_forward.6} parent=31 // pred_fallthru
        _
    $region32: #{con2d_forward.6} parent=5 // pred_fallthru
      _
    %p1975 = scmp.le.s32.totalorder 2, %s12
    // Predicated region
    $region45: #{con2d_forward.6} parent=5 // pred_check
      %p1976 = pneg %p1975
    $region46: #{con2d_forward.6} parent=5 // pred_check_branch
      %1978 = sbr.rel (%p1976) target = $region48
    $region47: #{con2d_forward.6} parent=5 // pred_region
      %s1979 = ssub.s32 %s12, 2
      // Predicated region
      $region49: #{con2d_forward.6} parent=47 // pred_check
        %p1980 = pneg %p144
      $region50: #{con2d_forward.6} parent=47 // pred_check_branch
        %1982 = sbr.rel (%p1980) target = $region52
      $region51: #{con2d_forward.6} parent=47 // pred_region
        %s1983 = smul.u32 32, %s25
        %p1984 = scmp.lt.s32.totalorder %s1983, 63
        %s1985 = scalar_select %p1984, %s1983, 63
        %p1986 = scmp.lt.s32.totalorder %s26, 0
        %s1987 = scalar_select %p1986, %s26, 0
        %s1988 = sadd.s32 %s1987, %s1985
        %s1989 = smul.addr %s1988, 4
        %s1990 = scalar_lea.vmem %s3, %s1989
      $region52: #{con2d_forward.6} parent=47 // pred_fallthru
        _
      // Predicated region
      $region53: #{con2d_forward.6} parent=47 // pred_check
        %p1991 = pneg %p172
      $region54: #{con2d_forward.6} parent=47 // pred_check_branch
        %1993 = sbr.rel (%p1991) target = $region56
      $region55: #{con2d_forward.6} parent=47 // pred_region
        %p1994 = scmp.lt.s32.totalorder %s25, 1
        %s1995 = scalar_select %p1994, %s25, 1
        %p1996 = scmp.lt.s32.totalorder %s26, 0
        %s1997 = scalar_select %p1996, %s26, 0
        %s1998 = sadd.s32 %s1997, %s1995
        %s1999 = scalar_lea.vmem %s4, %s1998
      $region56: #{con2d_forward.6} parent=47 // pred_fallthru
        _
      // Predicated region
      $region57: #{con2d_forward.6} parent=47 // pred_check
        %p2000 = pneg %p200
      $region58: #{con2d_forward.6} parent=47 // pred_check_branch
        %2002 = sbr.rel (%p2000) target = $region60
      $region59: #{con2d_forward.6} parent=47 // pred_region
        %p2003 = scmp.lt.s32.totalorder %s25, 1
        %s2004 = scalar_select %p2003, %s25, 1
        %p2005 = scmp.lt.s32.totalorder %s26, 0
        %s2006 = scalar_select %p2005, %s26, 0
        %s2007 = sadd.s32 %s2006, %s2004
        %s2008 = scalar_lea.vmem %s5, %s2007
      $region60: #{con2d_forward.6} parent=47 // pred_fallthru
        _
    $region48: #{con2d_forward.6} parent=5 // pred_fallthru
      _
  $region6: #{con2d_forward.6} parent=0 // loop_footer
    %s16 = sadd.s32 1, %s12
  $region7: #{con2d_forward.6} parent=0 // loop_footer_branch
    %11 = sbr.rel target = $region3
  $region8: #{con2d_forward.6} parent=0 // loop_exit
    _

</llo_original>
